<compile_context>
chip_gen: v6e
topology: v6e:2x2x1
jax: 0.10.0
libtpu: 0.0.40
codegen_flags: <defaults>
</compile_context>

<pallas_src>
import functools
import math

import jax
import jax.numpy as jnp
import numpy as np
from jax import lax
from jax.experimental import pallas as pl
from jax.experimental.pallas import tpu as pltpu


def _hla_kernel(qeT_ref, wq_ref, wv_ref, rrow_ref, trow_ref, memvec_ref, out_ref, *,
                tree_depth, level_offsets, gating):
    """Fused W_q / W_v projection + MemoryTree.oracle (inference path) for one batch element.

    qeT_ref   : (D, Lk)    query-token embeddings, queries on lanes
    wq_ref    : (D, D)     W_q (nn.Linear weight, applied as W_q @ x)
    wv_ref    : (D, D)     W_v
    rrow_ref  : (D*D, D)   0/1 matrix: (rrow @ qT)[d*D+e, l] = q[l, d]
    trow_ref  : (D*D, D)   0/1 matrix: (trow @ svT)[d*D+e, l] = sv[l, e]
    memvec_ref: (N, D*D)   all tree nodes, each matrix flattened row-major (levels: leaves first)
    out_ref   : (1, Lk)    chosen leaf index per query (lane-dense)
    """
    D, Lk = qeT_ref.shape
    N = memvec_ref.shape[0]

    qeT = qeT_ref[...]                                                      # (D, Lk)
    qT = jnp.dot(wq_ref[...], qeT, preferred_element_type=jnp.float32)      # W_q projection
    if gating == 'rvs':
        svT = jnp.dot(wv_ref[...], qeT, preferred_element_type=jnp.float32)  # W_v projection
    else:                                                                    # 'sbs': score vs q
        svT = qT

    # vec(q ⊗ sv) built on the MXU: oT[d*D+e, l] = q[l, d] * sv[l, e]
    qx = jnp.dot(rrow_ref[...], qT, preferred_element_type=jnp.float32)      # (D*D, Lk)
    sx = jnp.dot(trow_ref[...], svT, preferred_element_type=jnp.float32)     # (D*D, Lk)
    oT = qx * sx                                                             # (D*D, Lk)

    # One matmul scores every node of every level:  logitsT[n, l] = q_l^T M_n sv_l
    logitsT = jnp.dot(memvec_ref[...], oT, preferred_element_type=jnp.float32)   # (N, Lk)
    if gating == 'rvs':
        logitsT = logitsT * (1.0 / D)

    row_ids = lax.broadcasted_iota(jnp.int32, (N, Lk), 0)      # hoisted out of the level loop
    choices = jnp.zeros((1, Lk), dtype=jnp.int32)
    for level in range(tree_depth - 1, -1, -1):                 # near-root level -> leaves
        left_id = level_offsets[level] + 2 * choices            # (1, Lk), broadcasts over sublanes
        # single masked sublane reduction per level: sum picks exactly (right - left)
        signed = jnp.where(row_ids == left_id + 1, logitsT,
                           jnp.where(row_ids == left_id, -logitsT, 0.0))
        diff = jnp.sum(signed, axis=0, keepdims=True)           # (1, Lk) == right - left
        choices = 2 * choices + (diff > 0).astype(jnp.int32)    # strict '<' tie-break

    out_ref[...] = choices                                      # lane-dense store


def build_memory_tree(context_tokens, emb_table, w_k, w_v):
    """HierarchicalLinearAttention.build_tree + MemoryTree construction (setup glue)."""
    ce = jnp.take(emb_table, context_tokens, axis=0)       # token_emb(context) -> (B, L, D)
    key = ce @ w_k.T                                       # nn.Linear, no bias
    val = ce @ w_v.T
    leafs = jnp.einsum('bld,ble->blde', key, val)          # (B, L, D, D) outer products
    L = leafs.shape[1]
    tree_depth = int(math.log2(L))
    levels = [leafs]
    cur = leafs
    for _ in range(1, tree_depth):
        Bn, n, D, _ = cur.shape
        # TODO(synk): gating_to_builder / local_fusion (fusion_fn) are not defined in the
        # source module; parents are built with the canonical sum-of-children fusion.
        cur = cur.reshape(Bn, n // 2, 2, D, D).sum(axis=2)
        levels.append(cur)
    offsets, off = [], 0
    for lv in levels:
        offsets.append(off)
        off += lv.shape[1]
    mem_cat = jnp.concatenate(levels, axis=1)              # (B, 2L-2, D, D)
    return tree_depth, tuple(offsets), L, mem_cat


def hla_forward(query_tokens, emb_table, w_q, w_v, mem_cat, tree_depth,
                level_offsets, num_leaves, gating='sbs'):
    """HierarchicalLinearAttention.forward(query, memory_tree) with expected=None."""
    qe = jnp.take(emb_table, query_tokens, axis=0)         # token_emb(query) (glue gather)
    B, Lk, D = qe.shape
    qeT = jnp.transpose(qe, (0, 2, 1))                     # (B, D, Lk): queries on lanes
    N = mem_cat.shape[1]
    memvec = mem_cat.reshape(B, N, D * D)                  # node matrices flattened row-major

    # Constant 0/1 expansion matrices so vec(q ⊗ sv) is two matmuls (no in-kernel reshape).
    cols = jnp.arange(D * D)
    rrow = (cols[:, None] // D == jnp.arange(D)[None, :]).astype(jnp.float32)   # (D*D, D)
    trow = (cols[:, None] % D == jnp.arange(D)[None, :]).astype(jnp.float32)    # (D*D, D)

    kernel = functools.partial(_hla_kernel, tree_depth=tree_depth,
                               level_offsets=level_offsets, gating=gating)

    grid_spec = pltpu.PrefetchScalarGridSpec(
        num_scalar_prefetch=0,
        grid=(B,),
        in_specs=[
            pl.BlockSpec((None, D, Lk), lambda b: (b, 0, 0)),      # qeT  (per-batch slice)
            pl.BlockSpec((D, D), lambda b: (0, 0)),                # W_q
            pl.BlockSpec((D, D), lambda b: (0, 0)),                # W_v
            pl.BlockSpec((D * D, D), lambda b: (0, 0)),            # rrow
            pl.BlockSpec((D * D, D), lambda b: (0, 0)),            # trow
            pl.BlockSpec((None, N, D * D), lambda b: (b, 0, 0)),   # memvec (per-batch slice)
        ],
        out_specs=pl.BlockSpec((None, 1, Lk), lambda b: (b, 0, 0)),
    )

    # VMEM budget: double-buffered per-step inputs + intermediates, with headroom.
    step_bytes = 4 * (D * Lk + 2 * D * D + 2 * D * D * D + N * D * D + Lk)
    vmem_limit = int(min(max(2 * step_bytes + (4 << 20), 4 << 20), 32 << 20))

    flops_per_batch = 2 * D * D * Lk * (2 if gating == 'rvs' else 1) \
        + 4 * D * D * D * Lk + 2 * N * D * D * Lk
    bytes_accessed = 4 * (B * D * Lk + 2 * D * D + 2 * D * D * D + B * N * D * D + B * Lk)

    out = pl.pallas_call(
        kernel,
        out_shape=jax.ShapeDtypeStruct((B, 1, Lk), jnp.int32),
        grid_spec=grid_spec,
        compiler_params=pltpu.CompilerParams(
            dimension_semantics=("parallel",),
            vmem_limit_bytes=vmem_limit),
        cost_estimate=pl.CostEstimate(flops=B * flops_per_batch,
                                      transcendentals=0,
                                      bytes_accessed=bytes_accessed),
    )(qeT, w_q, w_v, rrow, trow, memvec)
    return out[:, 0, :]                                    # (B, Lk) leaf indices


def reference_forward(query_tokens, emb_table, w_q, w_v, mem_cat, tree_depth,
                      level_offsets, num_leaves, gating='sbs'):
    """Pure numpy transcription of MemoryTree.oracle (expected=None) for validation."""
    qe = np.take(np.asarray(emb_table), np.asarray(query_tokens), axis=0)
    q = qe @ np.asarray(w_q).T
    v = qe @ np.asarray(w_v).T
    mem = np.asarray(mem_cat)
    B, Lk, D = q.shape
    out = np.zeros((B, Lk), dtype=np.int32)
    for b in range(B):
        for qi in range(Lk):
            choice = 0
            for level in range(tree_depth - 1, -1, -1):
                off = level_offsets[level]
                sv = v[b, qi] if gating == 'rvs' else q[b, qi]
                scale = float(D) if gating == 'rvs' else 1.0
                lhs = q[b, qi] @ mem[b, off + 2 * choice] @ sv / scale
                rhs = q[b, qi] @ mem[b, off + 2 * choice + 1] @ sv / scale
                choice = 2 * choice + int(lhs < rhs)
            out[b, qi] = choice
    return out


if __name__ == "__main__":
    D = 32       # d_model
    V = 16       # vocab size of the teacher token embedding
    B = 2        # batch
    L_CTX = 8    # context length = number of tree leaves (power of two)
    L_K = 8      # number of query tokens

    root = jax.random.PRNGKey(0)
    k_emb, k_q, k_k, k_v, k_ctx, k_qry = jax.random.split(root, 6)
    emb_table = jax.random.normal(k_emb, (V, D), dtype=jnp.float32)
    w_q = jax.random.normal(k_q, (D, D), dtype=jnp.float32) / jnp.sqrt(D)
    w_k = jax.random.normal(k_k, (D, D), dtype=jnp.float32) / jnp.sqrt(D)
    w_v = jax.random.normal(k_v, (D, D), dtype=jnp.float32) / jnp.sqrt(D)

    context = jax.random.randint(k_ctx, (B, L_CTX), 0, V, dtype=jnp.int32)
    query = jax.random.randint(k_qry, (B, L_K), 0, V, dtype=jnp.int32)

    tree_depth, level_offsets, num_leaves, mem_cat = build_memory_tree(
        context, emb_table, w_k, w_v)

    out = hla_forward(query, emb_table, w_q, w_v, mem_cat, tree_depth,
                      level_offsets, num_leaves, gating='sbs')
    out = jax.block_until_ready(out)

    ref = reference_forward(query, emb_table, w_q, w_v, mem_cat, tree_depth,
                            level_offsets, num_leaves, gating='sbs')
    assert out.shape == (B, L_K)
    np.testing.assert_array_equal(np.asarray(out), ref)
    print("KERNEL_OK")
</pallas_src>

<mosaic_0001>
module attributes {stable_mosaic.version = 11 : i64} {
  func.func @_hla_kernel(%arg0: i32, %arg1: memref<1x32x8xf32, #tpu.memory_space<vmem>>, %arg2: memref<32x32xf32, #tpu.memory_space<vmem>>, %arg3: memref<32x32xf32, #tpu.memory_space<vmem>>, %arg4: memref<1024x32xf32, #tpu.memory_space<vmem>>, %arg5: memref<1024x32xf32, #tpu.memory_space<vmem>>, %arg6: memref<1x14x1024xf32, #tpu.memory_space<vmem>>, %arg7: memref<1x1x8xi32, #tpu.memory_space<vmem>>) attributes {dimension_semantics = [#tpu.dimension_semantics<parallel>], iteration_bounds = array<i64: 2>, scalar_prefetch = 0 : i64, scratch_operands = 0 : i64, tpu.core_type = #tpu.core_type<tc>, window_params = [{transform_indices = @transform_0, window_bounds = array<i64: 1, 32, 8>}, {pipeline_mode = #tpu.pipeline_mode<synchronous>, transform_indices = @transform_1, window_bounds = array<i64: 32, 32>}, {pipeline_mode = #tpu.pipeline_mode<synchronous>, transform_indices = @transform_2, window_bounds = array<i64: 32, 32>}, {pipeline_mode = #tpu.pipeline_mode<synchronous>, transform_indices = @transform_3, window_bounds = array<i64: 1024, 32>}, {pipeline_mode = #tpu.pipeline_mode<synchronous>, transform_indices = @transform_4, window_bounds = array<i64: 1024, 32>}, {transform_indices = @transform_5, window_bounds = array<i64: 1, 14, 1024>}, {transform_indices = @transform_6, window_bounds = array<i64: 1, 1, 8>}]} {
    %c0 = arith.constant 0 : index
    %c0_0 = arith.constant 0 : index
    %c0_1 = arith.constant 0 : index
    %0 = vector.load %arg1[%c0, %c0_0, %c0_1] : memref<1x32x8xf32, #tpu.memory_space<vmem>>, vector<1x32x8xf32>
    %1 = vector.shape_cast %0 : vector<1x32x8xf32> to vector<32x8xf32>
    %c0_2 = arith.constant 0 : index
    %c0_3 = arith.constant 0 : index
    %2 = vector.load %arg2[%c0_2, %c0_3] : memref<32x32xf32, #tpu.memory_space<vmem>>, vector<32x32xf32>
    %cst = arith.constant dense<0.000000e+00> : vector<32x8xf32>
    %3 = tpu.matmul %2, %1, %cst {dimension_numbers = #tpu.dot_dimension_numbers<[1], [0], [0], [1], [0, 0, 1, 1], [], []>} : vector<32x32xf32>, vector<32x8xf32>, vector<32x8xf32> -> vector<32x8xf32>
    %c0_4 = arith.constant 0 : index
    %c0_5 = arith.constant 0 : index
    %4 = vector.load %arg4[%c0_4, %c0_5] : memref<1024x32xf32, #tpu.memory_space<vmem>>, vector<1024x32xf32>
    %cst_6 = arith.constant dense<0.000000e+00> : vector<1024x8xf32>
    %5 = tpu.matmul %4, %3, %cst_6 {dimension_numbers = #tpu.dot_dimension_numbers<[1], [0], [0], [1], [0, 0, 1, 1], [], []>} : vector<1024x32xf32>, vector<32x8xf32>, vector<1024x8xf32> -> vector<1024x8xf32>
    %c0_7 = arith.constant 0 : index
    %c0_8 = arith.constant 0 : index
    %6 = vector.load %arg5[%c0_7, %c0_8] : memref<1024x32xf32, #tpu.memory_space<vmem>>, vector<1024x32xf32>
    %cst_9 = arith.constant dense<0.000000e+00> : vector<1024x8xf32>
    %7 = tpu.matmul %6, %3, %cst_9 {dimension_numbers = #tpu.dot_dimension_numbers<[1], [0], [0], [1], [0, 0, 1, 1], [], []>} : vector<1024x32xf32>, vector<32x8xf32>, vector<1024x8xf32> -> vector<1024x8xf32>
    %8 = arith.mulf %5, %7 : vector<1024x8xf32>
    %c0_10 = arith.constant 0 : index
    %c0_11 = arith.constant 0 : index
    %c0_12 = arith.constant 0 : index
    %9 = vector.load %arg6[%c0_10, %c0_11, %c0_12] : memref<1x14x1024xf32, #tpu.memory_space<vmem>>, vector<1x14x1024xf32>
    %10 = vector.shape_cast %9 : vector<1x14x1024xf32> to vector<14x1024xf32>
    %cst_13 = arith.constant dense<0.000000e+00> : vector<14x8xf32>
    %11 = tpu.matmul %10, %8, %cst_13 {dimension_numbers = #tpu.dot_dimension_numbers<[1], [0], [0], [1], [0, 0, 1, 1], [], []>} : vector<14x1024xf32>, vector<1024x8xf32>, vector<14x8xf32> -> vector<14x8xf32>
    %12 = tpu.iota {dimensions = array<i32: 0>} : vector<14x8xi32>
    %c0_i32 = arith.constant 0 : i32
    %13 = vector.broadcast %c0_i32 : i32 to vector<1x8xi32>
    %c2_i32 = arith.constant 2 : i32
    %14 = vector.broadcast %c2_i32 : i32 to vector<1x8xi32>
    %15 = arith.muli %14, %13 : vector<1x8xi32>
    %c12_i32 = arith.constant 12 : i32
    %16 = vector.broadcast %c12_i32 : i32 to vector<1x8xi32>
    %17 = arith.addi %16, %15 : vector<1x8xi32>
    %c1_i32 = arith.constant 1 : i32
    %18 = vector.broadcast %c1_i32 : i32 to vector<1x8xi32>
    %19 = arith.addi %17, %18 : vector<1x8xi32>
    %20 = vector.broadcast %19 : vector<1x8xi32> to vector<14x8xi32>
    %21 = arith.cmpi eq, %12, %20 : vector<14x8xi32>
    %22 = vector.broadcast %17 : vector<1x8xi32> to vector<14x8xi32>
    %23 = arith.cmpi eq, %12, %22 : vector<14x8xi32>
    %cst_14 = arith.constant 0.000000e+00 : f32
    %24 = vector.broadcast %cst_14 : f32 to vector<14x8xf32>
    %25 = arith.subf %24, %11 : vector<14x8xf32>
    %cst_15 = arith.constant 0.000000e+00 : f32
    %26 = vector.broadcast %cst_15 : f32 to vector<14x8xf32>
    %27 = arith.select %23, %25, %26 : vector<14x8xi1>, vector<14x8xf32>
    %28 = arith.select %21, %11, %27 : vector<14x8xi1>, vector<14x8xf32>
    %cst_16 = arith.constant dense<0.000000e+00> : vector<8xf32>
    %29 = vector.multi_reduction <add>, %28, %cst_16 [0] : vector<14x8xf32> to vector<8xf32>
    %30 = vector.shape_cast %29 : vector<8xf32> to vector<1x8xf32>
    %c2_i32_17 = arith.constant 2 : i32
    %31 = vector.broadcast %c2_i32_17 : i32 to vector<1x8xi32>
    %32 = arith.muli %31, %13 : vector<1x8xi32>
    %cst_18 = arith.constant 0.000000e+00 : f32
    %33 = vector.broadcast %cst_18 : f32 to vector<1x8xf32>
    %34 = arith.cmpf ogt, %30, %33 : vector<1x8xf32>
    %35 = arith.extui %34 : vector<1x8xi1> to vector<1x8xi32>
    %36 = arith.addi %32, %35 : vector<1x8xi32>
    %c2_i32_19 = arith.constant 2 : i32
    %37 = vector.broadcast %c2_i32_19 : i32 to vector<1x8xi32>
    %38 = arith.muli %37, %36 : vector<1x8xi32>
    %c8_i32 = arith.constant 8 : i32
    %39 = vector.broadcast %c8_i32 : i32 to vector<1x8xi32>
    %40 = arith.addi %39, %38 : vector<1x8xi32>
    %c1_i32_20 = arith.constant 1 : i32
    %41 = vector.broadcast %c1_i32_20 : i32 to vector<1x8xi32>
    %42 = arith.addi %40, %41 : vector<1x8xi32>
    %43 = vector.broadcast %42 : vector<1x8xi32> to vector<14x8xi32>
    %44 = arith.cmpi eq, %12, %43 : vector<14x8xi32>
    %45 = vector.broadcast %40 : vector<1x8xi32> to vector<14x8xi32>
    %46 = arith.cmpi eq, %12, %45 : vector<14x8xi32>
    %cst_21 = arith.constant 0.000000e+00 : f32
    %47 = vector.broadcast %cst_21 : f32 to vector<14x8xf32>
    %48 = arith.subf %47, %11 : vector<14x8xf32>
    %cst_22 = arith.constant 0.000000e+00 : f32
    %49 = vector.broadcast %cst_22 : f32 to vector<14x8xf32>
    %50 = arith.select %46, %48, %49 : vector<14x8xi1>, vector<14x8xf32>
    %51 = arith.select %44, %11, %50 : vector<14x8xi1>, vector<14x8xf32>
    %cst_23 = arith.constant dense<0.000000e+00> : vector<8xf32>
    %52 = vector.multi_reduction <add>, %51, %cst_23 [0] : vector<14x8xf32> to vector<8xf32>
    %53 = vector.shape_cast %52 : vector<8xf32> to vector<1x8xf32>
    %c2_i32_24 = arith.constant 2 : i32
    %54 = vector.broadcast %c2_i32_24 : i32 to vector<1x8xi32>
    %55 = arith.muli %54, %36 : vector<1x8xi32>
    %cst_25 = arith.constant 0.000000e+00 : f32
    %56 = vector.broadcast %cst_25 : f32 to vector<1x8xf32>
    %57 = arith.cmpf ogt, %53, %56 : vector<1x8xf32>
    %58 = arith.extui %57 : vector<1x8xi1> to vector<1x8xi32>
    %59 = arith.addi %55, %58 : vector<1x8xi32>
    %c2_i32_26 = arith.constant 2 : i32
    %60 = vector.broadcast %c2_i32_26 : i32 to vector<1x8xi32>
    %61 = arith.muli %60, %59 : vector<1x8xi32>
    %c0_i32_27 = arith.constant 0 : i32
    %62 = vector.broadcast %c0_i32_27 : i32 to vector<1x8xi32>
    %63 = arith.addi %62, %61 : vector<1x8xi32>
    %c1_i32_28 = arith.constant 1 : i32
    %64 = vector.broadcast %c1_i32_28 : i32 to vector<1x8xi32>
    %65 = arith.addi %63, %64 : vector<1x8xi32>
    %66 = vector.broadcast %65 : vector<1x8xi32> to vector<14x8xi32>
    %67 = arith.cmpi eq, %12, %66 : vector<14x8xi32>
    %68 = vector.broadcast %63 : vector<1x8xi32> to vector<14x8xi32>
    %69 = arith.cmpi eq, %12, %68 : vector<14x8xi32>
    %cst_29 = arith.constant 0.000000e+00 : f32
    %70 = vector.broadcast %cst_29 : f32 to vector<14x8xf32>
    %71 = arith.subf %70, %11 : vector<14x8xf32>
    %cst_30 = arith.constant 0.000000e+00 : f32
    %72 = vector.broadcast %cst_30 : f32 to vector<14x8xf32>
    %73 = arith.select %69, %71, %72 : vector<14x8xi1>, vector<14x8xf32>
    %74 = arith.select %67, %11, %73 : vector<14x8xi1>, vector<14x8xf32>
    %cst_31 = arith.constant dense<0.000000e+00> : vector<8xf32>
    %75 = vector.multi_reduction <add>, %74, %cst_31 [0] : vector<14x8xf32> to vector<8xf32>
    %76 = vector.shape_cast %75 : vector<8xf32> to vector<1x8xf32>
    %c2_i32_32 = arith.constant 2 : i32
    %77 = vector.broadcast %c2_i32_32 : i32 to vector<1x8xi32>
    %78 = arith.muli %77, %59 : vector<1x8xi32>
    %cst_33 = arith.constant 0.000000e+00 : f32
    %79 = vector.broadcast %cst_33 : f32 to vector<1x8xf32>
    %80 = arith.cmpf ogt, %76, %79 : vector<1x8xf32>
    %81 = arith.extui %80 : vector<1x8xi1> to vector<1x8xi32>
    %82 = arith.addi %78, %81 : vector<1x8xi32>
    %c0_34 = arith.constant 0 : index
    %c0_35 = arith.constant 0 : index
    %c0_36 = arith.constant 0 : index
    %83 = vector.load %arg7[%c0_34, %c0_35, %c0_36] : memref<1x1x8xi32, #tpu.memory_space<vmem>>, vector<1x1x8xi32>
    %84 = vector.shape_cast %83 : vector<1x1x8xi32> to vector<1x8xi32>
    %85 = vector.shape_cast %82 : vector<1x8xi32> to vector<1x1x8xi32>
    tpu.vector_store %arg7[%c0_34, %c0_35, %c0_36], %85 {strides = array<i32>} : memref<1x1x8xi32, #tpu.memory_space<vmem>>, vector<1x1x8xi32>,
    return
  }
  func.func @transform_0(%arg0: i32) -> (i32, i32, i32) {
    %c0_i32 = arith.constant 0 : i32
    %c0_i32_0 = arith.constant 0 : i32
    %c0_i32_1 = arith.constant 0 : i32
    return %arg0, %c0_i32, %c0_i32_0 : i32, i32, i32
  }
  func.func @transform_1(%arg0: i32) -> (i32, i32) {
    %c0_i32 = arith.constant 0 : i32
    %c0_i32_0 = arith.constant 0 : i32
    %c0_i32_1 = arith.constant 0 : i32
    return %c0_i32, %c0_i32_0 : i32, i32
  }
  func.func @transform_2(%arg0: i32) -> (i32, i32) {
    %c0_i32 = arith.constant 0 : i32
    %c0_i32_0 = arith.constant 0 : i32
    %c0_i32_1 = arith.constant 0 : i32
    return %c0_i32, %c0_i32_0 : i32, i32
  }
  func.func @transform_3(%arg0: i32) -> (i32, i32) {
    %c0_i32 = arith.constant 0 : i32
    %c0_i32_0 = arith.constant 0 : i32
    %c0_i32_1 = arith.constant 0 : i32
    return %c0_i32, %c0_i32_0 : i32, i32
  }
  func.func @transform_4(%arg0: i32) -> (i32, i32) {
    %c0_i32 = arith.constant 0 : i32
    %c0_i32_0 = arith.constant 0 : i32
    %c0_i32_1 = arith.constant 0 : i32
    return %c0_i32, %c0_i32_0 : i32, i32
  }
  func.func @transform_5(%arg0: i32) -> (i32, i32, i32) {
    %c0_i32 = arith.constant 0 : i32
    %c0_i32_0 = arith.constant 0 : i32
    %c0_i32_1 = arith.constant 0 : i32
    return %arg0, %c0_i32, %c0_i32_0 : i32, i32, i32
  }
  func.func @transform_6(%arg0: i32) -> (i32, i32, i32) {
    %c0_i32 = arith.constant 0 : i32
    %c0_i32_0 = arith.constant 0 : i32
    %c0_i32_1 = arith.constant 0 : i32
    return %arg0, %c0_i32, %c0_i32_0 : i32, i32, i32
  }
}

</mosaic_0001>

<llo_original>
// kernel: tpu_custom_call.1
$region0: #{tpu_custom_call.1}
  #allocation0 [shape = 'u32[]', space=smem, size = 0x4, offset = 0x4, fixed_abs, tag = 'smem constant byte address 0x4 - core index']
  #allocation1 [shape = 'u32[144,128]{1,0:T(1,128)}', space=vmem, size = 0x12000, scoped, tag = 'internal scratch']
  %s0 = inlined_call_operand.vmem [shape: f32[2,32,8], index: 0, kind: input, shape index: {}]
  %s1 = inlined_call_operand.vmem [shape: f32[32,32], index: 1, kind: input, shape index: {}]
  %s2 = inlined_call_operand.vmem [shape: f32[32,32], index: 2, kind: input, shape index: {}]
  %s3 = inlined_call_operand.vmem [shape: f32[1024,32], index: 3, kind: input, shape index: {}]
  %s4 = inlined_call_operand.vmem [shape: f32[1024,32], index: 4, kind: input, shape index: {}]
  %s5 = inlined_call_operand.vmem [shape: f32[2,14,1024], index: 5, kind: input, shape index: {}]
  %s6 = inlined_call_operand.hbm [shape: s32[2,1,8], index: 6, kind: output, shape index: {}]
  %s7 = sld [smem:[#allocation0]]
  $region57: #{tpu_custom_call.1} parent=0
    _
  %s9 = ssub.s32 1, %s7
  %s10 = scalar_select 0, %s9, %s7
  $region1: #{tpu_custom_call.1} parent=0
    #allocation2 [shape = 'u8[1024]{0}', space=vmem, size = 0x400, scoped, tag = 'output window, operand 0']
    #allocation3 [shape = 's32[2]{0}', space=sflag, size = 0x8, scoped, tag = 'scoped memory for tpu_custom_call.1']
    %11 = vsyncpa [#allocation3], 0
    %s12 = scalar_lea.sflag [#allocation3], 1
    %13 = vsyncpa %s12, 0
    loop: start=0, step=1, limit=4
    $region2: #{tpu_custom_call.1} parent=1 // loop_pre_header
      _
    $region3: #{tpu_custom_call.1} parent=1 // loop_header
      %s15 = sphi 0, %s19
      %p16 = scmp.ge.s32.totalorder %s15, 4
      %s25 = sphi 0, %s27
      %s28 = sphi 0, %s25
      %s29 = sphi 0, %s28
      %s45 = sphi 0, %s29
      %s49 = sphi 0, %s49
      %s51 = sphi 0, %s49
      %s52 = sphi 0, %s51
      %s66 = sphi 0, %s52
      %s70 = sphi 0, %s70
      %s72 = sphi 0, %s70
      %s73 = sphi 0, %s72
      %s87 = sphi 0, %s73
      %s91 = sphi 0, %s91
      %s93 = sphi 0, %s91
      %s94 = sphi 0, %s93
      %s108 = sphi 0, %s94
      %s112 = sphi 0, %s112
      %s114 = sphi 0, %s112
      %s115 = sphi 0, %s114
      %s129 = sphi 0, %s115
      %s135 = sphi 0, %s137
      %s138 = sphi 0, %s135
      %s139 = sphi 0, %s138
      %s155 = sphi 0, %s139
      %s161 = sphi 0, %s163
      %s164 = sphi 0, %s161
      %s165 = sphi 0, %s164
      %s181 = sphi 0, %s165
    $region4: #{tpu_custom_call.1} parent=1 // loop_header_branch
      %18 = sbr.rel (%p16) target = $region8
    $region5: #{tpu_custom_call.1} parent=1 // loop_body
      %s20 = ssub.s32 %s15, 1
      %s21 = ssub.s32 %s15, 2
      %s22 = sadd.s32 %s15, 1
      %s23 = ssub.s32 %s15, %s22
      %p24 = scmp.eq.s32.totalorder %s23, 0
      %s26 = sadd.s32 %s25, 1
      %s27 = scalar_select %p24, %s25, %s26
      %p30 = pneg %p24
      %p31 = scmp.eq.s32.totalorder %s15, 1
      %p32 = por %p30, %p31
      %p33 = scmp.ne.s32.totalorder %s25, %s28
      %p34 = scmp.eq.s32.totalorder %s15, 0
      %p35 = por %p33, %p34
      %p36 = scmp.ne.s32.totalorder %s25, %s28
      %p37 = scmp.eq.s32.totalorder %s20, 1
      %p38 = por %p36, %p37
      %p39 = scmp.ne.s32.totalorder %s28, %s29
      %p40 = scmp.eq.s32.totalorder %s20, 0
      %p41 = por %p39, %p40
      %p42 = scmp.ne.s32.totalorder %s28, %s29
      %p43 = scmp.eq.s32.totalorder %s21, 1
      %p44 = por %p42, %p43
      %p46 = scmp.ne.s32.totalorder %s29, %s45
      %p47 = scmp.eq.s32.totalorder %s21, 0
      %p48 = por %p46, %p47
      %s50 = sadd.s32 %s49, 1
      %p53 = scmp.eq.s32.totalorder %s15, 1
      %p54 = scmp.ne.s32.totalorder %s49, %s51
      %p55 = scmp.eq.s32.totalorder %s15, 0
      %p56 = por %p54, %p55
      %p57 = scmp.ne.s32.totalorder %s49, %s51
      %p58 = scmp.eq.s32.totalorder %s20, 1
      %p59 = por %p57, %p58
      %p60 = scmp.ne.s32.totalorder %s51, %s52
      %p61 = scmp.eq.s32.totalorder %s20, 0
      %p62 = por %p60, %p61
      %p63 = scmp.ne.s32.totalorder %s51, %s52
      %p64 = scmp.eq.s32.totalorder %s21, 1
      %p65 = por %p63, %p64
      %p67 = scmp.ne.s32.totalorder %s52, %s66
      %p68 = scmp.eq.s32.totalorder %s21, 0
      %p69 = por %p67, %p68
      %s71 = sadd.s32 %s70, 1
      %p74 = scmp.eq.s32.totalorder %s15, 1
      %p75 = scmp.ne.s32.totalorder %s70, %s72
      %p76 = scmp.eq.s32.totalorder %s15, 0
      %p77 = por %p75, %p76
      %p78 = scmp.ne.s32.totalorder %s70, %s72
      %p79 = scmp.eq.s32.totalorder %s20, 1
      %p80 = por %p78, %p79
      %p81 = scmp.ne.s32.totalorder %s72, %s73
      %p82 = scmp.eq.s32.totalorder %s20, 0
      %p83 = por %p81, %p82
      %p84 = scmp.ne.s32.totalorder %s72, %s73
      %p85 = scmp.eq.s32.totalorder %s21, 1
      %p86 = por %p84, %p85
      %p88 = scmp.ne.s32.totalorder %s73, %s87
      %p89 = scmp.eq.s32.totalorder %s21, 0
      %p90 = por %p88, %p89
      %s92 = sadd.s32 %s91, 1
      %p95 = scmp.eq.s32.totalorder %s15, 1
      %p96 = scmp.ne.s32.totalorder %s91, %s93
      %p97 = scmp.eq.s32.totalorder %s15, 0
      %p98 = por %p96, %p97
      %p99 = scmp.ne.s32.totalorder %s91, %s93
      %p100 = scmp.eq.s32.totalorder %s20, 1
      %p101 = por %p99, %p100
      %p102 = scmp.ne.s32.totalorder %s93, %s94
      %p103 = scmp.eq.s32.totalorder %s20, 0
      %p104 = por %p102, %p103
      %p105 = scmp.ne.s32.totalorder %s93, %s94
      %p106 = scmp.eq.s32.totalorder %s21, 1
      %p107 = por %p105, %p106
      %p109 = scmp.ne.s32.totalorder %s94, %s108
      %p110 = scmp.eq.s32.totalorder %s21, 0
      %p111 = por %p109, %p110
      %s113 = sadd.s32 %s112, 1
      %p116 = scmp.eq.s32.totalorder %s15, 1
      %p117 = scmp.ne.s32.totalorder %s112, %s114
      %p118 = scmp.eq.s32.totalorder %s15, 0
      %p119 = por %p117, %p118
      %p120 = scmp.ne.s32.totalorder %s112, %s114
      %p121 = scmp.eq.s32.totalorder %s20, 1
      %p122 = por %p120, %p121
      %p123 = scmp.ne.s32.totalorder %s114, %s115
      %p124 = scmp.eq.s32.totalorder %s20, 0
      %p125 = por %p123, %p124
      %p126 = scmp.ne.s32.totalorder %s114, %s115
      %p127 = scmp.eq.s32.totalorder %s21, 1
      %p128 = por %p126, %p127
      %p130 = scmp.ne.s32.totalorder %s115, %s129
      %p131 = scmp.eq.s32.totalorder %s21, 0
      %p132 = por %p130, %p131
      %s133 = ssub.s32 %s15, %s22
      %p134 = scmp.eq.s32.totalorder %s133, 0
      %s136 = sadd.s32 %s135, 1
      %s137 = scalar_select %p134, %s135, %s136
      %p140 = pneg %p134
      %p141 = scmp.eq.s32.totalorder %s15, 1
      %p142 = por %p140, %p141
      %p143 = scmp.ne.s32.totalorder %s135, %s138
      %p144 = scmp.eq.s32.totalorder %s15, 0
      %p145 = por %p143, %p144
      %p146 = scmp.ne.s32.totalorder %s135, %s138
      %p147 = scmp.eq.s32.totalorder %s20, 1
      %p148 = por %p146, %p147
      %p149 = scmp.ne.s32.totalorder %s138, %s139
      %p150 = scmp.eq.s32.totalorder %s20, 0
      %p151 = por %p149, %p150
      %p152 = scmp.ne.s32.totalorder %s138, %s139
      %p153 = scmp.eq.s32.totalorder %s21, 1
      %p154 = por %p152, %p153
      %p156 = scmp.ne.s32.totalorder %s139, %s155
      %p157 = scmp.eq.s32.totalorder %s21, 0
      %p158 = por %p156, %p157
      %s159 = ssub.s32 %s15, %s22
      %p160 = scmp.eq.s32.totalorder %s159, 0
      %s162 = sadd.s32 %s161, 1
      %s163 = scalar_select %p160, %s161, %s162
      %p166 = pneg %p160
      %p167 = scmp.eq.s32.totalorder %s15, 1
      %p168 = por %p166, %p167
      %p169 = scmp.ne.s32.totalorder %s161, %s164
      %p170 = scmp.eq.s32.totalorder %s15, 0
      %p171 = por %p169, %p170
      %p172 = scmp.ne.s32.totalorder %s161, %s164
      %p173 = scmp.eq.s32.totalorder %s20, 1
      %p174 = por %p172, %p173
      %p175 = scmp.ne.s32.totalorder %s164, %s165
      %p176 = scmp.eq.s32.totalorder %s20, 0
      %p177 = por %p175, %p176
      %p178 = scmp.ne.s32.totalorder %s164, %s165
      %p179 = scmp.eq.s32.totalorder %s21, 1
      %p180 = por %p178, %p179
      %p182 = scmp.ne.s32.totalorder %s165, %s181
      %p183 = scmp.eq.s32.totalorder %s21, 0
      %p184 = por %p182, %p183
      %p185 = scmp.le.s32.totalorder 1, %s15
      %p186 = scmp.lt.s32.totalorder %s15, 3
      %p187 = pnand %p185, %p186
      %p188 = pneg %p187
      // Predicated region
      $region9: #{tpu_custom_call.1} parent=5 // pred_check
        _
      $region10: #{tpu_custom_call.1} parent=5 // pred_check_branch
        %190 = sbr.rel (%p187) target = $region12
      $region11: #{tpu_custom_call.1} parent=5 // pred_region
        %s191 = ssub.s32 %s15, 1
        // Predicated region
        $region13: #{tpu_custom_call.1} parent=11 // pred_check
          %p192 = pneg %p62
        $region14: #{tpu_custom_call.1} parent=11 // pred_check_branch
          %194 = sbr.rel (%p192) target = $region16
        $region15: #{tpu_custom_call.1} parent=11 // pred_region
          _
        $region16: #{tpu_custom_call.1} parent=11 // pred_fallthru
          _
        // Predicated region
        $region17: #{tpu_custom_call.1} parent=11 // pred_check
          %p195 = pneg %p83
        $region18: #{tpu_custom_call.1} parent=11 // pred_check_branch
          %197 = sbr.rel (%p195) target = $region20
        $region19: #{tpu_custom_call.1} parent=11 // pred_region
          _
        $region20: #{tpu_custom_call.1} parent=11 // pred_fallthru
          _
        // Predicated region
        $region21: #{tpu_custom_call.1} parent=11 // pred_check
          %p198 = pneg %p104
        $region22: #{tpu_custom_call.1} parent=11 // pred_check_branch
          %200 = sbr.rel (%p198) target = $region24
        $region23: #{tpu_custom_call.1} parent=11 // pred_region
          _
        $region24: #{tpu_custom_call.1} parent=11 // pred_fallthru
          _
        // Predicated region
        $region25: #{tpu_custom_call.1} parent=11 // pred_check
          %p201 = pneg %p125
        $region26: #{tpu_custom_call.1} parent=11 // pred_check_branch
          %203 = sbr.rel (%p201) target = $region28
        $region27: #{tpu_custom_call.1} parent=11 // pred_region
          _
        $region28: #{tpu_custom_call.1} parent=11 // pred_fallthru
          _
      $region12: #{tpu_custom_call.1} parent=5 // pred_fallthru
        _
      %p204 = scmp.lt.s32.totalorder %s15, 2
      // Predicated region
      $region29: #{tpu_custom_call.1} parent=5 // pred_check
        %p205 = pneg %p204
      $region30: #{tpu_custom_call.1} parent=5 // pred_check_branch
        %207 = sbr.rel (%p205) target = $region32
      $region31: #{tpu_custom_call.1} parent=5 // pred_region
        // Predicated region
        $region33: #{tpu_custom_call.1} parent=31 // pred_check
          %p208 = pneg %p35
        $region34: #{tpu_custom_call.1} parent=31 // pred_check_branch
          %210 = sbr.rel (%p208) target = $region36
        $region35: #{tpu_custom_call.1} parent=31 // pred_region
          %p211 = scmp.lt.s32.totalorder %s15, 1
          %s212 = scalar_select %p211, %s15, 1
          %s213 = smul.addr %s212, 4
          %s214 = smul.addr %s213, 8
          %s215 = scalar_lea.vmem %s0, %s214
        $region36: #{tpu_custom_call.1} parent=31 // pred_fallthru
          _
        // Predicated region
        $region37: #{tpu_custom_call.1} parent=31 // pred_check
          %p216 = pneg %p145
        $region38: #{tpu_custom_call.1} parent=31 // pred_check_branch
          %218 = sbr.rel (%p216) target = $region40
        $region39: #{tpu_custom_call.1} parent=31 // pred_region
          %p219 = scmp.lt.s32.totalorder %s15, 1
          %s220 = scalar_select %p219, %s15, 1
          %s221 = smul.addr %s220, 16
          %s222 = smul.addr %s221, 8
          %s223 = scalar_lea.vmem %s5, %s222
        $region40: #{tpu_custom_call.1} parent=31 // pred_fallthru
          _
      $region32: #{tpu_custom_call.1} parent=5 // pred_fallthru
        _
      %p224 = scmp.le.s32.totalorder 1, %s15
      %p225 = scmp.lt.s32.totalorder %s15, 3
      %p226 = pnand %p224, %p225
      %p227 = pneg %p226
      // Predicated region
      $region41: #{tpu_custom_call.1} parent=5 // pred_check
        _
      $region42: #{tpu_custom_call.1} parent=5 // pred_check_branch
        %229 = sbr.rel (%p226) target = $region44
      $region43: #{tpu_custom_call.1} parent=5 // pred_region
        %s230 = ssub.s32 %s15, 1
        %p231 = scmp.lt.s32.totalorder %s20, 1
        %s232 = scalar_select %p231, %s20, 1
        %s233 = smul.addr %s232, 4
        %s234 = smul.addr %s233, 8
        %s235 = scalar_lea.vmem %s0, %s234
        %p236 = pneg %p41
        %p237 = pneg %p38
        %p238 = pneg %p62
        %p239 = pneg %p59
        %p240 = pneg %p83
        %p241 = pneg %p80
        %p242 = pneg %p104
        %p243 = pneg %p101
        %p244 = pneg %p125
        %p245 = pneg %p122
        %p246 = scmp.lt.s32.totalorder %s20, 1
        %s247 = scalar_select %p246, %s20, 1
        %s248 = smul.addr %s247, 16
        %s249 = smul.addr %s248, 8
        %s250 = scalar_lea.vmem %s5, %s249
        %p251 = pneg %p151
        %p252 = pneg %p148
        %p253 = pneg %p177
        %p254 = pneg %p174
        %s255 = sand.u32 %s164, 1
        %s256 = scalar_lea.sflag [#allocation3], %s255
        %s257 = sand.u32 %s164, 1
        %s258 = scalar_lea.vmem [#allocation2], %s257
        %p259 = scmp.lt.s32.totalorder %s20, 1
        %s260 = scalar_select %p259, %s20, 1
        %s261 = smul.addr %s260, 4
        %s262 = smul.addr %s261, 8
        %s263 = scalar_lea.vmem %s0, %s262
        %p264 = scmp.lt.s32.totalorder %s20, 1
        %s265 = scalar_select %p264, %s20, 1
        %s266 = smul.addr %s265, 16
        %s267 = smul.addr %s266, 8
        %s268 = scalar_lea.vmem %s5, %s267
        %v269 = vld [vmem:[%s263] sm:$0xff]
        %v270 = vld [vmem:[%s263 + $0x8] sm:$0xff]
        %v271 = vld [vmem:[%s263 + $0x10] sm:$0xff]
        %v272 = vld [vmem:[%s263 + $0x18] sm:$0xff]
        %v273 = vld [vmem:[%s1] sm:$0xff]
        %v274 = vld [vmem:[%s1 + $0x8] sm:$0xff]
        %v275 = vld [vmem:[%s1 + $0x10] sm:$0xff]
        %v276 = vld [vmem:[%s1 + $0x18] sm:$0xff]
        %vm277 = vcmask 261120
        %v279 = vsel %vm277, %v273, 0
        %v282 = vsel %vm277, %v274, 0
        %v285 = vsel %vm277, %v275, 0
        %v288 = vsel %vm277, %v276, 0
        %290 = vmatprep.subr.mxu0 0.0
        %291 = vmatpush1.msra.mxu0 0.0
        %292 = vmatprep.subr.mxu0 0.0
        %293 = vmatpush1.msra.mxu0 0.0
        %294 = vmatprep.subr.mxu0 0.0
        %295 = vmatpush1.msra.mxu0 0.0
        %296 = vmatprep.subr.mxu0 0.0
        %297 = vmatpush1.msra.mxu0 0.0
        %298 = vmatprep.subr.mxu0 0.0
        %299 = vmatpush1.msra.mxu0 0.0
        %300 = vmatprep.subr.mxu0 0.0
        %301 = vmatpush1.msra.mxu0 0.0
        %302 = vmatprep.subr.mxu0 0.0
        %303 = vmatpush1.msra.mxu0 0.0
        %304 = vmatprep.subr.mxu0 0.0
        %305 = vmatpush1.msra.mxu0 0.0
        %306 = vmatprep.subr.mxu0 0.0
        %307 = vmatpush1.msra.mxu0 0.0
        %308 = vmatprep.subr.mxu0 0.0
        %309 = vmatpush1.msra.mxu0 0.0
        %310 = vmatprep.subr.mxu0 0.0
        %311 = vmatpush1.msra.mxu0 0.0
        %312 = vmatprep.subr.mxu0 0.0
        %313 = vmatpush1.msra.mxu0 0.0
        %314 = vmatprep.subr.mxu0 0.0
        %315 = vmatpush1.msra.mxu0 %v272
        %316 = vmatprep.subr.mxu0 0.0
        %317 = vmatpush1.msra.mxu0 %v271
        %318 = vmatprep.subr.mxu0 0.0
        %319 = vmatpush1.msra.mxu0 %v270
        %320 = vmatprep.subr.mxu0 0.0
        %321 = vmatpush1.msra.mxu0 %v269
        %322 = vmatprep.subr.mxu0 0.0
        %323 = vmatpush2.msra.mxu0 0.0
        %324 = vmatprep.subr.mxu0 0.0
        %325 = vmatpush2.msra.mxu0 0.0
        %326 = vmatprep.subr.mxu0 0.0
        %327 = vmatpush2.msra.mxu0 0.0
        %328 = vmatprep.subr.mxu0 0.0
        %329 = vmatpush2.msra.mxu0 0.0
        %330 = vmatprep.subr.mxu0 0.0
        %331 = vmatpush2.msra.mxu0 0.0
        %332 = vmatprep.subr.mxu0 0.0
        %333 = vmatpush2.msra.mxu0 0.0
        %334 = vmatprep.subr.mxu0 0.0
        %335 = vmatpush2.msra.mxu0 0.0
        %336 = vmatprep.subr.mxu0 0.0
        %337 = vmatpush2.msra.mxu0 0.0
        %338 = vmatprep.subr.mxu0 0.0
        %339 = vmatpush2.msra.mxu0 0.0
        %340 = vmatprep.subr.mxu0 0.0
        %341 = vmatpush2.msra.mxu0 0.0
        %342 = vmatprep.subr.mxu0 0.0
        %343 = vmatpush2.msra.mxu0 0.0
        %344 = vmatprep.subr.mxu0 0.0
        %345 = vmatpush2.msra.mxu0 0.0
        %346 = vmatprep.subr.mxu0 0.0
        %347 = vmatpush2.msra.mxu0 0.0
        %348 = vmatprep.subr.mxu0 0.0
        %349 = vmatpush2.msra.mxu0 0.0
        %350 = vmatprep.subr.mxu0 0.0
        %351 = vmatpush2.msra.mxu0 0.0
        %352 = vmatprep.subr.mxu0 0.0
        %353 = vmatpush2.msra.mxu0 0.0
        %354 = vmatprep.mubr.f32.mxu0 0.0
        %355 = vmatmul.mubr.f32.gmra.mxu0 %v279
        %v356 = vpop.f32.mrf.mxu0
        %v357 = vadd.f32 0.0, %v356
        %v358 = vpop.f32.mrf.mxu0
        %359 = vmatprep.mubr.f32.mxu0 0.0
        %360 = vmatmul.mubr.f32.gmra.mxu0 %v282
        %v361 = vpop.f32.mrf.mxu0
        %v362 = vadd.f32 0.0, %v361
        %v363 = vpop.f32.mrf.mxu0
        %364 = vmatprep.mubr.f32.mxu0 0.0
        %365 = vmatmul.mubr.f32.gmra.mxu0 %v285
        %v366 = vpop.f32.mrf.mxu0
        %v367 = vadd.f32 0.0, %v366
        %v368 = vpop.f32.mrf.mxu0
        %369 = vmatprep.mubr.f32.mxu0 0.0
        %370 = vmatmul.mubr.f32.gmra.mxu0 %v288
        %v371 = vpop.f32.mrf.mxu0
        %v372 = vadd.f32 0.0, %v371
        %v373 = vpop.f32.mrf.mxu0
        %374 = vdwg.mxu0
        %v375 = vld [vmem:[%s3] sm:$0xff]
        %v376 = vld [vmem:[%s3 + $0x8] sm:$0xff]
        %v377 = vld [vmem:[%s3 + $0x10] sm:$0xff]
        %v378 = vld [vmem:[%s3 + $0x18] sm:$0xff]
        %v379 = vld [vmem:[%s3 + $0x20] sm:$0xff]
        %v380 = vld [vmem:[%s3 + $0x28] sm:$0xff]
        %v381 = vld [vmem:[%s3 + $0x30] sm:$0xff]
        %v382 = vld [vmem:[%s3 + $0x38] sm:$0xff]
        %v383 = vld [vmem:[%s3 + $0x40] sm:$0xff]
        %v384 = vld [vmem:[%s3 + $0x48] sm:$0xff]
        %v385 = vld [vmem:[%s3 + $0x50] sm:$0xff]
        %v386 = vld [vmem:[%s3 + $0x58] sm:$0xff]
        %v387 = vld [vmem:[%s3 + $0x60] sm:$0xff]
        %v388 = vld [vmem:[%s3 + $0x68] sm:$0xff]
        %v389 = vld [vmem:[%s3 + $0x70] sm:$0xff]
        %v390 = vld [vmem:[%s3 + $0x78] sm:$0xff]
        %v391 = vld [vmem:[%s3 + $0x80] sm:$0xff]
        %v392 = vld [vmem:[%s3 + $0x88] sm:$0xff]
        %v393 = vld [vmem:[%s3 + $0x90] sm:$0xff]
        %v394 = vld [vmem:[%s3 + $0x98] sm:$0xff]
        %v395 = vld [vmem:[%s3 + $0xa0] sm:$0xff]
        %v396 = vld [vmem:[%s3 + $0xa8] sm:$0xff]
        %v397 = vld [vmem:[%s3 + $0xb0] sm:$0xff]
        %v398 = vld [vmem:[%s3 + $0xb8] sm:$0xff]
        %v399 = vld [vmem:[%s3 + $0xc0] sm:$0xff]
        %v400 = vld [vmem:[%s3 + $0xc8] sm:$0xff]
        %v401 = vld [vmem:[%s3 + $0xd0] sm:$0xff]
        %v402 = vld [vmem:[%s3 + $0xd8] sm:$0xff]
        %v403 = vld [vmem:[%s3 + $0xe0] sm:$0xff]
        %v404 = vld [vmem:[%s3 + $0xe8] sm:$0xff]
        %v405 = vld [vmem:[%s3 + $0xf0] sm:$0xff]
        %v406 = vld [vmem:[%s3 + $0xf8] sm:$0xff]
        %v407 = vld [vmem:[%s3 + $0x100] sm:$0xff]
        %v408 = vld [vmem:[%s3 + $0x108] sm:$0xff]
        %v409 = vld [vmem:[%s3 + $0x110] sm:$0xff]
        %v410 = vld [vmem:[%s3 + $0x118] sm:$0xff]
        %v411 = vld [vmem:[%s3 + $0x120] sm:$0xff]
        %v412 = vld [vmem:[%s3 + $0x128] sm:$0xff]
        %v413 = vld [vmem:[%s3 + $0x130] sm:$0xff]
        %v414 = vld [vmem:[%s3 + $0x138] sm:$0xff]
        %v415 = vld [vmem:[%s3 + $0x140] sm:$0xff]
        %v416 = vld [vmem:[%s3 + $0x148] sm:$0xff]
        %v417 = vld [vmem:[%s3 + $0x150] sm:$0xff]
        %v418 = vld [vmem:[%s3 + $0x158] sm:$0xff]
        %v419 = vld [vmem:[%s3 + $0x160] sm:$0xff]
        %v420 = vld [vmem:[%s3 + $0x168] sm:$0xff]
        %v421 = vld [vmem:[%s3 + $0x170] sm:$0xff]
        %v422 = vld [vmem:[%s3 + $0x178] sm:$0xff]
        %v423 = vld [vmem:[%s3 + $0x180] sm:$0xff]
        %v424 = vld [vmem:[%s3 + $0x188] sm:$0xff]
        %v425 = vld [vmem:[%s3 + $0x190] sm:$0xff]
        %v426 = vld [vmem:[%s3 + $0x198] sm:$0xff]
        %v427 = vld [vmem:[%s3 + $0x1a0] sm:$0xff]
        %v428 = vld [vmem:[%s3 + $0x1a8] sm:$0xff]
        %v429 = vld [vmem:[%s3 + $0x1b0] sm:$0xff]
        %v430 = vld [vmem:[%s3 + $0x1b8] sm:$0xff]
        %v431 = vld [vmem:[%s3 + $0x1c0] sm:$0xff]
        %v432 = vld [vmem:[%s3 + $0x1c8] sm:$0xff]
        %v433 = vld [vmem:[%s3 + $0x1d0] sm:$0xff]
        %v434 = vld [vmem:[%s3 + $0x1d8] sm:$0xff]
        %v435 = vld [vmem:[%s3 + $0x1e0] sm:$0xff]
        %v436 = vld [vmem:[%s3 + $0x1e8] sm:$0xff]
        %v437 = vld [vmem:[%s3 + $0x1f0] sm:$0xff]
        %v438 = vld [vmem:[%s3 + $0x1f8] sm:$0xff]
        %v439 = vld [vmem:[%s3 + $0x200] sm:$0xff]
        %v440 = vld [vmem:[%s3 + $0x208] sm:$0xff]
        %v441 = vld [vmem:[%s3 + $0x210] sm:$0xff]
        %v442 = vld [vmem:[%s3 + $0x218] sm:$0xff]
        %v443 = vld [vmem:[%s3 + $0x220] sm:$0xff]
        %v444 = vld [vmem:[%s3 + $0x228] sm:$0xff]
        %v445 = vld [vmem:[%s3 + $0x230] sm:$0xff]
        %v446 = vld [vmem:[%s3 + $0x238] sm:$0xff]
        %v447 = vld [vmem:[%s3 + $0x240] sm:$0xff]
        %v448 = vld [vmem:[%s3 + $0x248] sm:$0xff]
        %v449 = vld [vmem:[%s3 + $0x250] sm:$0xff]
        %v450 = vld [vmem:[%s3 + $0x258] sm:$0xff]
        %v451 = vld [vmem:[%s3 + $0x260] sm:$0xff]
        %v452 = vld [vmem:[%s3 + $0x268] sm:$0xff]
        %v453 = vld [vmem:[%s3 + $0x270] sm:$0xff]
        %v454 = vld [vmem:[%s3 + $0x278] sm:$0xff]
        %v455 = vld [vmem:[%s3 + $0x280] sm:$0xff]
        %v456 = vld [vmem:[%s3 + $0x288] sm:$0xff]
        %v457 = vld [vmem:[%s3 + $0x290] sm:$0xff]
        %v458 = vld [vmem:[%s3 + $0x298] sm:$0xff]
        %v459 = vld [vmem:[%s3 + $0x2a0] sm:$0xff]
        %v460 = vld [vmem:[%s3 + $0x2a8] sm:$0xff]
        %v461 = vld [vmem:[%s3 + $0x2b0] sm:$0xff]
        %v462 = vld [vmem:[%s3 + $0x2b8] sm:$0xff]
        %v463 = vld [vmem:[%s3 + $0x2c0] sm:$0xff]
        %v464 = vld [vmem:[%s3 + $0x2c8] sm:$0xff]
        %v465 = vld [vmem:[%s3 + $0x2d0] sm:$0xff]
        %v466 = vld [vmem:[%s3 + $0x2d8] sm:$0xff]
        %v467 = vld [vmem:[%s3 + $0x2e0] sm:$0xff]
        %v468 = vld [vmem:[%s3 + $0x2e8] sm:$0xff]
        %v469 = vld [vmem:[%s3 + $0x2f0] sm:$0xff]
        %v470 = vld [vmem:[%s3 + $0x2f8] sm:$0xff]
        %v471 = vld [vmem:[%s3 + $0x300] sm:$0xff]
        %v472 = vld [vmem:[%s3 + $0x308] sm:$0xff]
        %v473 = vld [vmem:[%s3 + $0x310] sm:$0xff]
        %v474 = vld [vmem:[%s3 + $0x318] sm:$0xff]
        %v475 = vld [vmem:[%s3 + $0x320] sm:$0xff]
        %v476 = vld [vmem:[%s3 + $0x328] sm:$0xff]
        %v477 = vld [vmem:[%s3 + $0x330] sm:$0xff]
        %v478 = vld [vmem:[%s3 + $0x338] sm:$0xff]
        %v479 = vld [vmem:[%s3 + $0x340] sm:$0xff]
        %v480 = vld [vmem:[%s3 + $0x348] sm:$0xff]
        %v481 = vld [vmem:[%s3 + $0x350] sm:$0xff]
        %v482 = vld [vmem:[%s3 + $0x358] sm:$0xff]
        %v483 = vld [vmem:[%s3 + $0x360] sm:$0xff]
        %v484 = vld [vmem:[%s3 + $0x368] sm:$0xff]
        %v485 = vld [vmem:[%s3 + $0x370] sm:$0xff]
        %v486 = vld [vmem:[%s3 + $0x378] sm:$0xff]
        %v487 = vld [vmem:[%s3 + $0x380] sm:$0xff]
        %v488 = vld [vmem:[%s3 + $0x388] sm:$0xff]
        %v489 = vld [vmem:[%s3 + $0x390] sm:$0xff]
        %v490 = vld [vmem:[%s3 + $0x398] sm:$0xff]
        %v491 = vld [vmem:[%s3 + $0x3a0] sm:$0xff]
        %v492 = vld [vmem:[%s3 + $0x3a8] sm:$0xff]
        %v493 = vld [vmem:[%s3 + $0x3b0] sm:$0xff]
        %v494 = vld [vmem:[%s3 + $0x3b8] sm:$0xff]
        %v495 = vld [vmem:[%s3 + $0x3c0] sm:$0xff]
        %v496 = vld [vmem:[%s3 + $0x3c8] sm:$0xff]
        %v497 = vld [vmem:[%s3 + $0x3d0] sm:$0xff]
        %v498 = vld [vmem:[%s3 + $0x3d8] sm:$0xff]
        %v499 = vld [vmem:[%s3 + $0x3e0] sm:$0xff]
        %v500 = vld [vmem:[%s3 + $0x3e8] sm:$0xff]
        %v501 = vld [vmem:[%s3 + $0x3f0] sm:$0xff]
        %v502 = vld [vmem:[%s3 + $0x3f8] sm:$0xff]
        %v504 = vsel %vm277, %v375, 0
        %v507 = vsel %vm277, %v376, 0
        %v510 = vsel %vm277, %v377, 0
        %v513 = vsel %vm277, %v378, 0
        %v516 = vsel %vm277, %v379, 0
        %v519 = vsel %vm277, %v380, 0
        %v522 = vsel %vm277, %v381, 0
        %v525 = vsel %vm277, %v382, 0
        %v528 = vsel %vm277, %v383, 0
        %v531 = vsel %vm277, %v384, 0
        %v534 = vsel %vm277, %v385, 0
        %v537 = vsel %vm277, %v386, 0
        %v540 = vsel %vm277, %v387, 0
        %v543 = vsel %vm277, %v388, 0
        %v546 = vsel %vm277, %v389, 0
        %v549 = vsel %vm277, %v390, 0
        %v552 = vsel %vm277, %v391, 0
        %v555 = vsel %vm277, %v392, 0
        %v558 = vsel %vm277, %v393, 0
        %v561 = vsel %vm277, %v394, 0
        %v564 = vsel %vm277, %v395, 0
        %v567 = vsel %vm277, %v396, 0
        %v570 = vsel %vm277, %v397, 0
        %v573 = vsel %vm277, %v398, 0
        %v576 = vsel %vm277, %v399, 0
        %v579 = vsel %vm277, %v400, 0
        %v582 = vsel %vm277, %v401, 0
        %v585 = vsel %vm277, %v402, 0
        %v588 = vsel %vm277, %v403, 0
        %v591 = vsel %vm277, %v404, 0
        %v594 = vsel %vm277, %v405, 0
        %v597 = vsel %vm277, %v406, 0
        %v600 = vsel %vm277, %v407, 0
        %v603 = vsel %vm277, %v408, 0
        %v606 = vsel %vm277, %v409, 0
        %v609 = vsel %vm277, %v410, 0
        %v612 = vsel %vm277, %v411, 0
        %v615 = vsel %vm277, %v412, 0
        %v618 = vsel %vm277, %v413, 0
        %v621 = vsel %vm277, %v414, 0
        %v624 = vsel %vm277, %v415, 0
        %v627 = vsel %vm277, %v416, 0
        %v630 = vsel %vm277, %v417, 0
        %v633 = vsel %vm277, %v418, 0
        %v636 = vsel %vm277, %v419, 0
        %v639 = vsel %vm277, %v420, 0
        %v642 = vsel %vm277, %v421, 0
        %v645 = vsel %vm277, %v422, 0
        %v648 = vsel %vm277, %v423, 0
        %v651 = vsel %vm277, %v424, 0
        %v654 = vsel %vm277, %v425, 0
        %v657 = vsel %vm277, %v426, 0
        %v660 = vsel %vm277, %v427, 0
        %v663 = vsel %vm277, %v428, 0
        %v666 = vsel %vm277, %v429, 0
        %v669 = vsel %vm277, %v430, 0
        %v672 = vsel %vm277, %v431, 0
        %v675 = vsel %vm277, %v432, 0
        %v678 = vsel %vm277, %v433, 0
        %v681 = vsel %vm277, %v434, 0
        %v684 = vsel %vm277, %v435, 0
        %v687 = vsel %vm277, %v436, 0
        %v690 = vsel %vm277, %v437, 0
        %v693 = vsel %vm277, %v438, 0
        %v696 = vsel %vm277, %v439, 0
        %v699 = vsel %vm277, %v440, 0
        %v702 = vsel %vm277, %v441, 0
        %v705 = vsel %vm277, %v442, 0
        %v708 = vsel %vm277, %v443, 0
        %v711 = vsel %vm277, %v444, 0
        %v714 = vsel %vm277, %v445, 0
        %v717 = vsel %vm277, %v446, 0
        %v720 = vsel %vm277, %v447, 0
        %v723 = vsel %vm277, %v448, 0
        %v726 = vsel %vm277, %v449, 0
        %v729 = vsel %vm277, %v450, 0
        %v732 = vsel %vm277, %v451, 0
        %v735 = vsel %vm277, %v452, 0
        %v738 = vsel %vm277, %v453, 0
        %v741 = vsel %vm277, %v454, 0
        %v744 = vsel %vm277, %v455, 0
        %v747 = vsel %vm277, %v456, 0
        %v750 = vsel %vm277, %v457, 0
        %v753 = vsel %vm277, %v458, 0
        %v756 = vsel %vm277, %v459, 0
        %v759 = vsel %vm277, %v460, 0
        %v762 = vsel %vm277, %v461, 0
        %v765 = vsel %vm277, %v462, 0
        %v768 = vsel %vm277, %v463, 0
        %v771 = vsel %vm277, %v464, 0
        %v774 = vsel %vm277, %v465, 0
        %v777 = vsel %vm277, %v466, 0
        %v780 = vsel %vm277, %v467, 0
        %v783 = vsel %vm277, %v468, 0
        %v786 = vsel %vm277, %v469, 0
        %v789 = vsel %vm277, %v470, 0
        %v792 = vsel %vm277, %v471, 0
        %v795 = vsel %vm277, %v472, 0
        %v798 = vsel %vm277, %v473, 0
        %v801 = vsel %vm277, %v474, 0
        %v804 = vsel %vm277, %v475, 0
        %v807 = vsel %vm277, %v476, 0
        %v810 = vsel %vm277, %v477, 0
        %v813 = vsel %vm277, %v478, 0
        %v816 = vsel %vm277, %v479, 0
        %v819 = vsel %vm277, %v480, 0
        %v822 = vsel %vm277, %v481, 0
        %v825 = vsel %vm277, %v482, 0
        %v828 = vsel %vm277, %v483, 0
        %v831 = vsel %vm277, %v484, 0
        %v834 = vsel %vm277, %v485, 0
        %v837 = vsel %vm277, %v486, 0
        %v840 = vsel %vm277, %v487, 0
        %v843 = vsel %vm277, %v488, 0
        %v846 = vsel %vm277, %v489, 0
        %v849 = vsel %vm277, %v490, 0
        %v852 = vsel %vm277, %v491, 0
        %v855 = vsel %vm277, %v492, 0
        %v858 = vsel %vm277, %v493, 0
        %v861 = vsel %vm277, %v494, 0
        %v864 = vsel %vm277, %v495, 0
        %v867 = vsel %vm277, %v496, 0
        %v870 = vsel %vm277, %v497, 0
        %v873 = vsel %vm277, %v498, 0
        %v876 = vsel %vm277, %v499, 0
        %v879 = vsel %vm277, %v500, 0
        %v882 = vsel %vm277, %v501, 0
        %v885 = vsel %vm277, %v502, 0
        %887 = vmatprep.subr.mxu0 0.0
        %888 = vmatpush1.msra.mxu0 0.0
        %889 = vmatprep.subr.mxu0 0.0
        %890 = vmatpush1.msra.mxu0 0.0
        %891 = vmatprep.subr.mxu0 0.0
        %892 = vmatpush1.msra.mxu0 0.0
        %893 = vmatprep.subr.mxu0 0.0
        %894 = vmatpush1.msra.mxu0 0.0
        %895 = vmatprep.subr.mxu0 0.0
        %896 = vmatpush1.msra.mxu0 0.0
        %897 = vmatprep.subr.mxu0 0.0
        %898 = vmatpush1.msra.mxu0 0.0
        %899 = vmatprep.subr.mxu0 0.0
        %900 = vmatpush1.msra.mxu0 0.0
        %901 = vmatprep.subr.mxu0 0.0
        %902 = vmatpush1.msra.mxu0 0.0
        %903 = vmatprep.subr.mxu0 0.0
        %904 = vmatpush1.msra.mxu0 0.0
        %905 = vmatprep.subr.mxu0 0.0
        %906 = vmatpush1.msra.mxu0 0.0
        %907 = vmatprep.subr.mxu0 0.0
        %908 = vmatpush1.msra.mxu0 0.0
        %909 = vmatprep.subr.mxu0 0.0
        %910 = vmatpush1.msra.mxu0 0.0
        %911 = vmatprep.subr.mxu0 0.0
        %912 = vmatpush1.msra.mxu0 %v372
        %913 = vmatprep.subr.mxu0 0.0
        %914 = vmatpush1.msra.mxu0 %v367
        %915 = vmatprep.subr.mxu0 0.0
        %916 = vmatpush1.msra.mxu0 %v362
        %917 = vmatprep.subr.mxu0 0.0
        %918 = vmatpush1.msra.mxu0 %v357
        %919 = vmatprep.subr.mxu0 0.0
        %920 = vmatpush2.msra.mxu0 0.0
        %921 = vmatprep.subr.mxu0 0.0
        %922 = vmatpush2.msra.mxu0 0.0
        %923 = vmatprep.subr.mxu0 0.0
        %924 = vmatpush2.msra.mxu0 0.0
        %925 = vmatprep.subr.mxu0 0.0
        %926 = vmatpush2.msra.mxu0 0.0
        %927 = vmatprep.subr.mxu0 0.0
        %928 = vmatpush2.msra.mxu0 0.0
        %929 = vmatprep.subr.mxu0 0.0
        %930 = vmatpush2.msra.mxu0 0.0
        %931 = vmatprep.subr.mxu0 0.0
        %932 = vmatpush2.msra.mxu0 0.0
        %933 = vmatprep.subr.mxu0 0.0
        %934 = vmatpush2.msra.mxu0 0.0
        %935 = vmatprep.subr.mxu0 0.0
        %936 = vmatpush2.msra.mxu0 0.0
        %937 = vmatprep.subr.mxu0 0.0
        %938 = vmatpush2.msra.mxu0 0.0
        %939 = vmatprep.subr.mxu0 0.0
        %940 = vmatpush2.msra.mxu0 0.0
        %941 = vmatprep.subr.mxu0 0.0
        %942 = vmatpush2.msra.mxu0 0.0
        %943 = vmatprep.subr.mxu0 0.0
        %944 = vmatpush2.msra.mxu0 0.0
        %945 = vmatprep.subr.mxu0 0.0
        %946 = vmatpush2.msra.mxu0 0.0
        %947 = vmatprep.subr.mxu0 0.0
        %948 = vmatpush2.msra.mxu0 0.0
        %949 = vmatprep.subr.mxu0 0.0
        %950 = vmatpush2.msra.mxu0 0.0
        %951 = vmatprep.mubr.f32.mxu0 0.0
        %952 = vmatmul.mubr.f32.gmra.mxu0 %v504
        %v953 = vpop.f32.mrf.mxu0
        %v954 = vadd.f32 0.0, %v953
        %v955 = vpop.f32.mrf.mxu0
        %956 = vmatprep.mubr.f32.mxu0 0.0
        %957 = vmatmul.mubr.f32.gmra.mxu0 %v507
        %v958 = vpop.f32.mrf.mxu0
        %v959 = vadd.f32 0.0, %v958
        %v960 = vpop.f32.mrf.mxu0
        %961 = vmatprep.mubr.f32.mxu0 0.0
        %962 = vmatmul.mubr.f32.gmra.mxu0 %v510
        %v963 = vpop.f32.mrf.mxu0
        %v964 = vadd.f32 0.0, %v963
        %v965 = vpop.f32.mrf.mxu0
        %966 = vmatprep.mubr.f32.mxu0 0.0
        %967 = vmatmul.mubr.f32.gmra.mxu0 %v513
        %v968 = vpop.f32.mrf.mxu0
        %v969 = vadd.f32 0.0, %v968
        %v970 = vpop.f32.mrf.mxu0
        %971 = vmatprep.mubr.f32.mxu0 0.0
        %972 = vmatmul.mubr.f32.gmra.mxu0 %v516
        %v973 = vpop.f32.mrf.mxu0
        %v974 = vadd.f32 0.0, %v973
        %v975 = vpop.f32.mrf.mxu0
        %976 = vmatprep.mubr.f32.mxu0 0.0
        %977 = vmatmul.mubr.f32.gmra.mxu0 %v519
        %v978 = vpop.f32.mrf.mxu0
        %v979 = vadd.f32 0.0, %v978
        %v980 = vpop.f32.mrf.mxu0
        %981 = vmatprep.mubr.f32.mxu0 0.0
        %982 = vmatmul.mubr.f32.gmra.mxu0 %v522
        %v983 = vpop.f32.mrf.mxu0
        %v984 = vadd.f32 0.0, %v983
        %v985 = vpop.f32.mrf.mxu0
        %986 = vmatprep.mubr.f32.mxu0 0.0
        %987 = vmatmul.mubr.f32.gmra.mxu0 %v525
        %v988 = vpop.f32.mrf.mxu0
        %v989 = vadd.f32 0.0, %v988
        %v990 = vpop.f32.mrf.mxu0
        %991 = vmatprep.mubr.f32.mxu0 0.0
        %992 = vmatmul.mubr.f32.gmra.mxu0 %v528
        %v993 = vpop.f32.mrf.mxu0
        %v994 = vadd.f32 0.0, %v993
        %v995 = vpop.f32.mrf.mxu0
        %996 = vmatprep.mubr.f32.mxu0 0.0
        %997 = vmatmul.mubr.f32.gmra.mxu0 %v531
        %v998 = vpop.f32.mrf.mxu0
        %v999 = vadd.f32 0.0, %v998
        %v1000 = vpop.f32.mrf.mxu0
        %1001 = vmatprep.mubr.f32.mxu0 0.0
        %1002 = vmatmul.mubr.f32.gmra.mxu0 %v534
        %v1003 = vpop.f32.mrf.mxu0
        %v1004 = vadd.f32 0.0, %v1003
        %v1005 = vpop.f32.mrf.mxu0
        %1006 = vmatprep.mubr.f32.mxu0 0.0
        %1007 = vmatmul.mubr.f32.gmra.mxu0 %v537
        %v1008 = vpop.f32.mrf.mxu0
        %v1009 = vadd.f32 0.0, %v1008
        %v1010 = vpop.f32.mrf.mxu0
        %1011 = vmatprep.mubr.f32.mxu0 0.0
        %1012 = vmatmul.mubr.f32.gmra.mxu0 %v540
        %v1013 = vpop.f32.mrf.mxu0
        %v1014 = vadd.f32 0.0, %v1013
        %v1015 = vpop.f32.mrf.mxu0
        %1016 = vmatprep.mubr.f32.mxu0 0.0
        %1017 = vmatmul.mubr.f32.gmra.mxu0 %v543
        %v1018 = vpop.f32.mrf.mxu0
        %v1019 = vadd.f32 0.0, %v1018
        %v1020 = vpop.f32.mrf.mxu0
        %1021 = vmatprep.mubr.f32.mxu0 0.0
        %1022 = vmatmul.mubr.f32.gmra.mxu0 %v546
        %v1023 = vpop.f32.mrf.mxu0
        %v1024 = vadd.f32 0.0, %v1023
        %v1025 = vpop.f32.mrf.mxu0
        %1026 = vmatprep.mubr.f32.mxu0 0.0
        %1027 = vmatmul.mubr.f32.gmra.mxu0 %v549
        %v1028 = vpop.f32.mrf.mxu0
        %v1029 = vadd.f32 0.0, %v1028
        %v1030 = vpop.f32.mrf.mxu0
        %1031 = vmatprep.mubr.f32.mxu0 0.0
        %1032 = vmatmul.mubr.f32.gmra.mxu0 %v552
        %v1033 = vpop.f32.mrf.mxu0
        %v1034 = vadd.f32 0.0, %v1033
        %v1035 = vpop.f32.mrf.mxu0
        %1036 = vmatprep.mubr.f32.mxu0 0.0
        %1037 = vmatmul.mubr.f32.gmra.mxu0 %v555
        %v1038 = vpop.f32.mrf.mxu0
        %v1039 = vadd.f32 0.0, %v1038
        %v1040 = vpop.f32.mrf.mxu0
        %1041 = vmatprep.mubr.f32.mxu0 0.0
        %1042 = vmatmul.mubr.f32.gmra.mxu0 %v558
        %v1043 = vpop.f32.mrf.mxu0
        %v1044 = vadd.f32 0.0, %v1043
        %v1045 = vpop.f32.mrf.mxu0
        %1046 = vmatprep.mubr.f32.mxu0 0.0
        %1047 = vmatmul.mubr.f32.gmra.mxu0 %v561
        %v1048 = vpop.f32.mrf.mxu0
        %v1049 = vadd.f32 0.0, %v1048
        %v1050 = vpop.f32.mrf.mxu0
        %1051 = vmatprep.mubr.f32.mxu0 0.0
        %1052 = vmatmul.mubr.f32.gmra.mxu0 %v564
        %v1053 = vpop.f32.mrf.mxu0
        %v1054 = vadd.f32 0.0, %v1053
        %v1055 = vpop.f32.mrf.mxu0
        %1056 = vmatprep.mubr.f32.mxu0 0.0
        %1057 = vmatmul.mubr.f32.gmra.mxu0 %v567
        %v1058 = vpop.f32.mrf.mxu0
        %v1059 = vadd.f32 0.0, %v1058
        %v1060 = vpop.f32.mrf.mxu0
        %1061 = vmatprep.mubr.f32.mxu0 0.0
        %1062 = vmatmul.mubr.f32.gmra.mxu0 %v570
        %v1063 = vpop.f32.mrf.mxu0
        %v1064 = vadd.f32 0.0, %v1063
        %v1065 = vpop.f32.mrf.mxu0
        %1066 = vmatprep.mubr.f32.mxu0 0.0
        %1067 = vmatmul.mubr.f32.gmra.mxu0 %v573
        %v1068 = vpop.f32.mrf.mxu0
        %v1069 = vadd.f32 0.0, %v1068
        %v1070 = vpop.f32.mrf.mxu0
        %1071 = vmatprep.mubr.f32.mxu0 0.0
        %1072 = vmatmul.mubr.f32.gmra.mxu0 %v576
        %v1073 = vpop.f32.mrf.mxu0
        %v1074 = vadd.f32 0.0, %v1073
        %v1075 = vpop.f32.mrf.mxu0
        %1076 = vmatprep.mubr.f32.mxu0 0.0
        %1077 = vmatmul.mubr.f32.gmra.mxu0 %v579
        %v1078 = vpop.f32.mrf.mxu0
        %v1079 = vadd.f32 0.0, %v1078
        %v1080 = vpop.f32.mrf.mxu0
        %1081 = vmatprep.mubr.f32.mxu0 0.0
        %1082 = vmatmul.mubr.f32.gmra.mxu0 %v582
        %v1083 = vpop.f32.mrf.mxu0
        %v1084 = vadd.f32 0.0, %v1083
        %v1085 = vpop.f32.mrf.mxu0
        %1086 = vmatprep.mubr.f32.mxu0 0.0
        %1087 = vmatmul.mubr.f32.gmra.mxu0 %v585
        %v1088 = vpop.f32.mrf.mxu0
        %v1089 = vadd.f32 0.0, %v1088
        %v1090 = vpop.f32.mrf.mxu0
        %1091 = vmatprep.mubr.f32.mxu0 0.0
        %1092 = vmatmul.mubr.f32.gmra.mxu0 %v588
        %v1093 = vpop.f32.mrf.mxu0
        %v1094 = vadd.f32 0.0, %v1093
        %v1095 = vpop.f32.mrf.mxu0
        %1096 = vmatprep.mubr.f32.mxu0 0.0
        %1097 = vmatmul.mubr.f32.gmra.mxu0 %v591
        %v1098 = vpop.f32.mrf.mxu0
        %v1099 = vadd.f32 0.0, %v1098
        %v1100 = vpop.f32.mrf.mxu0
        %1101 = vmatprep.mubr.f32.mxu0 0.0
        %1102 = vmatmul.mubr.f32.gmra.mxu0 %v594
        %v1103 = vpop.f32.mrf.mxu0
        %v1104 = vadd.f32 0.0, %v1103
        %v1105 = vpop.f32.mrf.mxu0
        %1106 = vmatprep.mubr.f32.mxu0 0.0
        %1107 = vmatmul.mubr.f32.gmra.mxu0 %v597
        %v1108 = vpop.f32.mrf.mxu0
        %v1109 = vadd.f32 0.0, %v1108
        %v1110 = vpop.f32.mrf.mxu0
        %1111 = vmatprep.mubr.f32.mxu0 0.0
        %1112 = vmatmul.mubr.f32.gmra.mxu0 %v600
        %v1113 = vpop.f32.mrf.mxu0
        %v1114 = vadd.f32 0.0, %v1113
        %v1115 = vpop.f32.mrf.mxu0
        %1116 = vmatprep.mubr.f32.mxu0 0.0
        %1117 = vmatmul.mubr.f32.gmra.mxu0 %v603
        %v1118 = vpop.f32.mrf.mxu0
        %v1119 = vadd.f32 0.0, %v1118
        %v1120 = vpop.f32.mrf.mxu0
        %1121 = vmatprep.mubr.f32.mxu0 0.0
        %1122 = vmatmul.mubr.f32.gmra.mxu0 %v606
        %v1123 = vpop.f32.mrf.mxu0
        %v1124 = vadd.f32 0.0, %v1123
        %v1125 = vpop.f32.mrf.mxu0
        %1126 = vmatprep.mubr.f32.mxu0 0.0
        %1127 = vmatmul.mubr.f32.gmra.mxu0 %v609
        %v1128 = vpop.f32.mrf.mxu0
        %v1129 = vadd.f32 0.0, %v1128
        %v1130 = vpop.f32.mrf.mxu0
        %1131 = vmatprep.mubr.f32.mxu0 0.0
        %1132 = vmatmul.mubr.f32.gmra.mxu0 %v612
        %v1133 = vpop.f32.mrf.mxu0
        %v1134 = vadd.f32 0.0, %v1133
        %v1135 = vpop.f32.mrf.mxu0
        %1136 = vmatprep.mubr.f32.mxu0 0.0
        %1137 = vmatmul.mubr.f32.gmra.mxu0 %v615
        %v1138 = vpop.f32.mrf.mxu0
        %v1139 = vadd.f32 0.0, %v1138
        %v1140 = vpop.f32.mrf.mxu0
        %1141 = vmatprep.mubr.f32.mxu0 0.0
        %1142 = vmatmul.mubr.f32.gmra.mxu0 %v618
        %v1143 = vpop.f32.mrf.mxu0
        %v1144 = vadd.f32 0.0, %v1143
        %v1145 = vpop.f32.mrf.mxu0
        %1146 = vmatprep.mubr.f32.mxu0 0.0
        %1147 = vmatmul.mubr.f32.gmra.mxu0 %v621
        %v1148 = vpop.f32.mrf.mxu0
        %v1149 = vadd.f32 0.0, %v1148
        %v1150 = vpop.f32.mrf.mxu0
        %1151 = vmatprep.mubr.f32.mxu0 0.0
        %1152 = vmatmul.mubr.f32.gmra.mxu0 %v624
        %v1153 = vpop.f32.mrf.mxu0
        %v1154 = vadd.f32 0.0, %v1153
        %v1155 = vpop.f32.mrf.mxu0
        %1156 = vmatprep.mubr.f32.mxu0 0.0
        %1157 = vmatmul.mubr.f32.gmra.mxu0 %v627
        %v1158 = vpop.f32.mrf.mxu0
        %v1159 = vadd.f32 0.0, %v1158
        %v1160 = vpop.f32.mrf.mxu0
        %1161 = vmatprep.mubr.f32.mxu0 0.0
        %1162 = vmatmul.mubr.f32.gmra.mxu0 %v630
        %v1163 = vpop.f32.mrf.mxu0
        %v1164 = vadd.f32 0.0, %v1163
        %v1165 = vpop.f32.mrf.mxu0
        %1166 = vmatprep.mubr.f32.mxu0 0.0
        %1167 = vmatmul.mubr.f32.gmra.mxu0 %v633
        %v1168 = vpop.f32.mrf.mxu0
        %v1169 = vadd.f32 0.0, %v1168
        %v1170 = vpop.f32.mrf.mxu0
        %1171 = vmatprep.mubr.f32.mxu0 0.0
        %1172 = vmatmul.mubr.f32.gmra.mxu0 %v636
        %v1173 = vpop.f32.mrf.mxu0
        %v1174 = vadd.f32 0.0, %v1173
        %v1175 = vpop.f32.mrf.mxu0
        %1176 = vmatprep.mubr.f32.mxu0 0.0
        %1177 = vmatmul.mubr.f32.gmra.mxu0 %v639
        %v1178 = vpop.f32.mrf.mxu0
        %v1179 = vadd.f32 0.0, %v1178
        %v1180 = vpop.f32.mrf.mxu0
        %1181 = vmatprep.mubr.f32.mxu0 0.0
        %1182 = vmatmul.mubr.f32.gmra.mxu0 %v642
        %v1183 = vpop.f32.mrf.mxu0
        %v1184 = vadd.f32 0.0, %v1183
        %v1185 = vpop.f32.mrf.mxu0
        %1186 = vmatprep.mubr.f32.mxu0 0.0
        %1187 = vmatmul.mubr.f32.gmra.mxu0 %v645
        %v1188 = vpop.f32.mrf.mxu0
        %v1189 = vadd.f32 0.0, %v1188
        %v1190 = vpop.f32.mrf.mxu0
        %1191 = vmatprep.mubr.f32.mxu0 0.0
        %1192 = vmatmul.mubr.f32.gmra.mxu0 %v648
        %v1193 = vpop.f32.mrf.mxu0
        %v1194 = vadd.f32 0.0, %v1193
        %v1195 = vpop.f32.mrf.mxu0
        %1196 = vmatprep.mubr.f32.mxu0 0.0
        %1197 = vmatmul.mubr.f32.gmra.mxu0 %v651
        %v1198 = vpop.f32.mrf.mxu0
        %v1199 = vadd.f32 0.0, %v1198
        %v1200 = vpop.f32.mrf.mxu0
        %1201 = vmatprep.mubr.f32.mxu0 0.0
        %1202 = vmatmul.mubr.f32.gmra.mxu0 %v654
        %v1203 = vpop.f32.mrf.mxu0
        %v1204 = vadd.f32 0.0, %v1203
        %v1205 = vpop.f32.mrf.mxu0
        %1206 = vmatprep.mubr.f32.mxu0 0.0
        %1207 = vmatmul.mubr.f32.gmra.mxu0 %v657
        %v1208 = vpop.f32.mrf.mxu0
        %v1209 = vadd.f32 0.0, %v1208
        %v1210 = vpop.f32.mrf.mxu0
        %1211 = vmatprep.mubr.f32.mxu0 0.0
        %1212 = vmatmul.mubr.f32.gmra.mxu0 %v660
        %v1213 = vpop.f32.mrf.mxu0
        %v1214 = vadd.f32 0.0, %v1213
        %v1215 = vpop.f32.mrf.mxu0
        %1216 = vmatprep.mubr.f32.mxu0 0.0
        %1217 = vmatmul.mubr.f32.gmra.mxu0 %v663
        %v1218 = vpop.f32.mrf.mxu0
        %v1219 = vadd.f32 0.0, %v1218
        %v1220 = vpop.f32.mrf.mxu0
        %1221 = vmatprep.mubr.f32.mxu0 0.0
        %1222 = vmatmul.mubr.f32.gmra.mxu0 %v666
        %v1223 = vpop.f32.mrf.mxu0
        %v1224 = vadd.f32 0.0, %v1223
        %v1225 = vpop.f32.mrf.mxu0
        %1226 = vmatprep.mubr.f32.mxu0 0.0
        %1227 = vmatmul.mubr.f32.gmra.mxu0 %v669
        %v1228 = vpop.f32.mrf.mxu0
        %v1229 = vadd.f32 0.0, %v1228
        %v1230 = vpop.f32.mrf.mxu0
        %1231 = vmatprep.mubr.f32.mxu0 0.0
        %1232 = vmatmul.mubr.f32.gmra.mxu0 %v672
        %v1233 = vpop.f32.mrf.mxu0
        %v1234 = vadd.f32 0.0, %v1233
        %v1235 = vpop.f32.mrf.mxu0
        %1236 = vmatprep.mubr.f32.mxu0 0.0
        %1237 = vmatmul.mubr.f32.gmra.mxu0 %v675
        %v1238 = vpop.f32.mrf.mxu0
        %v1239 = vadd.f32 0.0, %v1238
        %v1240 = vpop.f32.mrf.mxu0
        %1241 = vmatprep.mubr.f32.mxu0 0.0
        %1242 = vmatmul.mubr.f32.gmra.mxu0 %v678
        %v1243 = vpop.f32.mrf.mxu0
        %v1244 = vadd.f32 0.0, %v1243
        %v1245 = vpop.f32.mrf.mxu0
        %1246 = vmatprep.mubr.f32.mxu0 0.0
        %1247 = vmatmul.mubr.f32.gmra.mxu0 %v681
        %v1248 = vpop.f32.mrf.mxu0
        %v1249 = vadd.f32 0.0, %v1248
        %v1250 = vpop.f32.mrf.mxu0
        %1251 = vmatprep.mubr.f32.mxu0 0.0
        %1252 = vmatmul.mubr.f32.gmra.mxu0 %v684
        %v1253 = vpop.f32.mrf.mxu0
        %v1254 = vadd.f32 0.0, %v1253
        %v1255 = vpop.f32.mrf.mxu0
        %1256 = vmatprep.mubr.f32.mxu0 0.0
        %1257 = vmatmul.mubr.f32.gmra.mxu0 %v687
        %v1258 = vpop.f32.mrf.mxu0
        %v1259 = vadd.f32 0.0, %v1258
        %v1260 = vpop.f32.mrf.mxu0
        %1261 = vmatprep.mubr.f32.mxu0 0.0
        %1262 = vmatmul.mubr.f32.gmra.mxu0 %v690
        %v1263 = vpop.f32.mrf.mxu0
        %v1264 = vadd.f32 0.0, %v1263
        %v1265 = vpop.f32.mrf.mxu0
        %1266 = vmatprep.mubr.f32.mxu0 0.0
        %1267 = vmatmul.mubr.f32.gmra.mxu0 %v693
        %v1268 = vpop.f32.mrf.mxu0
        %v1269 = vadd.f32 0.0, %v1268
        %v1270 = vpop.f32.mrf.mxu0
        %1271 = vmatprep.mubr.f32.mxu0 0.0
        %1272 = vmatmul.mubr.f32.gmra.mxu0 %v696
        %v1273 = vpop.f32.mrf.mxu0
        %v1274 = vadd.f32 0.0, %v1273
        %v1275 = vpop.f32.mrf.mxu0
        %1276 = vmatprep.mubr.f32.mxu0 0.0
        %1277 = vmatmul.mubr.f32.gmra.mxu0 %v699
        %v1278 = vpop.f32.mrf.mxu0
        %v1279 = vadd.f32 0.0, %v1278
        %v1280 = vpop.f32.mrf.mxu0
        %1281 = vmatprep.mubr.f32.mxu0 0.0
        %1282 = vmatmul.mubr.f32.gmra.mxu0 %v702
        %v1283 = vpop.f32.mrf.mxu0
        %v1284 = vadd.f32 0.0, %v1283
        %v1285 = vpop.f32.mrf.mxu0
        %1286 = vmatprep.mubr.f32.mxu0 0.0
        %1287 = vmatmul.mubr.f32.gmra.mxu0 %v705
        %v1288 = vpop.f32.mrf.mxu0
        %v1289 = vadd.f32 0.0, %v1288
        %v1290 = vpop.f32.mrf.mxu0
        %1291 = vmatprep.mubr.f32.mxu0 0.0
        %1292 = vmatmul.mubr.f32.gmra.mxu0 %v708
        %v1293 = vpop.f32.mrf.mxu0
        %v1294 = vadd.f32 0.0, %v1293
        %v1295 = vpop.f32.mrf.mxu0
        %1296 = vmatprep.mubr.f32.mxu0 0.0
        %1297 = vmatmul.mubr.f32.gmra.mxu0 %v711
        %v1298 = vpop.f32.mrf.mxu0
        %v1299 = vadd.f32 0.0, %v1298
        %v1300 = vpop.f32.mrf.mxu0
        %1301 = vmatprep.mubr.f32.mxu0 0.0
        %1302 = vmatmul.mubr.f32.gmra.mxu0 %v714
        %v1303 = vpop.f32.mrf.mxu0
        %v1304 = vadd.f32 0.0, %v1303
        %v1305 = vpop.f32.mrf.mxu0
        %1306 = vmatprep.mubr.f32.mxu0 0.0
        %1307 = vmatmul.mubr.f32.gmra.mxu0 %v717
        %v1308 = vpop.f32.mrf.mxu0
        %v1309 = vadd.f32 0.0, %v1308
        %v1310 = vpop.f32.mrf.mxu0
        %1311 = vmatprep.mubr.f32.mxu0 0.0
        %1312 = vmatmul.mubr.f32.gmra.mxu0 %v720
        %v1313 = vpop.f32.mrf.mxu0
        %v1314 = vadd.f32 0.0, %v1313
        %v1315 = vpop.f32.mrf.mxu0
        %1316 = vmatprep.mubr.f32.mxu0 0.0
        %1317 = vmatmul.mubr.f32.gmra.mxu0 %v723
        %v1318 = vpop.f32.mrf.mxu0
        %v1319 = vadd.f32 0.0, %v1318
        %v1320 = vpop.f32.mrf.mxu0
        %1321 = vmatprep.mubr.f32.mxu0 0.0
        %1322 = vmatmul.mubr.f32.gmra.mxu0 %v726
        %v1323 = vpop.f32.mrf.mxu0
        %v1324 = vadd.f32 0.0, %v1323
        %v1325 = vpop.f32.mrf.mxu0
        %1326 = vmatprep.mubr.f32.mxu0 0.0
        %1327 = vmatmul.mubr.f32.gmra.mxu0 %v729
        %v1328 = vpop.f32.mrf.mxu0
        %v1329 = vadd.f32 0.0, %v1328
        %v1330 = vpop.f32.mrf.mxu0
        %1331 = vmatprep.mubr.f32.mxu0 0.0
        %1332 = vmatmul.mubr.f32.gmra.mxu0 %v732
        %v1333 = vpop.f32.mrf.mxu0
        %v1334 = vadd.f32 0.0, %v1333
        %v1335 = vpop.f32.mrf.mxu0
        %1336 = vmatprep.mubr.f32.mxu0 0.0
        %1337 = vmatmul.mubr.f32.gmra.mxu0 %v735
        %v1338 = vpop.f32.mrf.mxu0
        %v1339 = vadd.f32 0.0, %v1338
        %v1340 = vpop.f32.mrf.mxu0
        %1341 = vmatprep.mubr.f32.mxu0 0.0
        %1342 = vmatmul.mubr.f32.gmra.mxu0 %v738
        %v1343 = vpop.f32.mrf.mxu0
        %v1344 = vadd.f32 0.0, %v1343
        %v1345 = vpop.f32.mrf.mxu0
        %1346 = vmatprep.mubr.f32.mxu0 0.0
        %1347 = vmatmul.mubr.f32.gmra.mxu0 %v741
        %v1348 = vpop.f32.mrf.mxu0
        %v1349 = vadd.f32 0.0, %v1348
        %v1350 = vpop.f32.mrf.mxu0
        %1351 = vmatprep.mubr.f32.mxu0 0.0
        %1352 = vmatmul.mubr.f32.gmra.mxu0 %v744
        %v1353 = vpop.f32.mrf.mxu0
        %v1354 = vadd.f32 0.0, %v1353
        %v1355 = vpop.f32.mrf.mxu0
        %1356 = vmatprep.mubr.f32.mxu0 0.0
        %1357 = vmatmul.mubr.f32.gmra.mxu0 %v747
        %v1358 = vpop.f32.mrf.mxu0
        %v1359 = vadd.f32 0.0, %v1358
        %v1360 = vpop.f32.mrf.mxu0
        %1361 = vmatprep.mubr.f32.mxu0 0.0
        %1362 = vmatmul.mubr.f32.gmra.mxu0 %v750
        %v1363 = vpop.f32.mrf.mxu0
        %v1364 = vadd.f32 0.0, %v1363
        %v1365 = vpop.f32.mrf.mxu0
        %1366 = vmatprep.mubr.f32.mxu0 0.0
        %1367 = vmatmul.mubr.f32.gmra.mxu0 %v753
        %v1368 = vpop.f32.mrf.mxu0
        %v1369 = vadd.f32 0.0, %v1368
        %v1370 = vpop.f32.mrf.mxu0
        %1371 = vmatprep.mubr.f32.mxu0 0.0
        %1372 = vmatmul.mubr.f32.gmra.mxu0 %v756
        %v1373 = vpop.f32.mrf.mxu0
        %v1374 = vadd.f32 0.0, %v1373
        %v1375 = vpop.f32.mrf.mxu0
        %1376 = vmatprep.mubr.f32.mxu0 0.0
        %1377 = vmatmul.mubr.f32.gmra.mxu0 %v759
        %v1378 = vpop.f32.mrf.mxu0
        %v1379 = vadd.f32 0.0, %v1378
        %v1380 = vpop.f32.mrf.mxu0
        %1381 = vmatprep.mubr.f32.mxu0 0.0
        %1382 = vmatmul.mubr.f32.gmra.mxu0 %v762
        %v1383 = vpop.f32.mrf.mxu0
        %v1384 = vadd.f32 0.0, %v1383
        %v1385 = vpop.f32.mrf.mxu0
        %1386 = vmatprep.mubr.f32.mxu0 0.0
        %1387 = vmatmul.mubr.f32.gmra.mxu0 %v765
        %v1388 = vpop.f32.mrf.mxu0
        %v1389 = vadd.f32 0.0, %v1388
        %v1390 = vpop.f32.mrf.mxu0
        %1391 = vmatprep.mubr.f32.mxu0 0.0
        %1392 = vmatmul.mubr.f32.gmra.mxu0 %v768
        %v1393 = vpop.f32.mrf.mxu0
        %v1394 = vadd.f32 0.0, %v1393
        %v1395 = vpop.f32.mrf.mxu0
        %1396 = vmatprep.mubr.f32.mxu0 0.0
        %1397 = vmatmul.mubr.f32.gmra.mxu0 %v771
        %v1398 = vpop.f32.mrf.mxu0
        %v1399 = vadd.f32 0.0, %v1398
        %v1400 = vpop.f32.mrf.mxu0
        %1401 = vmatprep.mubr.f32.mxu0 0.0
        %1402 = vmatmul.mubr.f32.gmra.mxu0 %v774
        %v1403 = vpop.f32.mrf.mxu0
        %v1404 = vadd.f32 0.0, %v1403
        %v1405 = vpop.f32.mrf.mxu0
        %1406 = vmatprep.mubr.f32.mxu0 0.0
        %1407 = vmatmul.mubr.f32.gmra.mxu0 %v777
        %v1408 = vpop.f32.mrf.mxu0
        %v1409 = vadd.f32 0.0, %v1408
        %v1410 = vpop.f32.mrf.mxu0
        %1411 = vmatprep.mubr.f32.mxu0 0.0
        %1412 = vmatmul.mubr.f32.gmra.mxu0 %v780
        %v1413 = vpop.f32.mrf.mxu0
        %v1414 = vadd.f32 0.0, %v1413
        %v1415 = vpop.f32.mrf.mxu0
        %1416 = vmatprep.mubr.f32.mxu0 0.0
        %1417 = vmatmul.mubr.f32.gmra.mxu0 %v783
        %v1418 = vpop.f32.mrf.mxu0
        %v1419 = vadd.f32 0.0, %v1418
        %v1420 = vpop.f32.mrf.mxu0
        %1421 = vmatprep.mubr.f32.mxu0 0.0
        %1422 = vmatmul.mubr.f32.gmra.mxu0 %v786
        %v1423 = vpop.f32.mrf.mxu0
        %v1424 = vadd.f32 0.0, %v1423
        %v1425 = vpop.f32.mrf.mxu0
        %1426 = vmatprep.mubr.f32.mxu0 0.0
        %1427 = vmatmul.mubr.f32.gmra.mxu0 %v789
        %v1428 = vpop.f32.mrf.mxu0
        %v1429 = vadd.f32 0.0, %v1428
        %v1430 = vpop.f32.mrf.mxu0
        %1431 = vmatprep.mubr.f32.mxu0 0.0
        %1432 = vmatmul.mubr.f32.gmra.mxu0 %v792
        %v1433 = vpop.f32.mrf.mxu0
        %v1434 = vadd.f32 0.0, %v1433
        %v1435 = vpop.f32.mrf.mxu0
        %1436 = vmatprep.mubr.f32.mxu0 0.0
        %1437 = vmatmul.mubr.f32.gmra.mxu0 %v795
        %v1438 = vpop.f32.mrf.mxu0
        %v1439 = vadd.f32 0.0, %v1438
        %v1440 = vpop.f32.mrf.mxu0
        %1441 = vmatprep.mubr.f32.mxu0 0.0
        %1442 = vmatmul.mubr.f32.gmra.mxu0 %v798
        %v1443 = vpop.f32.mrf.mxu0
        %v1444 = vadd.f32 0.0, %v1443
        %v1445 = vpop.f32.mrf.mxu0
        %1446 = vmatprep.mubr.f32.mxu0 0.0
        %1447 = vmatmul.mubr.f32.gmra.mxu0 %v801
        %v1448 = vpop.f32.mrf.mxu0
        %v1449 = vadd.f32 0.0, %v1448
        %v1450 = vpop.f32.mrf.mxu0
        %1451 = vmatprep.mubr.f32.mxu0 0.0
        %1452 = vmatmul.mubr.f32.gmra.mxu0 %v804
        %v1453 = vpop.f32.mrf.mxu0
        %v1454 = vadd.f32 0.0, %v1453
        %v1455 = vpop.f32.mrf.mxu0
        %1456 = vmatprep.mubr.f32.mxu0 0.0
        %1457 = vmatmul.mubr.f32.gmra.mxu0 %v807
        %v1458 = vpop.f32.mrf.mxu0
        %v1459 = vadd.f32 0.0, %v1458
        %v1460 = vpop.f32.mrf.mxu0
        %1461 = vmatprep.mubr.f32.mxu0 0.0
        %1462 = vmatmul.mubr.f32.gmra.mxu0 %v810
        %v1463 = vpop.f32.mrf.mxu0
        %v1464 = vadd.f32 0.0, %v1463
        %v1465 = vpop.f32.mrf.mxu0
        %1466 = vmatprep.mubr.f32.mxu0 0.0
        %1467 = vmatmul.mubr.f32.gmra.mxu0 %v813
        %v1468 = vpop.f32.mrf.mxu0
        %v1469 = vadd.f32 0.0, %v1468
        %v1470 = vpop.f32.mrf.mxu0
        %1471 = vmatprep.mubr.f32.mxu0 0.0
        %1472 = vmatmul.mubr.f32.gmra.mxu0 %v816
        %v1473 = vpop.f32.mrf.mxu0
        %v1474 = vadd.f32 0.0, %v1473
        %v1475 = vpop.f32.mrf.mxu0
        %1476 = vmatprep.mubr.f32.mxu0 0.0
        %1477 = vmatmul.mubr.f32.gmra.mxu0 %v819
        %v1478 = vpop.f32.mrf.mxu0
        %v1479 = vadd.f32 0.0, %v1478
        %v1480 = vpop.f32.mrf.mxu0
        %1481 = vmatprep.mubr.f32.mxu0 0.0
        %1482 = vmatmul.mubr.f32.gmra.mxu0 %v822
        %v1483 = vpop.f32.mrf.mxu0
        %v1484 = vadd.f32 0.0, %v1483
        %v1485 = vpop.f32.mrf.mxu0
        %1486 = vmatprep.mubr.f32.mxu0 0.0
        %1487 = vmatmul.mubr.f32.gmra.mxu0 %v825
        %v1488 = vpop.f32.mrf.mxu0
        %v1489 = vadd.f32 0.0, %v1488
        %v1490 = vpop.f32.mrf.mxu0
        %1491 = vmatprep.mubr.f32.mxu0 0.0
        %1492 = vmatmul.mubr.f32.gmra.mxu0 %v828
        %v1493 = vpop.f32.mrf.mxu0
        %v1494 = vadd.f32 0.0, %v1493
        %v1495 = vpop.f32.mrf.mxu0
        %1496 = vmatprep.mubr.f32.mxu0 0.0
        %1497 = vmatmul.mubr.f32.gmra.mxu0 %v831
        %v1498 = vpop.f32.mrf.mxu0
        %v1499 = vadd.f32 0.0, %v1498
        %v1500 = vpop.f32.mrf.mxu0
        %1501 = vmatprep.mubr.f32.mxu0 0.0
        %1502 = vmatmul.mubr.f32.gmra.mxu0 %v834
        %v1503 = vpop.f32.mrf.mxu0
        %v1504 = vadd.f32 0.0, %v1503
        %v1505 = vpop.f32.mrf.mxu0
        %1506 = vmatprep.mubr.f32.mxu0 0.0
        %1507 = vmatmul.mubr.f32.gmra.mxu0 %v837
        %v1508 = vpop.f32.mrf.mxu0
        %v1509 = vadd.f32 0.0, %v1508
        %v1510 = vpop.f32.mrf.mxu0
        %1511 = vmatprep.mubr.f32.mxu0 0.0
        %1512 = vmatmul.mubr.f32.gmra.mxu0 %v840
        %v1513 = vpop.f32.mrf.mxu0
        %v1514 = vadd.f32 0.0, %v1513
        %v1515 = vpop.f32.mrf.mxu0
        %1516 = vmatprep.mubr.f32.mxu0 0.0
        %1517 = vmatmul.mubr.f32.gmra.mxu0 %v843
        %v1518 = vpop.f32.mrf.mxu0
        %v1519 = vadd.f32 0.0, %v1518
        %v1520 = vpop.f32.mrf.mxu0
        %1521 = vmatprep.mubr.f32.mxu0 0.0
        %1522 = vmatmul.mubr.f32.gmra.mxu0 %v846
        %v1523 = vpop.f32.mrf.mxu0
        %v1524 = vadd.f32 0.0, %v1523
        %v1525 = vpop.f32.mrf.mxu0
        %1526 = vmatprep.mubr.f32.mxu0 0.0
        %1527 = vmatmul.mubr.f32.gmra.mxu0 %v849
        %v1528 = vpop.f32.mrf.mxu0
        %v1529 = vadd.f32 0.0, %v1528
        %v1530 = vpop.f32.mrf.mxu0
        %1531 = vmatprep.mubr.f32.mxu0 0.0
        %1532 = vmatmul.mubr.f32.gmra.mxu0 %v852
        %v1533 = vpop.f32.mrf.mxu0
        %v1534 = vadd.f32 0.0, %v1533
        %v1535 = vpop.f32.mrf.mxu0
        %1536 = vmatprep.mubr.f32.mxu0 0.0
        %1537 = vmatmul.mubr.f32.gmra.mxu0 %v855
        %v1538 = vpop.f32.mrf.mxu0
        %v1539 = vadd.f32 0.0, %v1538
        %v1540 = vpop.f32.mrf.mxu0
        %1541 = vmatprep.mubr.f32.mxu0 0.0
        %1542 = vmatmul.mubr.f32.gmra.mxu0 %v858
        %v1543 = vpop.f32.mrf.mxu0
        %v1544 = vadd.f32 0.0, %v1543
        %v1545 = vpop.f32.mrf.mxu0
        %1546 = vmatprep.mubr.f32.mxu0 0.0
        %1547 = vmatmul.mubr.f32.gmra.mxu0 %v861
        %v1548 = vpop.f32.mrf.mxu0
        %v1549 = vadd.f32 0.0, %v1548
        %v1550 = vpop.f32.mrf.mxu0
        %1551 = vmatprep.mubr.f32.mxu0 0.0
        %1552 = vmatmul.mubr.f32.gmra.mxu0 %v864
        %v1553 = vpop.f32.mrf.mxu0
        %v1554 = vadd.f32 0.0, %v1553
        %v1555 = vpop.f32.mrf.mxu0
        %1556 = vmatprep.mubr.f32.mxu0 0.0
        %1557 = vmatmul.mubr.f32.gmra.mxu0 %v867
        %v1558 = vpop.f32.mrf.mxu0
        %v1559 = vadd.f32 0.0, %v1558
        %v1560 = vpop.f32.mrf.mxu0
        %1561 = vmatprep.mubr.f32.mxu0 0.0
        %1562 = vmatmul.mubr.f32.gmra.mxu0 %v870
        %v1563 = vpop.f32.mrf.mxu0
        %v1564 = vadd.f32 0.0, %v1563
        %v1565 = vpop.f32.mrf.mxu0
        %1566 = vmatprep.mubr.f32.mxu0 0.0
        %1567 = vmatmul.mubr.f32.gmra.mxu0 %v873
        %v1568 = vpop.f32.mrf.mxu0
        %v1569 = vadd.f32 0.0, %v1568
        %v1570 = vpop.f32.mrf.mxu0
        %1571 = vmatprep.mubr.f32.mxu0 0.0
        %1572 = vmatmul.mubr.f32.gmra.mxu0 %v876
        %v1573 = vpop.f32.mrf.mxu0
        %v1574 = vadd.f32 0.0, %v1573
        %v1575 = vpop.f32.mrf.mxu0
        %1576 = vmatprep.mubr.f32.mxu0 0.0
        %1577 = vmatmul.mubr.f32.gmra.mxu0 %v879
        %v1578 = vpop.f32.mrf.mxu0
        %v1579 = vadd.f32 0.0, %v1578
        %v1580 = vpop.f32.mrf.mxu0
        %1581 = vmatprep.mubr.f32.mxu0 0.0
        %1582 = vmatmul.mubr.f32.gmra.mxu0 %v882
        %v1583 = vpop.f32.mrf.mxu0
        %v1584 = vadd.f32 0.0, %v1583
        %v1585 = vpop.f32.mrf.mxu0
        %1586 = vmatprep.mubr.f32.mxu0 0.0
        %1587 = vmatmul.mubr.f32.gmra.mxu0 %v885
        %v1588 = vpop.f32.mrf.mxu0
        %v1589 = vadd.f32 0.0, %v1588
        %v1590 = vpop.f32.mrf.mxu0
        %1591 = vdwg.mxu0
        %v1592 = vld [vmem:[%s4] sm:$0xff]
        %v1593 = vld [vmem:[%s4 + $0x8] sm:$0xff]
        %v1594 = vld [vmem:[%s4 + $0x10] sm:$0xff]
        %v1595 = vld [vmem:[%s4 + $0x18] sm:$0xff]
        %v1596 = vld [vmem:[%s4 + $0x20] sm:$0xff]
        %v1597 = vld [vmem:[%s4 + $0x28] sm:$0xff]
        %v1598 = vld [vmem:[%s4 + $0x30] sm:$0xff]
        %v1599 = vld [vmem:[%s4 + $0x38] sm:$0xff]
        %v1600 = vld [vmem:[%s4 + $0x40] sm:$0xff]
        %v1601 = vld [vmem:[%s4 + $0x48] sm:$0xff]
        %v1602 = vld [vmem:[%s4 + $0x50] sm:$0xff]
        %v1603 = vld [vmem:[%s4 + $0x58] sm:$0xff]
        %v1604 = vld [vmem:[%s4 + $0x60] sm:$0xff]
        %v1605 = vld [vmem:[%s4 + $0x68] sm:$0xff]
        %v1606 = vld [vmem:[%s4 + $0x70] sm:$0xff]
        %v1607 = vld [vmem:[%s4 + $0x78] sm:$0xff]
        %v1608 = vld [vmem:[%s4 + $0x80] sm:$0xff]
        %v1609 = vld [vmem:[%s4 + $0x88] sm:$0xff]
        %v1610 = vld [vmem:[%s4 + $0x90] sm:$0xff]
        %v1611 = vld [vmem:[%s4 + $0x98] sm:$0xff]
        %v1612 = vld [vmem:[%s4 + $0xa0] sm:$0xff]
        %v1613 = vld [vmem:[%s4 + $0xa8] sm:$0xff]
        %v1614 = vld [vmem:[%s4 + $0xb0] sm:$0xff]
        %v1615 = vld [vmem:[%s4 + $0xb8] sm:$0xff]
        %v1616 = vld [vmem:[%s4 + $0xc0] sm:$0xff]
        %v1617 = vld [vmem:[%s4 + $0xc8] sm:$0xff]
        %v1618 = vld [vmem:[%s4 + $0xd0] sm:$0xff]
        %v1619 = vld [vmem:[%s4 + $0xd8] sm:$0xff]
        %v1620 = vld [vmem:[%s4 + $0xe0] sm:$0xff]
        %v1621 = vld [vmem:[%s4 + $0xe8] sm:$0xff]
        %v1622 = vld [vmem:[%s4 + $0xf0] sm:$0xff]
        %v1623 = vld [vmem:[%s4 + $0xf8] sm:$0xff]
        %v1624 = vld [vmem:[%s4 + $0x100] sm:$0xff]
        %v1625 = vld [vmem:[%s4 + $0x108] sm:$0xff]
        %v1626 = vld [vmem:[%s4 + $0x110] sm:$0xff]
        %v1627 = vld [vmem:[%s4 + $0x118] sm:$0xff]
        %v1628 = vld [vmem:[%s4 + $0x120] sm:$0xff]
        %v1629 = vld [vmem:[%s4 + $0x128] sm:$0xff]
        %v1630 = vld [vmem:[%s4 + $0x130] sm:$0xff]
        %v1631 = vld [vmem:[%s4 + $0x138] sm:$0xff]
        %v1632 = vld [vmem:[%s4 + $0x140] sm:$0xff]
        %v1633 = vld [vmem:[%s4 + $0x148] sm:$0xff]
        %v1634 = vld [vmem:[%s4 + $0x150] sm:$0xff]
        %v1635 = vld [vmem:[%s4 + $0x158] sm:$0xff]
        %v1636 = vld [vmem:[%s4 + $0x160] sm:$0xff]
        %v1637 = vld [vmem:[%s4 + $0x168] sm:$0xff]
        %v1638 = vld [vmem:[%s4 + $0x170] sm:$0xff]
        %v1639 = vld [vmem:[%s4 + $0x178] sm:$0xff]
        %v1640 = vld [vmem:[%s4 + $0x180] sm:$0xff]
        %v1641 = vld [vmem:[%s4 + $0x188] sm:$0xff]
        %v1642 = vld [vmem:[%s4 + $0x190] sm:$0xff]
        %v1643 = vld [vmem:[%s4 + $0x198] sm:$0xff]
        %v1644 = vld [vmem:[%s4 + $0x1a0] sm:$0xff]
        %v1645 = vld [vmem:[%s4 + $0x1a8] sm:$0xff]
        %v1646 = vld [vmem:[%s4 + $0x1b0] sm:$0xff]
        %v1647 = vld [vmem:[%s4 + $0x1b8] sm:$0xff]
        %v1648 = vld [vmem:[%s4 + $0x1c0] sm:$0xff]
        %v1649 = vld [vmem:[%s4 + $0x1c8] sm:$0xff]
        %v1650 = vld [vmem:[%s4 + $0x1d0] sm:$0xff]
        %v1651 = vld [vmem:[%s4 + $0x1d8] sm:$0xff]
        %v1652 = vld [vmem:[%s4 + $0x1e0] sm:$0xff]
        %v1653 = vld [vmem:[%s4 + $0x1e8] sm:$0xff]
        %v1654 = vld [vmem:[%s4 + $0x1f0] sm:$0xff]
        %v1655 = vld [vmem:[%s4 + $0x1f8] sm:$0xff]
        %v1656 = vld [vmem:[%s4 + $0x200] sm:$0xff]
        %v1657 = vld [vmem:[%s4 + $0x208] sm:$0xff]
        %v1658 = vld [vmem:[%s4 + $0x210] sm:$0xff]
        %v1659 = vld [vmem:[%s4 + $0x218] sm:$0xff]
        %v1660 = vld [vmem:[%s4 + $0x220] sm:$0xff]
        %v1661 = vld [vmem:[%s4 + $0x228] sm:$0xff]
        %v1662 = vld [vmem:[%s4 + $0x230] sm:$0xff]
        %v1663 = vld [vmem:[%s4 + $0x238] sm:$0xff]
        %v1664 = vld [vmem:[%s4 + $0x240] sm:$0xff]
        %v1665 = vld [vmem:[%s4 + $0x248] sm:$0xff]
        %v1666 = vld [vmem:[%s4 + $0x250] sm:$0xff]
        %v1667 = vld [vmem:[%s4 + $0x258] sm:$0xff]
        %v1668 = vld [vmem:[%s4 + $0x260] sm:$0xff]
        %v1669 = vld [vmem:[%s4 + $0x268] sm:$0xff]
        %v1670 = vld [vmem:[%s4 + $0x270] sm:$0xff]
        %v1671 = vld [vmem:[%s4 + $0x278] sm:$0xff]
        %v1672 = vld [vmem:[%s4 + $0x280] sm:$0xff]
        %v1673 = vld [vmem:[%s4 + $0x288] sm:$0xff]
        %v1674 = vld [vmem:[%s4 + $0x290] sm:$0xff]
        %v1675 = vld [vmem:[%s4 + $0x298] sm:$0xff]
        %v1676 = vld [vmem:[%s4 + $0x2a0] sm:$0xff]
        %v1677 = vld [vmem:[%s4 + $0x2a8] sm:$0xff]
        %v1678 = vld [vmem:[%s4 + $0x2b0] sm:$0xff]
        %v1679 = vld [vmem:[%s4 + $0x2b8] sm:$0xff]
        %v1680 = vld [vmem:[%s4 + $0x2c0] sm:$0xff]
        %v1681 = vld [vmem:[%s4 + $0x2c8] sm:$0xff]
        %v1682 = vld [vmem:[%s4 + $0x2d0] sm:$0xff]
        %v1683 = vld [vmem:[%s4 + $0x2d8] sm:$0xff]
        %v1684 = vld [vmem:[%s4 + $0x2e0] sm:$0xff]
        %v1685 = vld [vmem:[%s4 + $0x2e8] sm:$0xff]
        %v1686 = vld [vmem:[%s4 + $0x2f0] sm:$0xff]
        %v1687 = vld [vmem:[%s4 + $0x2f8] sm:$0xff]
        %v1688 = vld [vmem:[%s4 + $0x300] sm:$0xff]
        %v1689 = vld [vmem:[%s4 + $0x308] sm:$0xff]
        %v1690 = vld [vmem:[%s4 + $0x310] sm:$0xff]
        %v1691 = vld [vmem:[%s4 + $0x318] sm:$0xff]
        %v1692 = vld [vmem:[%s4 + $0x320] sm:$0xff]
        %v1693 = vld [vmem:[%s4 + $0x328] sm:$0xff]
        %v1694 = vld [vmem:[%s4 + $0x330] sm:$0xff]
        %v1695 = vld [vmem:[%s4 + $0x338] sm:$0xff]
        %v1696 = vld [vmem:[%s4 + $0x340] sm:$0xff]
        %v1697 = vld [vmem:[%s4 + $0x348] sm:$0xff]
        %v1698 = vld [vmem:[%s4 + $0x350] sm:$0xff]
        %v1699 = vld [vmem:[%s4 + $0x358] sm:$0xff]
        %v1700 = vld [vmem:[%s4 + $0x360] sm:$0xff]
        %v1701 = vld [vmem:[%s4 + $0x368] sm:$0xff]
        %v1702 = vld [vmem:[%s4 + $0x370] sm:$0xff]
        %v1703 = vld [vmem:[%s4 + $0x378] sm:$0xff]
        %v1704 = vld [vmem:[%s4 + $0x380] sm:$0xff]
        %v1705 = vld [vmem:[%s4 + $0x388] sm:$0xff]
        %v1706 = vld [vmem:[%s4 + $0x390] sm:$0xff]
        %v1707 = vld [vmem:[%s4 + $0x398] sm:$0xff]
        %v1708 = vld [vmem:[%s4 + $0x3a0] sm:$0xff]
        %v1709 = vld [vmem:[%s4 + $0x3a8] sm:$0xff]
        %v1710 = vld [vmem:[%s4 + $0x3b0] sm:$0xff]
        %v1711 = vld [vmem:[%s4 + $0x3b8] sm:$0xff]
        %v1712 = vld [vmem:[%s4 + $0x3c0] sm:$0xff]
        %v1713 = vld [vmem:[%s4 + $0x3c8] sm:$0xff]
        %v1714 = vld [vmem:[%s4 + $0x3d0] sm:$0xff]
        %v1715 = vld [vmem:[%s4 + $0x3d8] sm:$0xff]
        %v1716 = vld [vmem:[%s4 + $0x3e0] sm:$0xff]
        %v1717 = vld [vmem:[%s4 + $0x3e8] sm:$0xff]
        %v1718 = vld [vmem:[%s4 + $0x3f0] sm:$0xff]
        %v1719 = vld [vmem:[%s4 + $0x3f8] sm:$0xff]
        %v1721 = vsel %vm277, %v1592, 0
        %v1724 = vsel %vm277, %v1593, 0
        %v1727 = vsel %vm277, %v1594, 0
        %v1730 = vsel %vm277, %v1595, 0
        %v1733 = vsel %vm277, %v1596, 0
        %v1736 = vsel %vm277, %v1597, 0
        %v1739 = vsel %vm277, %v1598, 0
        %v1742 = vsel %vm277, %v1599, 0
        %v1745 = vsel %vm277, %v1600, 0
        %v1748 = vsel %vm277, %v1601, 0
        %v1751 = vsel %vm277, %v1602, 0
        %v1754 = vsel %vm277, %v1603, 0
        %v1757 = vsel %vm277, %v1604, 0
        %v1760 = vsel %vm277, %v1605, 0
        %v1763 = vsel %vm277, %v1606, 0
        %v1766 = vsel %vm277, %v1607, 0
        %v1769 = vsel %vm277, %v1608, 0
        %v1772 = vsel %vm277, %v1609, 0
        %v1775 = vsel %vm277, %v1610, 0
        %v1778 = vsel %vm277, %v1611, 0
        %v1781 = vsel %vm277, %v1612, 0
        %v1784 = vsel %vm277, %v1613, 0
        %v1787 = vsel %vm277, %v1614, 0
        %v1790 = vsel %vm277, %v1615, 0
        %v1793 = vsel %vm277, %v1616, 0
        %v1796 = vsel %vm277, %v1617, 0
        %v1799 = vsel %vm277, %v1618, 0
        %v1802 = vsel %vm277, %v1619, 0
        %v1805 = vsel %vm277, %v1620, 0
        %v1808 = vsel %vm277, %v1621, 0
        %v1811 = vsel %vm277, %v1622, 0
        %v1814 = vsel %vm277, %v1623, 0
        %v1817 = vsel %vm277, %v1624, 0
        %v1820 = vsel %vm277, %v1625, 0
        %v1823 = vsel %vm277, %v1626, 0
        %v1826 = vsel %vm277, %v1627, 0
        %v1829 = vsel %vm277, %v1628, 0
        %v1832 = vsel %vm277, %v1629, 0
        %v1835 = vsel %vm277, %v1630, 0
        %v1838 = vsel %vm277, %v1631, 0
        %v1841 = vsel %vm277, %v1632, 0
        %v1844 = vsel %vm277, %v1633, 0
        %v1847 = vsel %vm277, %v1634, 0
        %v1850 = vsel %vm277, %v1635, 0
        %v1853 = vsel %vm277, %v1636, 0
        %v1856 = vsel %vm277, %v1637, 0
        %v1859 = vsel %vm277, %v1638, 0
        %v1862 = vsel %vm277, %v1639, 0
        %v1865 = vsel %vm277, %v1640, 0
        %v1868 = vsel %vm277, %v1641, 0
        %v1871 = vsel %vm277, %v1642, 0
        %v1874 = vsel %vm277, %v1643, 0
        %v1877 = vsel %vm277, %v1644, 0
        %v1880 = vsel %vm277, %v1645, 0
        %v1883 = vsel %vm277, %v1646, 0
        %v1886 = vsel %vm277, %v1647, 0
        %v1889 = vsel %vm277, %v1648, 0
        %v1892 = vsel %vm277, %v1649, 0
        %v1895 = vsel %vm277, %v1650, 0
        %v1898 = vsel %vm277, %v1651, 0
        %v1901 = vsel %vm277, %v1652, 0
        %v1904 = vsel %vm277, %v1653, 0
        %v1907 = vsel %vm277, %v1654, 0
        %v1910 = vsel %vm277, %v1655, 0
        %v1913 = vsel %vm277, %v1656, 0
        %v1916 = vsel %vm277, %v1657, 0
        %v1919 = vsel %vm277, %v1658, 0
        %v1922 = vsel %vm277, %v1659, 0
        %v1925 = vsel %vm277, %v1660, 0
        %v1928 = vsel %vm277, %v1661, 0
        %v1931 = vsel %vm277, %v1662, 0
        %v1934 = vsel %vm277, %v1663, 0
        %v1937 = vsel %vm277, %v1664, 0
        %v1940 = vsel %vm277, %v1665, 0
        %v1943 = vsel %vm277, %v1666, 0
        %v1946 = vsel %vm277, %v1667, 0
        %v1949 = vsel %vm277, %v1668, 0
        %v1952 = vsel %vm277, %v1669, 0
        %v1955 = vsel %vm277, %v1670, 0
        %v1958 = vsel %vm277, %v1671, 0
        %v1961 = vsel %vm277, %v1672, 0
        %v1964 = vsel %vm277, %v1673, 0
        %v1967 = vsel %vm277, %v1674, 0
        %v1970 = vsel %vm277, %v1675, 0
        %v1973 = vsel %vm277, %v1676, 0
        %v1976 = vsel %vm277, %v1677, 0
        %v1979 = vsel %vm277, %v1678, 0
        %v1982 = vsel %vm277, %v1679, 0
        %v1985 = vsel %vm277, %v1680, 0
        %v1988 = vsel %vm277, %v1681, 0
        %v1991 = vsel %vm277, %v1682, 0
        %v1994 = vsel %vm277, %v1683, 0
        %v1997 = vsel %vm277, %v1684, 0
        %v2000 = vsel %vm277, %v1685, 0
        %v2003 = vsel %vm277, %v1686, 0
        %v2006 = vsel %vm277, %v1687, 0
        %v2009 = vsel %vm277, %v1688, 0
        %v2012 = vsel %vm277, %v1689, 0
        %v2015 = vsel %vm277, %v1690, 0
        %v2018 = vsel %vm277, %v1691, 0
        %v2021 = vsel %vm277, %v1692, 0
        %v2024 = vsel %vm277, %v1693, 0
        %v2027 = vsel %vm277, %v1694, 0
        %v2030 = vsel %vm277, %v1695, 0
        %v2033 = vsel %vm277, %v1696, 0
        %v2036 = vsel %vm277, %v1697, 0
        %v2039 = vsel %vm277, %v1698, 0
        %v2042 = vsel %vm277, %v1699, 0
        %v2045 = vsel %vm277, %v1700, 0
        %v2048 = vsel %vm277, %v1701, 0
        %v2051 = vsel %vm277, %v1702, 0
        %v2054 = vsel %vm277, %v1703, 0
        %v2057 = vsel %vm277, %v1704, 0
        %v2060 = vsel %vm277, %v1705, 0
        %v2063 = vsel %vm277, %v1706, 0
        %v2066 = vsel %vm277, %v1707, 0
        %v2069 = vsel %vm277, %v1708, 0
        %v2072 = vsel %vm277, %v1709, 0
        %v2075 = vsel %vm277, %v1710, 0
        %v2078 = vsel %vm277, %v1711, 0
        %v2081 = vsel %vm277, %v1712, 0
        %v2084 = vsel %vm277, %v1713, 0
        %v2087 = vsel %vm277, %v1714, 0
        %v2090 = vsel %vm277, %v1715, 0
        %v2093 = vsel %vm277, %v1716, 0
        %v2096 = vsel %vm277, %v1717, 0
        %v2099 = vsel %vm277, %v1718, 0
        %v2102 = vsel %vm277, %v1719, 0
        %2104 = vmatprep.subr.mxu0 0.0
        %2105 = vmatpush1.msra.mxu0 0.0
        %2106 = vmatprep.subr.mxu0 0.0
        %2107 = vmatpush1.msra.mxu0 0.0
        %2108 = vmatprep.subr.mxu0 0.0
        %2109 = vmatpush1.msra.mxu0 0.0
        %2110 = vmatprep.subr.mxu0 0.0
        %2111 = vmatpush1.msra.mxu0 0.0
        %2112 = vmatprep.subr.mxu0 0.0
        %2113 = vmatpush1.msra.mxu0 0.0
        %2114 = vmatprep.subr.mxu0 0.0
        %2115 = vmatpush1.msra.mxu0 0.0
        %2116 = vmatprep.subr.mxu0 0.0
        %2117 = vmatpush1.msra.mxu0 0.0
        %2118 = vmatprep.subr.mxu0 0.0
        %2119 = vmatpush1.msra.mxu0 0.0
        %2120 = vmatprep.subr.mxu0 0.0
        %2121 = vmatpush1.msra.mxu0 0.0
        %2122 = vmatprep.subr.mxu0 0.0
        %2123 = vmatpush1.msra.mxu0 0.0
        %2124 = vmatprep.subr.mxu0 0.0
        %2125 = vmatpush1.msra.mxu0 0.0
        %2126 = vmatprep.subr.mxu0 0.0
        %2127 = vmatpush1.msra.mxu0 0.0
        %2128 = vmatprep.subr.mxu0 0.0
        %2129 = vmatpush1.msra.mxu0 %v372
        %2130 = vmatprep.subr.mxu0 0.0
        %2131 = vmatpush1.msra.mxu0 %v367
        %2132 = vmatprep.subr.mxu0 0.0
        %2133 = vmatpush1.msra.mxu0 %v362
        %2134 = vmatprep.subr.mxu0 0.0
        %2135 = vmatpush1.msra.mxu0 %v357
        %2136 = vmatprep.subr.mxu0 0.0
        %2137 = vmatpush2.msra.mxu0 0.0
        %2138 = vmatprep.subr.mxu0 0.0
        %2139 = vmatpush2.msra.mxu0 0.0
        %2140 = vmatprep.subr.mxu0 0.0
        %2141 = vmatpush2.msra.mxu0 0.0
        %2142 = vmatprep.subr.mxu0 0.0
        %2143 = vmatpush2.msra.mxu0 0.0
        %2144 = vmatprep.subr.mxu0 0.0
        %2145 = vmatpush2.msra.mxu0 0.0
        %2146 = vmatprep.subr.mxu0 0.0
        %2147 = vmatpush2.msra.mxu0 0.0
        %2148 = vmatprep.subr.mxu0 0.0
        %2149 = vmatpush2.msra.mxu0 0.0
        %2150 = vmatprep.subr.mxu0 0.0
        %2151 = vmatpush2.msra.mxu0 0.0
        %2152 = vmatprep.subr.mxu0 0.0
        %2153 = vmatpush2.msra.mxu0 0.0
        %2154 = vmatprep.subr.mxu0 0.0
        %2155 = vmatpush2.msra.mxu0 0.0
        %2156 = vmatprep.subr.mxu0 0.0
        %2157 = vmatpush2.msra.mxu0 0.0
        %2158 = vmatprep.subr.mxu0 0.0
        %2159 = vmatpush2.msra.mxu0 0.0
        %2160 = vmatprep.subr.mxu0 0.0
        %2161 = vmatpush2.msra.mxu0 0.0
        %2162 = vmatprep.subr.mxu0 0.0
        %2163 = vmatpush2.msra.mxu0 0.0
        %2164 = vmatprep.subr.mxu0 0.0
        %2165 = vmatpush2.msra.mxu0 0.0
        %2166 = vmatprep.subr.mxu0 0.0
        %2167 = vmatpush2.msra.mxu0 0.0
        %2168 = vmatprep.mubr.f32.mxu0 0.0
        %2169 = vmatmul.mubr.f32.gmra.mxu0 %v1721
        %v2170 = vpop.f32.mrf.mxu0
        %v2171 = vadd.f32 0.0, %v2170
        %v2172 = vpop.f32.mrf.mxu0
        %2173 = vmatprep.mubr.f32.mxu0 0.0
        %2174 = vmatmul.mubr.f32.gmra.mxu0 %v1724
        %v2175 = vpop.f32.mrf.mxu0
        %v2176 = vadd.f32 0.0, %v2175
        %v2177 = vpop.f32.mrf.mxu0
        %2178 = vmatprep.mubr.f32.mxu0 0.0
        %2179 = vmatmul.mubr.f32.gmra.mxu0 %v1727
        %v2180 = vpop.f32.mrf.mxu0
        %v2181 = vadd.f32 0.0, %v2180
        %v2182 = vpop.f32.mrf.mxu0
        %2183 = vmatprep.mubr.f32.mxu0 0.0
        %2184 = vmatmul.mubr.f32.gmra.mxu0 %v1730
        %v2185 = vpop.f32.mrf.mxu0
        %v2186 = vadd.f32 0.0, %v2185
        %v2187 = vpop.f32.mrf.mxu0
        %2188 = vmatprep.mubr.f32.mxu0 0.0
        %2189 = vmatmul.mubr.f32.gmra.mxu0 %v1733
        %v2190 = vpop.f32.mrf.mxu0
        %v2191 = vadd.f32 0.0, %v2190
        %v2192 = vpop.f32.mrf.mxu0
        %2193 = vmatprep.mubr.f32.mxu0 0.0
        %2194 = vmatmul.mubr.f32.gmra.mxu0 %v1736
        %v2195 = vpop.f32.mrf.mxu0
        %v2196 = vadd.f32 0.0, %v2195
        %v2197 = vpop.f32.mrf.mxu0
        %2198 = vmatprep.mubr.f32.mxu0 0.0
        %2199 = vmatmul.mubr.f32.gmra.mxu0 %v1739
        %v2200 = vpop.f32.mrf.mxu0
        %v2201 = vadd.f32 0.0, %v2200
        %v2202 = vpop.f32.mrf.mxu0
        %2203 = vmatprep.mubr.f32.mxu0 0.0
        %2204 = vmatmul.mubr.f32.gmra.mxu0 %v1742
        %v2205 = vpop.f32.mrf.mxu0
        %v2206 = vadd.f32 0.0, %v2205
        %v2207 = vpop.f32.mrf.mxu0
        %2208 = vmatprep.mubr.f32.mxu0 0.0
        %2209 = vmatmul.mubr.f32.gmra.mxu0 %v1745
        %v2210 = vpop.f32.mrf.mxu0
        %v2211 = vadd.f32 0.0, %v2210
        %v2212 = vpop.f32.mrf.mxu0
        %2213 = vmatprep.mubr.f32.mxu0 0.0
        %2214 = vmatmul.mubr.f32.gmra.mxu0 %v1748
        %v2215 = vpop.f32.mrf.mxu0
        %v2216 = vadd.f32 0.0, %v2215
        %v2217 = vpop.f32.mrf.mxu0
        %2218 = vmatprep.mubr.f32.mxu0 0.0
        %2219 = vmatmul.mubr.f32.gmra.mxu0 %v1751
        %v2220 = vpop.f32.mrf.mxu0
        %v2221 = vadd.f32 0.0, %v2220
        %v2222 = vpop.f32.mrf.mxu0
        %2223 = vmatprep.mubr.f32.mxu0 0.0
        %2224 = vmatmul.mubr.f32.gmra.mxu0 %v1754
        %v2225 = vpop.f32.mrf.mxu0
        %v2226 = vadd.f32 0.0, %v2225
        %v2227 = vpop.f32.mrf.mxu0
        %2228 = vmatprep.mubr.f32.mxu0 0.0
        %2229 = vmatmul.mubr.f32.gmra.mxu0 %v1757
        %v2230 = vpop.f32.mrf.mxu0
        %v2231 = vadd.f32 0.0, %v2230
        %v2232 = vpop.f32.mrf.mxu0
        %2233 = vmatprep.mubr.f32.mxu0 0.0
        %2234 = vmatmul.mubr.f32.gmra.mxu0 %v1760
        %v2235 = vpop.f32.mrf.mxu0
        %v2236 = vadd.f32 0.0, %v2235
        %v2237 = vpop.f32.mrf.mxu0
        %2238 = vmatprep.mubr.f32.mxu0 0.0
        %2239 = vmatmul.mubr.f32.gmra.mxu0 %v1763
        %v2240 = vpop.f32.mrf.mxu0
        %v2241 = vadd.f32 0.0, %v2240
        %v2242 = vpop.f32.mrf.mxu0
        %2243 = vmatprep.mubr.f32.mxu0 0.0
        %2244 = vmatmul.mubr.f32.gmra.mxu0 %v1766
        %v2245 = vpop.f32.mrf.mxu0
        %v2246 = vadd.f32 0.0, %v2245
        %v2247 = vpop.f32.mrf.mxu0
        %2248 = vmatprep.mubr.f32.mxu0 0.0
        %2249 = vmatmul.mubr.f32.gmra.mxu0 %v1769
        %v2250 = vpop.f32.mrf.mxu0
        %v2251 = vadd.f32 0.0, %v2250
        %v2252 = vpop.f32.mrf.mxu0
        %2253 = vmatprep.mubr.f32.mxu0 0.0
        %2254 = vmatmul.mubr.f32.gmra.mxu0 %v1772
        %v2255 = vpop.f32.mrf.mxu0
        %v2256 = vadd.f32 0.0, %v2255
        %v2257 = vpop.f32.mrf.mxu0
        %2258 = vmatprep.mubr.f32.mxu0 0.0
        %2259 = vmatmul.mubr.f32.gmra.mxu0 %v1775
        %v2260 = vpop.f32.mrf.mxu0
        %v2261 = vadd.f32 0.0, %v2260
        %v2262 = vpop.f32.mrf.mxu0
        %2263 = vmatprep.mubr.f32.mxu0 0.0
        %2264 = vmatmul.mubr.f32.gmra.mxu0 %v1778
        %v2265 = vpop.f32.mrf.mxu0
        %v2266 = vadd.f32 0.0, %v2265
        %v2267 = vpop.f32.mrf.mxu0
        %2268 = vmatprep.mubr.f32.mxu0 0.0
        %2269 = vmatmul.mubr.f32.gmra.mxu0 %v1781
        %v2270 = vpop.f32.mrf.mxu0
        %v2271 = vadd.f32 0.0, %v2270
        %v2272 = vpop.f32.mrf.mxu0
        %2273 = vmatprep.mubr.f32.mxu0 0.0
        %2274 = vmatmul.mubr.f32.gmra.mxu0 %v1784
        %v2275 = vpop.f32.mrf.mxu0
        %v2276 = vadd.f32 0.0, %v2275
        %v2277 = vpop.f32.mrf.mxu0
        %2278 = vmatprep.mubr.f32.mxu0 0.0
        %2279 = vmatmul.mubr.f32.gmra.mxu0 %v1787
        %v2280 = vpop.f32.mrf.mxu0
        %v2281 = vadd.f32 0.0, %v2280
        %v2282 = vpop.f32.mrf.mxu0
        %2283 = vmatprep.mubr.f32.mxu0 0.0
        %2284 = vmatmul.mubr.f32.gmra.mxu0 %v1790
        %v2285 = vpop.f32.mrf.mxu0
        %v2286 = vadd.f32 0.0, %v2285
        %v2287 = vpop.f32.mrf.mxu0
        %2288 = vmatprep.mubr.f32.mxu0 0.0
        %2289 = vmatmul.mubr.f32.gmra.mxu0 %v1793
        %v2290 = vpop.f32.mrf.mxu0
        %v2291 = vadd.f32 0.0, %v2290
        %v2292 = vpop.f32.mrf.mxu0
        %2293 = vmatprep.mubr.f32.mxu0 0.0
        %2294 = vmatmul.mubr.f32.gmra.mxu0 %v1796
        %v2295 = vpop.f32.mrf.mxu0
        %v2296 = vadd.f32 0.0, %v2295
        %v2297 = vpop.f32.mrf.mxu0
        %2298 = vmatprep.mubr.f32.mxu0 0.0
        %2299 = vmatmul.mubr.f32.gmra.mxu0 %v1799
        %v2300 = vpop.f32.mrf.mxu0
        %v2301 = vadd.f32 0.0, %v2300
        %v2302 = vpop.f32.mrf.mxu0
        %2303 = vmatprep.mubr.f32.mxu0 0.0
        %2304 = vmatmul.mubr.f32.gmra.mxu0 %v1802
        %v2305 = vpop.f32.mrf.mxu0
        %v2306 = vadd.f32 0.0, %v2305
        %v2307 = vpop.f32.mrf.mxu0
        %2308 = vmatprep.mubr.f32.mxu0 0.0
        %2309 = vmatmul.mubr.f32.gmra.mxu0 %v1805
        %v2310 = vpop.f32.mrf.mxu0
        %v2311 = vadd.f32 0.0, %v2310
        %v2312 = vpop.f32.mrf.mxu0
        %2313 = vmatprep.mubr.f32.mxu0 0.0
        %2314 = vmatmul.mubr.f32.gmra.mxu0 %v1808
        %v2315 = vpop.f32.mrf.mxu0
        %v2316 = vadd.f32 0.0, %v2315
        %v2317 = vpop.f32.mrf.mxu0
        %2318 = vmatprep.mubr.f32.mxu0 0.0
        %2319 = vmatmul.mubr.f32.gmra.mxu0 %v1811
        %v2320 = vpop.f32.mrf.mxu0
        %v2321 = vadd.f32 0.0, %v2320
        %v2322 = vpop.f32.mrf.mxu0
        %2323 = vmatprep.mubr.f32.mxu0 0.0
        %2324 = vmatmul.mubr.f32.gmra.mxu0 %v1814
        %v2325 = vpop.f32.mrf.mxu0
        %v2326 = vadd.f32 0.0, %v2325
        %v2327 = vpop.f32.mrf.mxu0
        %2328 = vmatprep.mubr.f32.mxu0 0.0
        %2329 = vmatmul.mubr.f32.gmra.mxu0 %v1817
        %v2330 = vpop.f32.mrf.mxu0
        %v2331 = vadd.f32 0.0, %v2330
        %v2332 = vpop.f32.mrf.mxu0
        %2333 = vmatprep.mubr.f32.mxu0 0.0
        %2334 = vmatmul.mubr.f32.gmra.mxu0 %v1820
        %v2335 = vpop.f32.mrf.mxu0
        %v2336 = vadd.f32 0.0, %v2335
        %v2337 = vpop.f32.mrf.mxu0
        %2338 = vmatprep.mubr.f32.mxu0 0.0
        %2339 = vmatmul.mubr.f32.gmra.mxu0 %v1823
        %v2340 = vpop.f32.mrf.mxu0
        %v2341 = vadd.f32 0.0, %v2340
        %v2342 = vpop.f32.mrf.mxu0
        %2343 = vmatprep.mubr.f32.mxu0 0.0
        %2344 = vmatmul.mubr.f32.gmra.mxu0 %v1826
        %v2345 = vpop.f32.mrf.mxu0
        %v2346 = vadd.f32 0.0, %v2345
        %v2347 = vpop.f32.mrf.mxu0
        %2348 = vmatprep.mubr.f32.mxu0 0.0
        %2349 = vmatmul.mubr.f32.gmra.mxu0 %v1829
        %v2350 = vpop.f32.mrf.mxu0
        %v2351 = vadd.f32 0.0, %v2350
        %v2352 = vpop.f32.mrf.mxu0
        %2353 = vmatprep.mubr.f32.mxu0 0.0
        %2354 = vmatmul.mubr.f32.gmra.mxu0 %v1832
        %v2355 = vpop.f32.mrf.mxu0
        %v2356 = vadd.f32 0.0, %v2355
        %v2357 = vpop.f32.mrf.mxu0
        %2358 = vmatprep.mubr.f32.mxu0 0.0
        %2359 = vmatmul.mubr.f32.gmra.mxu0 %v1835
        %v2360 = vpop.f32.mrf.mxu0
        %v2361 = vadd.f32 0.0, %v2360
        %v2362 = vpop.f32.mrf.mxu0
        %2363 = vmatprep.mubr.f32.mxu0 0.0
        %2364 = vmatmul.mubr.f32.gmra.mxu0 %v1838
        %v2365 = vpop.f32.mrf.mxu0
        %v2366 = vadd.f32 0.0, %v2365
        %v2367 = vpop.f32.mrf.mxu0
        %2368 = vmatprep.mubr.f32.mxu0 0.0
        %2369 = vmatmul.mubr.f32.gmra.mxu0 %v1841
        %v2370 = vpop.f32.mrf.mxu0
        %v2371 = vadd.f32 0.0, %v2370
        %v2372 = vpop.f32.mrf.mxu0
        %2373 = vmatprep.mubr.f32.mxu0 0.0
        %2374 = vmatmul.mubr.f32.gmra.mxu0 %v1844
        %v2375 = vpop.f32.mrf.mxu0
        %v2376 = vadd.f32 0.0, %v2375
        %v2377 = vpop.f32.mrf.mxu0
        %2378 = vmatprep.mubr.f32.mxu0 0.0
        %2379 = vmatmul.mubr.f32.gmra.mxu0 %v1847
        %v2380 = vpop.f32.mrf.mxu0
        %v2381 = vadd.f32 0.0, %v2380
        %v2382 = vpop.f32.mrf.mxu0
        %2383 = vmatprep.mubr.f32.mxu0 0.0
        %2384 = vmatmul.mubr.f32.gmra.mxu0 %v1850
        %v2385 = vpop.f32.mrf.mxu0
        %v2386 = vadd.f32 0.0, %v2385
        %v2387 = vpop.f32.mrf.mxu0
        %2388 = vmatprep.mubr.f32.mxu0 0.0
        %2389 = vmatmul.mubr.f32.gmra.mxu0 %v1853
        %v2390 = vpop.f32.mrf.mxu0
        %v2391 = vadd.f32 0.0, %v2390
        %v2392 = vpop.f32.mrf.mxu0
        %2393 = vmatprep.mubr.f32.mxu0 0.0
        %2394 = vmatmul.mubr.f32.gmra.mxu0 %v1856
        %v2395 = vpop.f32.mrf.mxu0
        %v2396 = vadd.f32 0.0, %v2395
        %v2397 = vpop.f32.mrf.mxu0
        %2398 = vmatprep.mubr.f32.mxu0 0.0
        %2399 = vmatmul.mubr.f32.gmra.mxu0 %v1859
        %v2400 = vpop.f32.mrf.mxu0
        %v2401 = vadd.f32 0.0, %v2400
        %v2402 = vpop.f32.mrf.mxu0
        %2403 = vmatprep.mubr.f32.mxu0 0.0
        %2404 = vmatmul.mubr.f32.gmra.mxu0 %v1862
        %v2405 = vpop.f32.mrf.mxu0
        %v2406 = vadd.f32 0.0, %v2405
        %v2407 = vpop.f32.mrf.mxu0
        %2408 = vmatprep.mubr.f32.mxu0 0.0
        %2409 = vmatmul.mubr.f32.gmra.mxu0 %v1865
        %v2410 = vpop.f32.mrf.mxu0
        %v2411 = vadd.f32 0.0, %v2410
        %v2412 = vpop.f32.mrf.mxu0
        %2413 = vmatprep.mubr.f32.mxu0 0.0
        %2414 = vmatmul.mubr.f32.gmra.mxu0 %v1868
        %v2415 = vpop.f32.mrf.mxu0
        %v2416 = vadd.f32 0.0, %v2415
        %v2417 = vpop.f32.mrf.mxu0
        %2418 = vmatprep.mubr.f32.mxu0 0.0
        %2419 = vmatmul.mubr.f32.gmra.mxu0 %v1871
        %v2420 = vpop.f32.mrf.mxu0
        %v2421 = vadd.f32 0.0, %v2420
        %v2422 = vpop.f32.mrf.mxu0
        %2423 = vmatprep.mubr.f32.mxu0 0.0
        %2424 = vmatmul.mubr.f32.gmra.mxu0 %v1874
        %v2425 = vpop.f32.mrf.mxu0
        %v2426 = vadd.f32 0.0, %v2425
        %v2427 = vpop.f32.mrf.mxu0
        %2428 = vmatprep.mubr.f32.mxu0 0.0
        %2429 = vmatmul.mubr.f32.gmra.mxu0 %v1877
        %v2430 = vpop.f32.mrf.mxu0
        %v2431 = vadd.f32 0.0, %v2430
        %v2432 = vpop.f32.mrf.mxu0
        %2433 = vmatprep.mubr.f32.mxu0 0.0
        %2434 = vmatmul.mubr.f32.gmra.mxu0 %v1880
        %v2435 = vpop.f32.mrf.mxu0
        %v2436 = vadd.f32 0.0, %v2435
        %v2437 = vpop.f32.mrf.mxu0
        %2438 = vmatprep.mubr.f32.mxu0 0.0
        %2439 = vmatmul.mubr.f32.gmra.mxu0 %v1883
        %v2440 = vpop.f32.mrf.mxu0
        %v2441 = vadd.f32 0.0, %v2440
        %v2442 = vpop.f32.mrf.mxu0
        %2443 = vmatprep.mubr.f32.mxu0 0.0
        %2444 = vmatmul.mubr.f32.gmra.mxu0 %v1886
        %v2445 = vpop.f32.mrf.mxu0
        %v2446 = vadd.f32 0.0, %v2445
        %v2447 = vpop.f32.mrf.mxu0
        %2448 = vmatprep.mubr.f32.mxu0 0.0
        %2449 = vmatmul.mubr.f32.gmra.mxu0 %v1889
        %v2450 = vpop.f32.mrf.mxu0
        %v2451 = vadd.f32 0.0, %v2450
        %v2452 = vpop.f32.mrf.mxu0
        %2453 = vmatprep.mubr.f32.mxu0 0.0
        %2454 = vmatmul.mubr.f32.gmra.mxu0 %v1892
        %v2455 = vpop.f32.mrf.mxu0
        %v2456 = vadd.f32 0.0, %v2455
        %v2457 = vpop.f32.mrf.mxu0
        %2458 = vmatprep.mubr.f32.mxu0 0.0
        %2459 = vmatmul.mubr.f32.gmra.mxu0 %v1895
        %v2460 = vpop.f32.mrf.mxu0
        %v2461 = vadd.f32 0.0, %v2460
        %v2462 = vpop.f32.mrf.mxu0
        %2463 = vmatprep.mubr.f32.mxu0 0.0
        %2464 = vmatmul.mubr.f32.gmra.mxu0 %v1898
        %v2465 = vpop.f32.mrf.mxu0
        %v2466 = vadd.f32 0.0, %v2465
        %v2467 = vpop.f32.mrf.mxu0
        %2468 = vmatprep.mubr.f32.mxu0 0.0
        %2469 = vmatmul.mubr.f32.gmra.mxu0 %v1901
        %v2470 = vpop.f32.mrf.mxu0
        %v2471 = vadd.f32 0.0, %v2470
        %v2472 = vpop.f32.mrf.mxu0
        %2473 = vmatprep.mubr.f32.mxu0 0.0
        %2474 = vmatmul.mubr.f32.gmra.mxu0 %v1904
        %v2475 = vpop.f32.mrf.mxu0
        %v2476 = vadd.f32 0.0, %v2475
        %v2477 = vpop.f32.mrf.mxu0
        %2478 = vmatprep.mubr.f32.mxu0 0.0
        %2479 = vmatmul.mubr.f32.gmra.mxu0 %v1907
        %v2480 = vpop.f32.mrf.mxu0
        %v2481 = vadd.f32 0.0, %v2480
        %v2482 = vpop.f32.mrf.mxu0
        %2483 = vmatprep.mubr.f32.mxu0 0.0
        %2484 = vmatmul.mubr.f32.gmra.mxu0 %v1910
        %v2485 = vpop.f32.mrf.mxu0
        %v2486 = vadd.f32 0.0, %v2485
        %v2487 = vpop.f32.mrf.mxu0
        %2488 = vmatprep.mubr.f32.mxu0 0.0
        %2489 = vmatmul.mubr.f32.gmra.mxu0 %v1913
        %v2490 = vpop.f32.mrf.mxu0
        %v2491 = vadd.f32 0.0, %v2490
        %v2492 = vpop.f32.mrf.mxu0
        %2493 = vmatprep.mubr.f32.mxu0 0.0
        %2494 = vmatmul.mubr.f32.gmra.mxu0 %v1916
        %v2495 = vpop.f32.mrf.mxu0
        %v2496 = vadd.f32 0.0, %v2495
        %v2497 = vpop.f32.mrf.mxu0
        %2498 = vmatprep.mubr.f32.mxu0 0.0
        %2499 = vmatmul.mubr.f32.gmra.mxu0 %v1919
        %v2500 = vpop.f32.mrf.mxu0
        %v2501 = vadd.f32 0.0, %v2500
        %v2502 = vpop.f32.mrf.mxu0
        %2503 = vmatprep.mubr.f32.mxu0 0.0
        %2504 = vmatmul.mubr.f32.gmra.mxu0 %v1922
        %v2505 = vpop.f32.mrf.mxu0
        %v2506 = vadd.f32 0.0, %v2505
        %v2507 = vpop.f32.mrf.mxu0
        %2508 = vmatprep.mubr.f32.mxu0 0.0
        %2509 = vmatmul.mubr.f32.gmra.mxu0 %v1925
        %v2510 = vpop.f32.mrf.mxu0
        %v2511 = vadd.f32 0.0, %v2510
        %v2512 = vpop.f32.mrf.mxu0
        %2513 = vmatprep.mubr.f32.mxu0 0.0
        %2514 = vmatmul.mubr.f32.gmra.mxu0 %v1928
        %v2515 = vpop.f32.mrf.mxu0
        %v2516 = vadd.f32 0.0, %v2515
        %v2517 = vpop.f32.mrf.mxu0
        %2518 = vmatprep.mubr.f32.mxu0 0.0
        %2519 = vmatmul.mubr.f32.gmra.mxu0 %v1931
        %v2520 = vpop.f32.mrf.mxu0
        %v2521 = vadd.f32 0.0, %v2520
        %v2522 = vpop.f32.mrf.mxu0
        %2523 = vmatprep.mubr.f32.mxu0 0.0
        %2524 = vmatmul.mubr.f32.gmra.mxu0 %v1934
        %v2525 = vpop.f32.mrf.mxu0
        %v2526 = vadd.f32 0.0, %v2525
        %v2527 = vpop.f32.mrf.mxu0
        %2528 = vmatprep.mubr.f32.mxu0 0.0
        %2529 = vmatmul.mubr.f32.gmra.mxu0 %v1937
        %v2530 = vpop.f32.mrf.mxu0
        %v2531 = vadd.f32 0.0, %v2530
        %v2532 = vpop.f32.mrf.mxu0
        %2533 = vmatprep.mubr.f32.mxu0 0.0
        %2534 = vmatmul.mubr.f32.gmra.mxu0 %v1940
        %v2535 = vpop.f32.mrf.mxu0
        %v2536 = vadd.f32 0.0, %v2535
        %v2537 = vpop.f32.mrf.mxu0
        %2538 = vmatprep.mubr.f32.mxu0 0.0
        %2539 = vmatmul.mubr.f32.gmra.mxu0 %v1943
        %v2540 = vpop.f32.mrf.mxu0
        %v2541 = vadd.f32 0.0, %v2540
        %v2542 = vpop.f32.mrf.mxu0
        %2543 = vmatprep.mubr.f32.mxu0 0.0
        %2544 = vmatmul.mubr.f32.gmra.mxu0 %v1946
        %v2545 = vpop.f32.mrf.mxu0
        %v2546 = vadd.f32 0.0, %v2545
        %v2547 = vpop.f32.mrf.mxu0
        %2548 = vmatprep.mubr.f32.mxu0 0.0
        %2549 = vmatmul.mubr.f32.gmra.mxu0 %v1949
        %v2550 = vpop.f32.mrf.mxu0
        %v2551 = vadd.f32 0.0, %v2550
        %v2552 = vpop.f32.mrf.mxu0
        %2553 = vmatprep.mubr.f32.mxu0 0.0
        %2554 = vmatmul.mubr.f32.gmra.mxu0 %v1952
        %v2555 = vpop.f32.mrf.mxu0
        %v2556 = vadd.f32 0.0, %v2555
        %v2557 = vpop.f32.mrf.mxu0
        %2558 = vmatprep.mubr.f32.mxu0 0.0
        %2559 = vmatmul.mubr.f32.gmra.mxu0 %v1955
        %v2560 = vpop.f32.mrf.mxu0
        %v2561 = vadd.f32 0.0, %v2560
        %v2562 = vpop.f32.mrf.mxu0
        %2563 = vmatprep.mubr.f32.mxu0 0.0
        %2564 = vmatmul.mubr.f32.gmra.mxu0 %v1958
        %v2565 = vpop.f32.mrf.mxu0
        %v2566 = vadd.f32 0.0, %v2565
        %v2567 = vpop.f32.mrf.mxu0
        %2568 = vmatprep.mubr.f32.mxu0 0.0
        %2569 = vmatmul.mubr.f32.gmra.mxu0 %v1961
        %v2570 = vpop.f32.mrf.mxu0
        %v2571 = vadd.f32 0.0, %v2570
        %v2572 = vpop.f32.mrf.mxu0
        %2573 = vmatprep.mubr.f32.mxu0 0.0
        %2574 = vmatmul.mubr.f32.gmra.mxu0 %v1964
        %v2575 = vpop.f32.mrf.mxu0
        %v2576 = vadd.f32 0.0, %v2575
        %v2577 = vpop.f32.mrf.mxu0
        %2578 = vmatprep.mubr.f32.mxu0 0.0
        %2579 = vmatmul.mubr.f32.gmra.mxu0 %v1967
        %v2580 = vpop.f32.mrf.mxu0
        %v2581 = vadd.f32 0.0, %v2580
        %v2582 = vpop.f32.mrf.mxu0
        %2583 = vmatprep.mubr.f32.mxu0 0.0
        %2584 = vmatmul.mubr.f32.gmra.mxu0 %v1970
        %v2585 = vpop.f32.mrf.mxu0
        %v2586 = vadd.f32 0.0, %v2585
        %v2587 = vpop.f32.mrf.mxu0
        %2588 = vmatprep.mubr.f32.mxu0 0.0
        %2589 = vmatmul.mubr.f32.gmra.mxu0 %v1973
        %v2590 = vpop.f32.mrf.mxu0
        %v2591 = vadd.f32 0.0, %v2590
        %v2592 = vpop.f32.mrf.mxu0
        %2593 = vmatprep.mubr.f32.mxu0 0.0
        %2594 = vmatmul.mubr.f32.gmra.mxu0 %v1976
        %v2595 = vpop.f32.mrf.mxu0
        %v2596 = vadd.f32 0.0, %v2595
        %v2597 = vpop.f32.mrf.mxu0
        %2598 = vmatprep.mubr.f32.mxu0 0.0
        %2599 = vmatmul.mubr.f32.gmra.mxu0 %v1979
        %v2600 = vpop.f32.mrf.mxu0
        %v2601 = vadd.f32 0.0, %v2600
        %v2602 = vpop.f32.mrf.mxu0
        %2603 = vmatprep.mubr.f32.mxu0 0.0
        %2604 = vmatmul.mubr.f32.gmra.mxu0 %v1982
        %v2605 = vpop.f32.mrf.mxu0
        %v2606 = vadd.f32 0.0, %v2605
        %v2607 = vpop.f32.mrf.mxu0
        %2608 = vmatprep.mubr.f32.mxu0 0.0
        %2609 = vmatmul.mubr.f32.gmra.mxu0 %v1985
        %v2610 = vpop.f32.mrf.mxu0
        %v2611 = vadd.f32 0.0, %v2610
        %v2612 = vpop.f32.mrf.mxu0
        %2613 = vmatprep.mubr.f32.mxu0 0.0
        %2614 = vmatmul.mubr.f32.gmra.mxu0 %v1988
        %v2615 = vpop.f32.mrf.mxu0
        %v2616 = vadd.f32 0.0, %v2615
        %v2617 = vpop.f32.mrf.mxu0
        %2618 = vmatprep.mubr.f32.mxu0 0.0
        %2619 = vmatmul.mubr.f32.gmra.mxu0 %v1991
        %v2620 = vpop.f32.mrf.mxu0
        %v2621 = vadd.f32 0.0, %v2620
        %v2622 = vpop.f32.mrf.mxu0
        %2623 = vmatprep.mubr.f32.mxu0 0.0
        %2624 = vmatmul.mubr.f32.gmra.mxu0 %v1994
        %v2625 = vpop.f32.mrf.mxu0
        %v2626 = vadd.f32 0.0, %v2625
        %v2627 = vpop.f32.mrf.mxu0
        %2628 = vmatprep.mubr.f32.mxu0 0.0
        %2629 = vmatmul.mubr.f32.gmra.mxu0 %v1997
        %v2630 = vpop.f32.mrf.mxu0
        %v2631 = vadd.f32 0.0, %v2630
        %v2632 = vpop.f32.mrf.mxu0
        %2633 = vmatprep.mubr.f32.mxu0 0.0
        %2634 = vmatmul.mubr.f32.gmra.mxu0 %v2000
        %v2635 = vpop.f32.mrf.mxu0
        %v2636 = vadd.f32 0.0, %v2635
        %v2637 = vpop.f32.mrf.mxu0
        %2638 = vmatprep.mubr.f32.mxu0 0.0
        %2639 = vmatmul.mubr.f32.gmra.mxu0 %v2003
        %v2640 = vpop.f32.mrf.mxu0
        %v2641 = vadd.f32 0.0, %v2640
        %v2642 = vpop.f32.mrf.mxu0
        %2643 = vmatprep.mubr.f32.mxu0 0.0
        %2644 = vmatmul.mubr.f32.gmra.mxu0 %v2006
        %v2645 = vpop.f32.mrf.mxu0
        %v2646 = vadd.f32 0.0, %v2645
        %v2647 = vpop.f32.mrf.mxu0
        %2648 = vmatprep.mubr.f32.mxu0 0.0
        %2649 = vmatmul.mubr.f32.gmra.mxu0 %v2009
        %v2650 = vpop.f32.mrf.mxu0
        %v2651 = vadd.f32 0.0, %v2650
        %v2652 = vpop.f32.mrf.mxu0
        %2653 = vmatprep.mubr.f32.mxu0 0.0
        %2654 = vmatmul.mubr.f32.gmra.mxu0 %v2012
        %v2655 = vpop.f32.mrf.mxu0
        %v2656 = vadd.f32 0.0, %v2655
        %v2657 = vpop.f32.mrf.mxu0
        %2658 = vmatprep.mubr.f32.mxu0 0.0
        %2659 = vmatmul.mubr.f32.gmra.mxu0 %v2015
        %v2660 = vpop.f32.mrf.mxu0
        %v2661 = vadd.f32 0.0, %v2660
        %v2662 = vpop.f32.mrf.mxu0
        %2663 = vmatprep.mubr.f32.mxu0 0.0
        %2664 = vmatmul.mubr.f32.gmra.mxu0 %v2018
        %v2665 = vpop.f32.mrf.mxu0
        %v2666 = vadd.f32 0.0, %v2665
        %v2667 = vpop.f32.mrf.mxu0
        %2668 = vmatprep.mubr.f32.mxu0 0.0
        %2669 = vmatmul.mubr.f32.gmra.mxu0 %v2021
        %v2670 = vpop.f32.mrf.mxu0
        %v2671 = vadd.f32 0.0, %v2670
        %v2672 = vpop.f32.mrf.mxu0
        %2673 = vmatprep.mubr.f32.mxu0 0.0
        %2674 = vmatmul.mubr.f32.gmra.mxu0 %v2024
        %v2675 = vpop.f32.mrf.mxu0
        %v2676 = vadd.f32 0.0, %v2675
        %v2677 = vpop.f32.mrf.mxu0
        %2678 = vmatprep.mubr.f32.mxu0 0.0
        %2679 = vmatmul.mubr.f32.gmra.mxu0 %v2027
        %v2680 = vpop.f32.mrf.mxu0
        %v2681 = vadd.f32 0.0, %v2680
        %v2682 = vpop.f32.mrf.mxu0
        %2683 = vmatprep.mubr.f32.mxu0 0.0
        %2684 = vmatmul.mubr.f32.gmra.mxu0 %v2030
        %v2685 = vpop.f32.mrf.mxu0
        %v2686 = vadd.f32 0.0, %v2685
        %v2687 = vpop.f32.mrf.mxu0
        %2688 = vmatprep.mubr.f32.mxu0 0.0
        %2689 = vmatmul.mubr.f32.gmra.mxu0 %v2033
        %v2690 = vpop.f32.mrf.mxu0
        %v2691 = vadd.f32 0.0, %v2690
        %v2692 = vpop.f32.mrf.mxu0
        %2693 = vmatprep.mubr.f32.mxu0 0.0
        %2694 = vmatmul.mubr.f32.gmra.mxu0 %v2036
        %v2695 = vpop.f32.mrf.mxu0
        %v2696 = vadd.f32 0.0, %v2695
        %v2697 = vpop.f32.mrf.mxu0
        %2698 = vmatprep.mubr.f32.mxu0 0.0
        %2699 = vmatmul.mubr.f32.gmra.mxu0 %v2039
        %v2700 = vpop.f32.mrf.mxu0
        %v2701 = vadd.f32 0.0, %v2700
        %v2702 = vpop.f32.mrf.mxu0
        %2703 = vmatprep.mubr.f32.mxu0 0.0
        %2704 = vmatmul.mubr.f32.gmra.mxu0 %v2042
        %v2705 = vpop.f32.mrf.mxu0
        %v2706 = vadd.f32 0.0, %v2705
        %v2707 = vpop.f32.mrf.mxu0
        %2708 = vmatprep.mubr.f32.mxu0 0.0
        %2709 = vmatmul.mubr.f32.gmra.mxu0 %v2045
        %v2710 = vpop.f32.mrf.mxu0
        %v2711 = vadd.f32 0.0, %v2710
        %v2712 = vpop.f32.mrf.mxu0
        %2713 = vmatprep.mubr.f32.mxu0 0.0
        %2714 = vmatmul.mubr.f32.gmra.mxu0 %v2048
        %v2715 = vpop.f32.mrf.mxu0
        %v2716 = vadd.f32 0.0, %v2715
        %v2717 = vpop.f32.mrf.mxu0
        %2718 = vmatprep.mubr.f32.mxu0 0.0
        %2719 = vmatmul.mubr.f32.gmra.mxu0 %v2051
        %v2720 = vpop.f32.mrf.mxu0
        %v2721 = vadd.f32 0.0, %v2720
        %v2722 = vpop.f32.mrf.mxu0
        %2723 = vmatprep.mubr.f32.mxu0 0.0
        %2724 = vmatmul.mubr.f32.gmra.mxu0 %v2054
        %v2725 = vpop.f32.mrf.mxu0
        %v2726 = vadd.f32 0.0, %v2725
        %v2727 = vpop.f32.mrf.mxu0
        %2728 = vmatprep.mubr.f32.mxu0 0.0
        %2729 = vmatmul.mubr.f32.gmra.mxu0 %v2057
        %v2730 = vpop.f32.mrf.mxu0
        %v2731 = vadd.f32 0.0, %v2730
        %v2732 = vpop.f32.mrf.mxu0
        %2733 = vmatprep.mubr.f32.mxu0 0.0
        %2734 = vmatmul.mubr.f32.gmra.mxu0 %v2060
        %v2735 = vpop.f32.mrf.mxu0
        %v2736 = vadd.f32 0.0, %v2735
        %v2737 = vpop.f32.mrf.mxu0
        %2738 = vmatprep.mubr.f32.mxu0 0.0
        %2739 = vmatmul.mubr.f32.gmra.mxu0 %v2063
        %v2740 = vpop.f32.mrf.mxu0
        %v2741 = vadd.f32 0.0, %v2740
        %v2742 = vpop.f32.mrf.mxu0
        %2743 = vmatprep.mubr.f32.mxu0 0.0
        %2744 = vmatmul.mubr.f32.gmra.mxu0 %v2066
        %v2745 = vpop.f32.mrf.mxu0
        %v2746 = vadd.f32 0.0, %v2745
        %v2747 = vpop.f32.mrf.mxu0
        %2748 = vmatprep.mubr.f32.mxu0 0.0
        %2749 = vmatmul.mubr.f32.gmra.mxu0 %v2069
        %v2750 = vpop.f32.mrf.mxu0
        %v2751 = vadd.f32 0.0, %v2750
        %v2752 = vpop.f32.mrf.mxu0
        %2753 = vmatprep.mubr.f32.mxu0 0.0
        %2754 = vmatmul.mubr.f32.gmra.mxu0 %v2072
        %v2755 = vpop.f32.mrf.mxu0
        %v2756 = vadd.f32 0.0, %v2755
        %v2757 = vpop.f32.mrf.mxu0
        %2758 = vmatprep.mubr.f32.mxu0 0.0
        %2759 = vmatmul.mubr.f32.gmra.mxu0 %v2075
        %v2760 = vpop.f32.mrf.mxu0
        %v2761 = vadd.f32 0.0, %v2760
        %v2762 = vpop.f32.mrf.mxu0
        %2763 = vmatprep.mubr.f32.mxu0 0.0
        %2764 = vmatmul.mubr.f32.gmra.mxu0 %v2078
        %v2765 = vpop.f32.mrf.mxu0
        %v2766 = vadd.f32 0.0, %v2765
        %v2767 = vpop.f32.mrf.mxu0
        %2768 = vmatprep.mubr.f32.mxu0 0.0
        %2769 = vmatmul.mubr.f32.gmra.mxu0 %v2081
        %v2770 = vpop.f32.mrf.mxu0
        %v2771 = vadd.f32 0.0, %v2770
        %v2772 = vpop.f32.mrf.mxu0
        %2773 = vmatprep.mubr.f32.mxu0 0.0
        %2774 = vmatmul.mubr.f32.gmra.mxu0 %v2084
        %v2775 = vpop.f32.mrf.mxu0
        %v2776 = vadd.f32 0.0, %v2775
        %v2777 = vpop.f32.mrf.mxu0
        %2778 = vmatprep.mubr.f32.mxu0 0.0
        %2779 = vmatmul.mubr.f32.gmra.mxu0 %v2087
        %v2780 = vpop.f32.mrf.mxu0
        %v2781 = vadd.f32 0.0, %v2780
        %v2782 = vpop.f32.mrf.mxu0
        %2783 = vmatprep.mubr.f32.mxu0 0.0
        %2784 = vmatmul.mubr.f32.gmra.mxu0 %v2090
        %v2785 = vpop.f32.mrf.mxu0
        %v2786 = vadd.f32 0.0, %v2785
        %v2787 = vpop.f32.mrf.mxu0
        %2788 = vmatprep.mubr.f32.mxu0 0.0
        %2789 = vmatmul.mubr.f32.gmra.mxu0 %v2093
        %v2790 = vpop.f32.mrf.mxu0
        %v2791 = vadd.f32 0.0, %v2790
        %v2792 = vpop.f32.mrf.mxu0
        %2793 = vmatprep.mubr.f32.mxu0 0.0
        %2794 = vmatmul.mubr.f32.gmra.mxu0 %v2096
        %v2795 = vpop.f32.mrf.mxu0
        %v2796 = vadd.f32 0.0, %v2795
        %v2797 = vpop.f32.mrf.mxu0
        %2798 = vmatprep.mubr.f32.mxu0 0.0
        %2799 = vmatmul.mubr.f32.gmra.mxu0 %v2099
        %v2800 = vpop.f32.mrf.mxu0
        %v2801 = vadd.f32 0.0, %v2800
        %v2802 = vpop.f32.mrf.mxu0
        %2803 = vmatprep.mubr.f32.mxu0 0.0
        %2804 = vmatmul.mubr.f32.gmra.mxu0 %v2102
        %v2805 = vpop.f32.mrf.mxu0
        %v2806 = vadd.f32 0.0, %v2805
        %v2807 = vpop.f32.mrf.mxu0
        %2808 = vdwg.mxu0
        %v2809 = vmul.f32 %v954, %v2171
        %v2810 = vmul.f32 %v959, %v2176
        %v2811 = vmul.f32 %v964, %v2181
        %v2812 = vmul.f32 %v969, %v2186
        %v2813 = vmul.f32 %v974, %v2191
        %v2814 = vmul.f32 %v979, %v2196
        %v2815 = vmul.f32 %v984, %v2201
        %v2816 = vmul.f32 %v989, %v2206
        %v2817 = vmul.f32 %v994, %v2211
        %v2818 = vmul.f32 %v999, %v2216
        %v2819 = vmul.f32 %v1004, %v2221
        %v2820 = vmul.f32 %v1009, %v2226
        %v2821 = vmul.f32 %v1014, %v2231
        %v2822 = vmul.f32 %v1019, %v2236
        %v2823 = vmul.f32 %v1024, %v2241
        %v2824 = vmul.f32 %v1029, %v2246
        %v2825 = vmul.f32 %v1034, %v2251
        %v2826 = vmul.f32 %v1039, %v2256
        %v2827 = vmul.f32 %v1044, %v2261
        %v2828 = vmul.f32 %v1049, %v2266
        %v2829 = vmul.f32 %v1054, %v2271
        %v2830 = vmul.f32 %v1059, %v2276
        %v2831 = vmul.f32 %v1064, %v2281
        %v2832 = vmul.f32 %v1069, %v2286
        %v2833 = vmul.f32 %v1074, %v2291
        %v2834 = vmul.f32 %v1079, %v2296
        %v2835 = vmul.f32 %v1084, %v2301
        %v2836 = vmul.f32 %v1089, %v2306
        %v2837 = vmul.f32 %v1094, %v2311
        %v2838 = vmul.f32 %v1099, %v2316
        %v2839 = vmul.f32 %v1104, %v2321
        %v2840 = vmul.f32 %v1109, %v2326
        %v2841 = vmul.f32 %v1114, %v2331
        %v2842 = vmul.f32 %v1119, %v2336
        %v2843 = vmul.f32 %v1124, %v2341
        %v2844 = vmul.f32 %v1129, %v2346
        %v2845 = vmul.f32 %v1134, %v2351
        %v2846 = vmul.f32 %v1139, %v2356
        %v2847 = vmul.f32 %v1144, %v2361
        %v2848 = vmul.f32 %v1149, %v2366
        %v2849 = vmul.f32 %v1154, %v2371
        %v2850 = vmul.f32 %v1159, %v2376
        %v2851 = vmul.f32 %v1164, %v2381
        %v2852 = vmul.f32 %v1169, %v2386
        %v2853 = vmul.f32 %v1174, %v2391
        %v2854 = vmul.f32 %v1179, %v2396
        %v2855 = vmul.f32 %v1184, %v2401
        %v2856 = vmul.f32 %v1189, %v2406
        %v2857 = vmul.f32 %v1194, %v2411
        %v2858 = vmul.f32 %v1199, %v2416
        %v2859 = vmul.f32 %v1204, %v2421
        %v2860 = vmul.f32 %v1209, %v2426
        %v2861 = vmul.f32 %v1214, %v2431
        %v2862 = vmul.f32 %v1219, %v2436
        %v2863 = vmul.f32 %v1224, %v2441
        %v2864 = vmul.f32 %v1229, %v2446
        %v2865 = vmul.f32 %v1234, %v2451
        %v2866 = vmul.f32 %v1239, %v2456
        %v2867 = vmul.f32 %v1244, %v2461
        %v2868 = vmul.f32 %v1249, %v2466
        %v2869 = vmul.f32 %v1254, %v2471
        %v2870 = vmul.f32 %v1259, %v2476
        %v2871 = vmul.f32 %v1264, %v2481
        %v2872 = vmul.f32 %v1269, %v2486
        %v2873 = vmul.f32 %v1274, %v2491
        %v2874 = vmul.f32 %v1279, %v2496
        %v2875 = vmul.f32 %v1284, %v2501
        %v2876 = vmul.f32 %v1289, %v2506
        %v2877 = vmul.f32 %v1294, %v2511
        %v2878 = vmul.f32 %v1299, %v2516
        %v2879 = vmul.f32 %v1304, %v2521
        %v2880 = vmul.f32 %v1309, %v2526
        %v2881 = vmul.f32 %v1314, %v2531
        %v2882 = vmul.f32 %v1319, %v2536
        %v2883 = vmul.f32 %v1324, %v2541
        %v2884 = vmul.f32 %v1329, %v2546
        %v2885 = vmul.f32 %v1334, %v2551
        %v2886 = vmul.f32 %v1339, %v2556
        %v2887 = vmul.f32 %v1344, %v2561
        %v2888 = vmul.f32 %v1349, %v2566
        %v2889 = vmul.f32 %v1354, %v2571
        %v2890 = vmul.f32 %v1359, %v2576
        %v2891 = vmul.f32 %v1364, %v2581
        %v2892 = vmul.f32 %v1369, %v2586
        %v2893 = vmul.f32 %v1374, %v2591
        %v2894 = vmul.f32 %v1379, %v2596
        %v2895 = vmul.f32 %v1384, %v2601
        %v2896 = vmul.f32 %v1389, %v2606
        %v2897 = vmul.f32 %v1394, %v2611
        %v2898 = vmul.f32 %v1399, %v2616
        %v2899 = vmul.f32 %v1404, %v2621
        %v2900 = vmul.f32 %v1409, %v2626
        %v2901 = vmul.f32 %v1414, %v2631
        %v2902 = vmul.f32 %v1419, %v2636
        %v2903 = vmul.f32 %v1424, %v2641
        %v2904 = vmul.f32 %v1429, %v2646
        %v2905 = vmul.f32 %v1434, %v2651
        %v2906 = vmul.f32 %v1439, %v2656
        %v2907 = vmul.f32 %v1444, %v2661
        %v2908 = vmul.f32 %v1449, %v2666
        %v2909 = vmul.f32 %v1454, %v2671
        %v2910 = vmul.f32 %v1459, %v2676
        %v2911 = vmul.f32 %v1464, %v2681
        %v2912 = vmul.f32 %v1469, %v2686
        %v2913 = vmul.f32 %v1474, %v2691
        %v2914 = vmul.f32 %v1479, %v2696
        %v2915 = vmul.f32 %v1484, %v2701
        %v2916 = vmul.f32 %v1489, %v2706
        %v2917 = vmul.f32 %v1494, %v2711
        %v2918 = vmul.f32 %v1499, %v2716
        %v2919 = vmul.f32 %v1504, %v2721
        %v2920 = vmul.f32 %v1509, %v2726
        %v2921 = vmul.f32 %v1514, %v2731
        %v2922 = vmul.f32 %v1519, %v2736
        %v2923 = vmul.f32 %v1524, %v2741
        %v2924 = vmul.f32 %v1529, %v2746
        %v2925 = vmul.f32 %v1534, %v2751
        %v2926 = vmul.f32 %v1539, %v2756
        %v2927 = vmul.f32 %v1544, %v2761
        %v2928 = vmul.f32 %v1549, %v2766
        %v2929 = vmul.f32 %v1554, %v2771
        %v2930 = vmul.f32 %v1559, %v2776
        %v2931 = vmul.f32 %v1564, %v2781
        %v2932 = vmul.f32 %v1569, %v2786
        %v2933 = vmul.f32 %v1574, %v2791
        %v2934 = vmul.f32 %v1579, %v2796
        %v2935 = vmul.f32 %v1584, %v2801
        %v2936 = vmul.f32 %v1589, %v2806
        %v2937 = vld [vmem:[%s268] sm:$0xff]
        %v2938 = vld [vmem:[%s268 + $0x8] sm:$0xff]
        %v2939 = vld [vmem:[%s268 + $0x10] sm:$0xff]
        %v2940 = vld [vmem:[%s268 + $0x18] sm:$0xff]
        %v2941 = vld [vmem:[%s268 + $0x20] sm:$0xff]
        %v2942 = vld [vmem:[%s268 + $0x28] sm:$0xff]
        %v2943 = vld [vmem:[%s268 + $0x30] sm:$0xff]
        %v2944 = vld [vmem:[%s268 + $0x38] sm:$0xff]
        %v2945 = vld [vmem:[%s268 + $0x40] sm:$0x3f]
        %v2946 = vld [vmem:[%s268 + $0x48] sm:$0x3f]
        %v2947 = vld [vmem:[%s268 + $0x50] sm:$0x3f]
        %v2948 = vld [vmem:[%s268 + $0x58] sm:$0x3f]
        %v2949 = vld [vmem:[%s268 + $0x60] sm:$0x3f]
        %v2950 = vld [vmem:[%s268 + $0x68] sm:$0x3f]
        %v2951 = vld [vmem:[%s268 + $0x70] sm:$0x3f]
        %v2952 = vld [vmem:[%s268 + $0x78] sm:$0x3f]
        %2953 = vmatprep.subr.mxu0 0.0
        %2954 = vmatpush1.msra.mxu0 %v2824
        %2955 = vmatprep.subr.mxu0 0.0
        %2956 = vmatpush1.msra.mxu0 %v2823
        %2957 = vmatprep.subr.mxu0 0.0
        %2958 = vmatpush1.msra.mxu0 %v2822
        %2959 = vmatprep.subr.mxu0 0.0
        %2960 = vmatpush1.msra.mxu0 %v2821
        %2961 = vmatprep.subr.mxu0 0.0
        %2962 = vmatpush1.msra.mxu0 %v2820
        %2963 = vmatprep.subr.mxu0 0.0
        %2964 = vmatpush1.msra.mxu0 %v2819
        %2965 = vmatprep.subr.mxu0 0.0
        %2966 = vmatpush1.msra.mxu0 %v2818
        %2967 = vmatprep.subr.mxu0 0.0
        %2968 = vmatpush1.msra.mxu0 %v2817
        %2969 = vmatprep.subr.mxu0 0.0
        %2970 = vmatpush1.msra.mxu0 %v2816
        %2971 = vmatprep.subr.mxu0 0.0
        %2972 = vmatpush1.msra.mxu0 %v2815
        %2973 = vmatprep.subr.mxu0 0.0
        %2974 = vmatpush1.msra.mxu0 %v2814
        %2975 = vmatprep.subr.mxu0 0.0
        %2976 = vmatpush1.msra.mxu0 %v2813
        %2977 = vmatprep.subr.mxu0 0.0
        %2978 = vmatpush1.msra.mxu0 %v2812
        %2979 = vmatprep.subr.mxu0 0.0
        %2980 = vmatpush1.msra.mxu0 %v2811
        %2981 = vmatprep.subr.mxu0 0.0
        %2982 = vmatpush1.msra.mxu0 %v2810
        %2983 = vmatprep.subr.mxu0 0.0
        %2984 = vmatpush1.msra.mxu0 %v2809
        %2985 = vmatprep.subr.mxu0 0.0
        %2986 = vmatpush2.msra.mxu0 %v2840
        %2987 = vmatprep.subr.mxu0 0.0
        %2988 = vmatpush2.msra.mxu0 %v2839
        %2989 = vmatprep.subr.mxu0 0.0
        %2990 = vmatpush2.msra.mxu0 %v2838
        %2991 = vmatprep.subr.mxu0 0.0
        %2992 = vmatpush2.msra.mxu0 %v2837
        %2993 = vmatprep.subr.mxu0 0.0
        %2994 = vmatpush2.msra.mxu0 %v2836
        %2995 = vmatprep.subr.mxu0 0.0
        %2996 = vmatpush2.msra.mxu0 %v2835
        %2997 = vmatprep.subr.mxu0 0.0
        %2998 = vmatpush2.msra.mxu0 %v2834
        %2999 = vmatprep.subr.mxu0 0.0
        %3000 = vmatpush2.msra.mxu0 %v2833
        %3001 = vmatprep.subr.mxu0 0.0
        %3002 = vmatpush2.msra.mxu0 %v2832
        %3003 = vmatprep.subr.mxu0 0.0
        %3004 = vmatpush2.msra.mxu0 %v2831
        %3005 = vmatprep.subr.mxu0 0.0
        %3006 = vmatpush2.msra.mxu0 %v2830
        %3007 = vmatprep.subr.mxu0 0.0
        %3008 = vmatpush2.msra.mxu0 %v2829
        %3009 = vmatprep.subr.mxu0 0.0
        %3010 = vmatpush2.msra.mxu0 %v2828
        %3011 = vmatprep.subr.mxu0 0.0
        %3012 = vmatpush2.msra.mxu0 %v2827
        %3013 = vmatprep.subr.mxu0 0.0
        %3014 = vmatpush2.msra.mxu0 %v2826
        %3015 = vmatprep.subr.mxu0 0.0
        %3016 = vmatpush2.msra.mxu0 %v2825
        %3017 = vmatprep.mubr.f32.mxu0 %v2938
        %3018 = vmatmul.mubr.f32.gmra.mxu0 %v2937
        %v3019 = vpop.f32.mrf.mxu0
        %v3020 = vadd.f32 0.0, %v3019
        %v3021 = vpop.f32.mrf.mxu0
        %3022 = vmatprep.mubr.f32.mxu0 %v2946
        %3023 = vmatmul.mubr.f32.gmra.mxu0 %v2945
        %v3024 = vpop.f32.mrf.mxu0
        %v3025 = vadd.f32 0.0, %v3024
        %v3026 = vpop.f32.mrf.mxu0
        %3027 = vdwg.mxu0
        %3028 = vmatprep.subr.mxu0 0.0
        %3029 = vmatpush1.msra.mxu0 %v2856
        %3030 = vmatprep.subr.mxu0 0.0
        %3031 = vmatpush1.msra.mxu0 %v2855
        %3032 = vmatprep.subr.mxu0 0.0
        %3033 = vmatpush1.msra.mxu0 %v2854
        %3034 = vmatprep.subr.mxu0 0.0
        %3035 = vmatpush1.msra.mxu0 %v2853
        %3036 = vmatprep.subr.mxu0 0.0
        %3037 = vmatpush1.msra.mxu0 %v2852
        %3038 = vmatprep.subr.mxu0 0.0
        %3039 = vmatpush1.msra.mxu0 %v2851
        %3040 = vmatprep.subr.mxu0 0.0
        %3041 = vmatpush1.msra.mxu0 %v2850
        %3042 = vmatprep.subr.mxu0 0.0
        %3043 = vmatpush1.msra.mxu0 %v2849
        %3044 = vmatprep.subr.mxu0 0.0
        %3045 = vmatpush1.msra.mxu0 %v2848
        %3046 = vmatprep.subr.mxu0 0.0
        %3047 = vmatpush1.msra.mxu0 %v2847
        %3048 = vmatprep.subr.mxu0 0.0
        %3049 = vmatpush1.msra.mxu0 %v2846
        %3050 = vmatprep.subr.mxu0 0.0
        %3051 = vmatpush1.msra.mxu0 %v2845
        %3052 = vmatprep.subr.mxu0 0.0
        %3053 = vmatpush1.msra.mxu0 %v2844
        %3054 = vmatprep.subr.mxu0 0.0
        %3055 = vmatpush1.msra.mxu0 %v2843
        %3056 = vmatprep.subr.mxu0 0.0
        %3057 = vmatpush1.msra.mxu0 %v2842
        %3058 = vmatprep.subr.mxu0 0.0
        %3059 = vmatpush1.msra.mxu0 %v2841
        %3060 = vmatprep.subr.mxu0 0.0
        %3061 = vmatpush2.msra.mxu0 %v2872
        %3062 = vmatprep.subr.mxu0 0.0
        %3063 = vmatpush2.msra.mxu0 %v2871
        %3064 = vmatprep.subr.mxu0 0.0
        %3065 = vmatpush2.msra.mxu0 %v2870
        %3066 = vmatprep.subr.mxu0 0.0
        %3067 = vmatpush2.msra.mxu0 %v2869
        %3068 = vmatprep.subr.mxu0 0.0
        %3069 = vmatpush2.msra.mxu0 %v2868
        %3070 = vmatprep.subr.mxu0 0.0
        %3071 = vmatpush2.msra.mxu0 %v2867
        %3072 = vmatprep.subr.mxu0 0.0
        %3073 = vmatpush2.msra.mxu0 %v2866
        %3074 = vmatprep.subr.mxu0 0.0
        %3075 = vmatpush2.msra.mxu0 %v2865
        %3076 = vmatprep.subr.mxu0 0.0
        %3077 = vmatpush2.msra.mxu0 %v2864
        %3078 = vmatprep.subr.mxu0 0.0
        %3079 = vmatpush2.msra.mxu0 %v2863
        %3080 = vmatprep.subr.mxu0 0.0
        %3081 = vmatpush2.msra.mxu0 %v2862
        %3082 = vmatprep.subr.mxu0 0.0
        %3083 = vmatpush2.msra.mxu0 %v2861
        %3084 = vmatprep.subr.mxu0 0.0
        %3085 = vmatpush2.msra.mxu0 %v2860
        %3086 = vmatprep.subr.mxu0 0.0
        %3087 = vmatpush2.msra.mxu0 %v2859
        %3088 = vmatprep.subr.mxu0 0.0
        %3089 = vmatpush2.msra.mxu0 %v2858
        %3090 = vmatprep.subr.mxu0 0.0
        %3091 = vmatpush2.msra.mxu0 %v2857
        %3092 = vmatprep.mubr.f32.mxu0 %v2940
        %3093 = vmatmul.mubr.f32.gmra.mxu0 %v2939
        %v3094 = vpop.f32.mrf.mxu0
        %v3095 = vadd.f32 %v3020, %v3094
        %v3096 = vpop.f32.mrf.mxu0
        %3097 = vmatprep.mubr.f32.mxu0 %v2948
        %3098 = vmatmul.mubr.f32.gmra.mxu0 %v2947
        %v3099 = vpop.f32.mrf.mxu0
        %v3100 = vadd.f32 %v3025, %v3099
        %v3101 = vpop.f32.mrf.mxu0
        %3102 = vdwg.mxu0
        %3103 = vmatprep.subr.mxu0 0.0
        %3104 = vmatpush1.msra.mxu0 %v2888
        %3105 = vmatprep.subr.mxu0 0.0
        %3106 = vmatpush1.msra.mxu0 %v2887
        %3107 = vmatprep.subr.mxu0 0.0
        %3108 = vmatpush1.msra.mxu0 %v2886
        %3109 = vmatprep.subr.mxu0 0.0
        %3110 = vmatpush1.msra.mxu0 %v2885
        %3111 = vmatprep.subr.mxu0 0.0
        %3112 = vmatpush1.msra.mxu0 %v2884
        %3113 = vmatprep.subr.mxu0 0.0
        %3114 = vmatpush1.msra.mxu0 %v2883
        %3115 = vmatprep.subr.mxu0 0.0
        %3116 = vmatpush1.msra.mxu0 %v2882
        %3117 = vmatprep.subr.mxu0 0.0
        %3118 = vmatpush1.msra.mxu0 %v2881
        %3119 = vmatprep.subr.mxu0 0.0
        %3120 = vmatpush1.msra.mxu0 %v2880
        %3121 = vmatprep.subr.mxu0 0.0
        %3122 = vmatpush1.msra.mxu0 %v2879
        %3123 = vmatprep.subr.mxu0 0.0
        %3124 = vmatpush1.msra.mxu0 %v2878
        %3125 = vmatprep.subr.mxu0 0.0
        %3126 = vmatpush1.msra.mxu0 %v2877
        %3127 = vmatprep.subr.mxu0 0.0
        %3128 = vmatpush1.msra.mxu0 %v2876
        %3129 = vmatprep.subr.mxu0 0.0
        %3130 = vmatpush1.msra.mxu0 %v2875
        %3131 = vmatprep.subr.mxu0 0.0
        %3132 = vmatpush1.msra.mxu0 %v2874
        %3133 = vmatprep.subr.mxu0 0.0
        %3134 = vmatpush1.msra.mxu0 %v2873
        %3135 = vmatprep.subr.mxu0 0.0
        %3136 = vmatpush2.msra.mxu0 %v2904
        %3137 = vmatprep.subr.mxu0 0.0
        %3138 = vmatpush2.msra.mxu0 %v2903
        %3139 = vmatprep.subr.mxu0 0.0
        %3140 = vmatpush2.msra.mxu0 %v2902
        %3141 = vmatprep.subr.mxu0 0.0
        %3142 = vmatpush2.msra.mxu0 %v2901
        %3143 = vmatprep.subr.mxu0 0.0
        %3144 = vmatpush2.msra.mxu0 %v2900
        %3145 = vmatprep.subr.mxu0 0.0
        %3146 = vmatpush2.msra.mxu0 %v2899
        %3147 = vmatprep.subr.mxu0 0.0
        %3148 = vmatpush2.msra.mxu0 %v2898
        %3149 = vmatprep.subr.mxu0 0.0
        %3150 = vmatpush2.msra.mxu0 %v2897
        %3151 = vmatprep.subr.mxu0 0.0
        %3152 = vmatpush2.msra.mxu0 %v2896
        %3153 = vmatprep.subr.mxu0 0.0
        %3154 = vmatpush2.msra.mxu0 %v2895
        %3155 = vmatprep.subr.mxu0 0.0
        %3156 = vmatpush2.msra.mxu0 %v2894
        %3157 = vmatprep.subr.mxu0 0.0
        %3158 = vmatpush2.msra.mxu0 %v2893
        %3159 = vmatprep.subr.mxu0 0.0
        %3160 = vmatpush2.msra.mxu0 %v2892
        %3161 = vmatprep.subr.mxu0 0.0
        %3162 = vmatpush2.msra.mxu0 %v2891
        %3163 = vmatprep.subr.mxu0 0.0
        %3164 = vmatpush2.msra.mxu0 %v2890
        %3165 = vmatprep.subr.mxu0 0.0
        %3166 = vmatpush2.msra.mxu0 %v2889
        %3167 = vmatprep.mubr.f32.mxu0 %v2942
        %3168 = vmatmul.mubr.f32.gmra.mxu0 %v2941
        %v3169 = vpop.f32.mrf.mxu0
        %v3170 = vadd.f32 %v3095, %v3169
        %v3171 = vpop.f32.mrf.mxu0
        %3172 = vmatprep.mubr.f32.mxu0 %v2950
        %3173 = vmatmul.mubr.f32.gmra.mxu0 %v2949
        %v3174 = vpop.f32.mrf.mxu0
        %v3175 = vadd.f32 %v3100, %v3174
        %v3176 = vpop.f32.mrf.mxu0
        %3177 = vdwg.mxu0
        %3178 = vmatprep.subr.mxu0 0.0
        %3179 = vmatpush1.msra.mxu0 %v2920
        %3180 = vmatprep.subr.mxu0 0.0
        %3181 = vmatpush1.msra.mxu0 %v2919
        %3182 = vmatprep.subr.mxu0 0.0
        %3183 = vmatpush1.msra.mxu0 %v2918
        %3184 = vmatprep.subr.mxu0 0.0
        %3185 = vmatpush1.msra.mxu0 %v2917
        %3186 = vmatprep.subr.mxu0 0.0
        %3187 = vmatpush1.msra.mxu0 %v2916
        %3188 = vmatprep.subr.mxu0 0.0
        %3189 = vmatpush1.msra.mxu0 %v2915
        %3190 = vmatprep.subr.mxu0 0.0
        %3191 = vmatpush1.msra.mxu0 %v2914
        %3192 = vmatprep.subr.mxu0 0.0
        %3193 = vmatpush1.msra.mxu0 %v2913
        %3194 = vmatprep.subr.mxu0 0.0
        %3195 = vmatpush1.msra.mxu0 %v2912
        %3196 = vmatprep.subr.mxu0 0.0
        %3197 = vmatpush1.msra.mxu0 %v2911
        %3198 = vmatprep.subr.mxu0 0.0
        %3199 = vmatpush1.msra.mxu0 %v2910
        %3200 = vmatprep.subr.mxu0 0.0
        %3201 = vmatpush1.msra.mxu0 %v2909
        %3202 = vmatprep.subr.mxu0 0.0
        %3203 = vmatpush1.msra.mxu0 %v2908
        %3204 = vmatprep.subr.mxu0 0.0
        %3205 = vmatpush1.msra.mxu0 %v2907
        %3206 = vmatprep.subr.mxu0 0.0
        %3207 = vmatpush1.msra.mxu0 %v2906
        %3208 = vmatprep.subr.mxu0 0.0
        %3209 = vmatpush1.msra.mxu0 %v2905
        %3210 = vmatprep.subr.mxu0 0.0
        %3211 = vmatpush2.msra.mxu0 %v2936
        %3212 = vmatprep.subr.mxu0 0.0
        %3213 = vmatpush2.msra.mxu0 %v2935
        %3214 = vmatprep.subr.mxu0 0.0
        %3215 = vmatpush2.msra.mxu0 %v2934
        %3216 = vmatprep.subr.mxu0 0.0
        %3217 = vmatpush2.msra.mxu0 %v2933
        %3218 = vmatprep.subr.mxu0 0.0
        %3219 = vmatpush2.msra.mxu0 %v2932
        %3220 = vmatprep.subr.mxu0 0.0
        %3221 = vmatpush2.msra.mxu0 %v2931
        %3222 = vmatprep.subr.mxu0 0.0
        %3223 = vmatpush2.msra.mxu0 %v2930
        %3224 = vmatprep.subr.mxu0 0.0
        %3225 = vmatpush2.msra.mxu0 %v2929
        %3226 = vmatprep.subr.mxu0 0.0
        %3227 = vmatpush2.msra.mxu0 %v2928
        %3228 = vmatprep.subr.mxu0 0.0
        %3229 = vmatpush2.msra.mxu0 %v2927
        %3230 = vmatprep.subr.mxu0 0.0
        %3231 = vmatpush2.msra.mxu0 %v2926
        %3232 = vmatprep.subr.mxu0 0.0
        %3233 = vmatpush2.msra.mxu0 %v2925
        %3234 = vmatprep.subr.mxu0 0.0
        %3235 = vmatpush2.msra.mxu0 %v2924
        %3236 = vmatprep.subr.mxu0 0.0
        %3237 = vmatpush2.msra.mxu0 %v2923
        %3238 = vmatprep.subr.mxu0 0.0
        %3239 = vmatpush2.msra.mxu0 %v2922
        %3240 = vmatprep.subr.mxu0 0.0
        %3241 = vmatpush2.msra.mxu0 %v2921
        %3242 = vmatprep.mubr.f32.mxu0 %v2944
        %3243 = vmatmul.mubr.f32.gmra.mxu0 %v2943
        %v3244 = vpop.f32.mrf.mxu0
        %v3245 = vadd.f32 %v3170, %v3244
        %v3246 = vpop.f32.mrf.mxu0
        %3247 = vmatprep.mubr.f32.mxu0 %v2952
        %3248 = vmatmul.mubr.f32.gmra.mxu0 %v2951
        %v3249 = vpop.f32.mrf.mxu0
        %v3250 = vadd.f32 %v3175, %v3249
        %v3251 = vpop.f32.mrf.mxu0
        %3252 = vdwg.mxu0
        %v3253 = vlaneseq
        %v3254 = vshrl.u32 %v3253, 7
        %v3255 = vadd.s32 %v3254, 8
        %vm3256 = vcmp.eq.s32.totalorder %v3254, 13
        %vm3257 = vcmp.eq.s32.totalorder %v3255, 13
        %vm3258 = vcmp.eq.s32.totalorder %v3254, 12
        %vm3259 = vcmp.eq.s32.totalorder %v3255, 12
        %v3260 = vsub.f32 0.0, %v3245
        %v3261 = vsub.f32 0.0, %v3250
        %v3262 = vsel %vm3258, %v3260, 0.0
        %v3263 = vsel %vm3259, %v3261, 0.0
        %v3264 = vsel %vm3256, %v3245, %v3262
        %v3265 = vsel %vm3257, %v3250, %v3263
        %vm3266 = vcmask 64512
        %v3267 = vsel %vm3266, %v3264, 0.0
        %vm3268 = vcmask 62464
        %v3269 = vsel %vm3268, %v3265, 0.0
        %v3270 = vadd.f32 %v3267, %v3269
        %v3271 = vrot.slane %v3270, 4
        %v3272 = vadd.f32 %v3270, %v3271
        %v3273 = vrot.slane %v3272, 2
        %v3274 = vadd.f32 %v3272, %v3273
        %v3275 = vrot.slane %v3274, 1
        %v3276 = vadd.f32 %v3274, %v3275
        %vm3277 = vcmp.gt.f32.partialorder %v3276, 0.0
        %v3278 = vsel %vm3277, 1, 0
        %v3279 = vmul.u32 %v3278, 2
        %v3280 = vadd.s32 %v3279, 8
        %v3281 = vadd.s32 %v3280, 1
        %vm3282 = vcmp.eq.s32.totalorder %v3254, %v3281
        %vm3283 = vcmp.eq.s32.totalorder %v3255, %v3281
        %vm3284 = vcmp.eq.s32.totalorder %v3254, %v3280
        %vm3285 = vcmp.eq.s32.totalorder %v3255, %v3280
        %v3286 = vsel %vm3284, %v3260, 0.0
        %v3287 = vsel %vm3285, %v3261, 0.0
        %v3288 = vsel %vm3282, %v3245, %v3286
        %v3289 = vsel %vm3283, %v3250, %v3287
        %v3290 = vsel %vm3266, %v3288, 0.0
        %v3291 = vsel %vm3268, %v3289, 0.0
        %v3292 = vadd.f32 %v3290, %v3291
        %v3293 = vrot.slane %v3292, 4
        %v3294 = vadd.f32 %v3292, %v3293
        %v3295 = vrot.slane %v3294, 2
        %v3296 = vadd.f32 %v3294, %v3295
        %v3297 = vrot.slane %v3296, 1
        %v3298 = vadd.f32 %v3296, %v3297
        %vm3299 = vcmp.gt.f32.partialorder %v3298, 0.0
        %v3300 = vsel %vm3299, 1, 0
        %v3301 = vadd.s32 %v3279, %v3300
        %v3302 = vmul.u32 %v3301, 2
        %v3303 = vadd.s32 %v3302, 1
        %vm3304 = vcmp.eq.s32.totalorder %v3254, %v3303
        %vm3305 = vcmp.eq.s32.totalorder %v3255, %v3303
        %vm3306 = vcmp.eq.s32.totalorder %v3254, %v3302
        %vm3307 = vcmp.eq.s32.totalorder %v3255, %v3302
        %v3308 = vsel %vm3306, %v3260, 0.0
        %v3309 = vsel %vm3307, %v3261, 0.0
        %v3310 = vsel %vm3304, %v3245, %v3308
        %v3311 = vsel %vm3305, %v3250, %v3309
        %v3312 = vsel %vm3266, %v3310, 0.0
        %v3313 = vsel %vm3268, %v3311, 0.0
        %v3314 = vadd.f32 %v3312, %v3313
        %v3315 = vrot.slane %v3314, 4
        %v3316 = vadd.f32 %v3314, %v3315
        %v3317 = vrot.slane %v3316, 2
        %v3318 = vadd.f32 %v3316, %v3317
        %v3319 = vrot.slane %v3318, 1
        %v3320 = vadd.f32 %v3318, %v3319
        %vm3321 = vcmp.gt.f32.partialorder %v3320, 0.0
        %v3322 = vsel %vm3321, 1, 0
        %v3323 = vadd.s32 %v3302, %v3322
        %vm3324 = vcmask 57344
        %3325 = vst.msk [vmem:[%s258] sm:$0x1] %vm3324, %v3323
        %s3326 = sand.u32 %s164, 1
        %s3327 = scalar_lea.sflag [#allocation3], %s3326
        %s3328 = sand.u32 %s164, 1
        %s3329 = scalar_lea.vmem [#allocation2], %s3328
        // Predicated region
        $region45: #{tpu_custom_call.1} parent=43 // pred_check
          %p3330 = pneg %p174
        $region46: #{tpu_custom_call.1} parent=43 // pred_check_branch
          %3332 = sbr.rel (%p3330) target = $region48
        $region47: #{tpu_custom_call.1} parent=43 // pred_region
          %s3334 = ssub.s32 16, 16
          %3335 = vsyncadd %s3327, %s3334
          %s3336 = smul.addr %s20, 16
          %s3337 = scalar_lea.hbm %s6, %s3336
          %s3339 = sshll.u32 %s3329, 4
          %s3340 = int_to_ptr.vmem [resolvable:$true] %s3339
          %3342 = dma.vmem_to_hbm [thread:$0]  %s3340, 16, %s3337, %s3327
        $region48: #{tpu_custom_call.1} parent=43 // pred_fallthru
          _
      $region44: #{tpu_custom_call.1} parent=5 // pred_fallthru
        _
      %p3343 = scmp.le.s32.totalorder 2, %s15
      // Predicated region
      $region49: #{tpu_custom_call.1} parent=5 // pred_check
        %p3344 = pneg %p3343
      $region50: #{tpu_custom_call.1} parent=5 // pred_check_branch
        %3346 = sbr.rel (%p3344) target = $region52
      $region51: #{tpu_custom_call.1} parent=5 // pred_region
        %s3347 = ssub.s32 %s15, 2
        // Predicated region
        $region53: #{tpu_custom_call.1} parent=51 // pred_check
          %p3348 = pneg %p180
        $region54: #{tpu_custom_call.1} parent=51 // pred_check_branch
          %3350 = sbr.rel (%p3348) target = $region56
        $region55: #{tpu_custom_call.1} parent=51 // pred_region
          %s3351 = sand.u32 %s165, 1
          %s3352 = scalar_lea.sflag [#allocation3], %s3351
          %s3353 = sand.u32 %s165, 1
          %s3354 = scalar_lea.vmem [#allocation2], %s3353
          %3355 = dma.done %s3352, 16
        $region56: #{tpu_custom_call.1} parent=51 // pred_fallthru
          _
      $region52: #{tpu_custom_call.1} parent=5 // pred_fallthru
        _
    $region6: #{tpu_custom_call.1} parent=1 // loop_footer
      %s19 = sadd.s32 1, %s15
    $region7: #{tpu_custom_call.1} parent=1 // loop_footer_branch
      %14 = sbr.rel target = $region3
    $region8: #{tpu_custom_call.1} parent=1 // loop_exit
      _
    %3356 = vsyncpa [#allocation3], 1
    %s3357 = scalar_lea.sflag [#allocation3], 1
    %3358 = vsyncpa %s3357, 1

</llo_original>
